<compile_context>
chip_gen: v6e
topology: v6e:2x2x1
jax: 0.10.0
libtpu: 0.0.40
codegen_flags: <defaults>
</compile_context>

<pallas_src>
import functools

import jax
import jax.numpy as jnp
from jax.experimental import pallas as pl
from jax.experimental.pallas import tpu as pltpu

# ----------------------------- configuration (small demo shapes) -----------------------------
NODE_SIZE   = 4     # K
INPUT_SIZE  = 3     # J
KERNEL_SIZE = 3
STRIDE      = 1
MULTI_HEADS = 4     # M
SIG_LEN     = 16    # C
BATCH       = 2
PAD         = KERNEL_SIZE // 2
MID_CH      = (MULTI_HEADS - KERNEL_SIZE + 2 * PAD) // STRIDE + 1
BN_EPS      = 1e-5

assert STRIDE == 1 and KERNEL_SIZE % 2 == 1
assert MID_CH == MULTI_HEADS


# ----------------------------- in-kernel math helpers -----------------------------
def _gelu(x):
    # erf GELU (Abramowitz & Stegun 7.1.26); the divide goes through the EUP via
    # pl.reciprocal(approx=True)  ->  ~1e-4 deviation from an exact erf GELU.
    a1, a2, a3, a4, a5 = 0.254829592, -0.284496736, 1.421413741, -1.453152027, 1.061405429
    p = 0.3275911
    u = x * 0.7071067811865476
    sgn = jnp.where(u >= 0.0, 1.0, -1.0)
    au = jnp.abs(u)
    t = pl.reciprocal(1.0 + p * au, approx=True)
    poly = ((((a5 * t + a4) * t + a3) * t + a2) * t + a1) * t
    erf_u = sgn * (1.0 - poly * jnp.exp(-au * au))
    return 0.5 * x * (1.0 + erf_u)


# ----------------------------- the single fused kernel -----------------------------
def _block_kernel(x_ref, wmh_ref, w1t_ref, w2t_ref, sfe_ref, wfeb_ref,
                  wff1_ref, wff2_ref, ssc_ref, wscb_ref, blk_ref, pool_ref,
                  out_ref, *, B, J, K, M, C, KS):
    f32 = jnp.float32
    H, P1, KK = B * M, 4 * M, K * K
    eps = BN_EPS
    mid = KS // 2

    x_slab = x_ref[...]                                  # (B*J, K*C)  rows=(b,j), lanes=(k,c)
    blkc = blk_ref[...]                                  # (K*C, K*C)  per-node block-sum matrix

    # ---------- BatchNorm helpers (training-mode batch stats, gamma=1/beta=0, two-pass) ----------
    def bn_rows(t, ch):
        # channel = row index modulo `ch` (rows are (b, channel)); stats over batch rows + lanes
        n = float(B * t.shape[1])
        rs = jnp.sum(t, axis=1, keepdims=True)
        s = rs[0:ch]
        for b in range(1, B):
            s = s + rs[b * ch:(b + 1) * ch]
        cent = t - jnp.concatenate([s * (1.0 / n)] * B, axis=0)
        cs = jnp.sum(cent * cent, axis=1, keepdims=True)
        q = cs[0:ch]
        for b in range(1, B):
            q = q + cs[b * ch:(b + 1) * ch]
        inv = jax.lax.rsqrt(q * (1.0 / n) + eps)
        return cent * jnp.concatenate([inv] * B, axis=0)

    def bn_lane_blocks(t, n):
        # channel = lane block of width C (node index); block totals via one matmul with blkc
        mu = jnp.sum(jnp.dot(t, blkc, preferred_element_type=f32),
                     axis=0, keepdims=True) * (1.0 / n)
        cent = t - mu
        var = jnp.sum(jnp.dot(cent * cent, blkc, preferred_element_type=f32),
                      axis=0, keepdims=True) * (1.0 / n)
        return cent * jax.lax.rsqrt(var + eps)

    # ---------- multi_head: folded 1x1 convs as one block-diagonal matmul (MXU) ----------
    xall = jnp.dot(wmh_ref[...], x_slab, preferred_element_type=f32)     # (H, K*C) rows=(b,m)

    # ---------- Pearson correlation + positional-encoding pooling (all heads at once) ----------
    xk = [xall[:, k * C:(k + 1) * C] for k in range(K)]                  # K x (H, C)
    rowsum = [jnp.sum(v, axis=-1, keepdims=True) for v in xk]            # (H, 1)
    cent = [xk[k] - rowsum[k] * (1.0 / C) for k in range(K)]
    rstd = [jax.lax.rsqrt(jnp.sum(v * v, axis=-1, keepdims=True)) for v in cent]

    ones_col = jnp.ones((H, 1), f32)
    adjc = [[None] * K for _ in range(K)]
    poolc = [[None] * K for _ in range(K)]
    for i in range(K):
        adjc[i][i] = ones_col                       # corr(x, x) == 1 (PyTorch gives 1 +- ulp)
        poolc[i][i] = rowsum[i] * (1.0 / C)         # x_i == x_i elementwise -> pos mask all ones
        for j in range(i + 1, K):
            a = jnp.sum(cent[i] * cent[j], axis=-1, keepdims=True) * (rstd[i] * rstd[j])
            adjc[i][j] = a
            adjc[j][i] = a                          # Pearson matrix is symmetric
            eq = xk[i] == xk[j]                     # positional mask shared by (i,j) and (j,i)
            s_ij = jnp.sum(jnp.where(eq, xk[j], xk[j] + xk[j]), axis=-1, keepdims=True)
            s_ji = jnp.sum(jnp.where(eq, xk[i], xk[i] + xk[i]), axis=-1, keepdims=True)
            poolc[i][j] = (rowsum[i] + s_ij) * (0.5 / C)
            poolc[j][i] = (rowsum[j] + s_ji) * (0.5 / C)

    adj_blk = [jnp.concatenate(adjc[i], axis=1) for i in range(K)]       # K x (H, K)
    adj_mat = jnp.concatenate(adj_blk, axis=1)                           # (H, K*K), col = i*K+j
    pooled = jnp.concatenate([poolc[i][j] for i in range(K) for j in range(K)], axis=1)

    # ---------- attention MLP over all heads at once (two tiny MXU matmuls) ----------
    hmid = _gelu(jnp.dot(pooled, w1t_ref[...], preferred_element_type=f32))
    e_all = jax.nn.sigmoid(jnp.dot(hmid, w2t_ref[...], preferred_element_type=f32))   # (H, K*K)

    # ---------- masked softmax over neighbours + aggregation ----------
    neg = jnp.float32(-9000000000000000.0)
    att = []
    for i in range(K):
        sc = jnp.where(adj_blk[i] > 0, e_all[:, i * K:(i + 1) * K], neg)
        sc = sc - jnp.max(sc, axis=-1, keepdims=True)
        p = jnp.exp(sc)
        a = p / jnp.sum(p, axis=-1, keepdims=True)       # exact divide (numerical parity)
        acc = a[:, 0:1] * xk[0]
        for j in range(1, K):
            acc = acc + a[:, j:j + 1] * xk[j]
        att.append(acc)
    att_all = jnp.concatenate(att, axis=1)                               # (H, K*C)

    # ---------- norm: BatchNorm2d(M) + GELU ----------
    normed = _gelu(bn_rows(att_all, M))

    # ---------- feature_extraction: depthwise KSxKS conv = row-shift + banded lane matmuls ----------
    fe = None
    for t in range(KS):
        shifted = normed if t == mid else jnp.dot(sfe_ref[t], normed, preferred_element_type=f32)
        contrib = jnp.dot(shifted, wfeb_ref[t], preferred_element_type=f32)
        fe = contrib if fe is None else fe + contrib
    fe_act = _gelu(bn_lane_blocks(fe, float(B * M * C)))                 # BatchNorm2d(K) + GELU

    # ---------- feed_forward: 1x1 convs as block-diag matmuls + BN(4M)+GELU + BN(M) ----------
    g1 = jnp.dot(wff1_ref[...], fe_act, preferred_element_type=f32)      # (B*4M, K*C)
    g1_act = _gelu(bn_rows(g1, P1))
    g2 = jnp.dot(wff2_ref[...], g1_act, preferred_element_type=f32)      # (H, K*C)
    g2n = bn_rows(g2, M)                                                 # no GELU after 2nd BN

    # ---------- shortcut: KSxKS conv (K->K) + BN(K) + avg-pool over J + broadcast over M ----------
    sc_conv = None
    for t in range(KS):
        shifted = x_slab if t == mid else jnp.dot(ssc_ref[t], x_slab, preferred_element_type=f32)
        contrib = jnp.dot(shifted, wscb_ref[t], preferred_element_type=f32)
        sc_conv = contrib if sc_conv is None else sc_conv + contrib      # (B*J, K*C)
    scn = bn_lane_blocks(sc_conv, float(B * J * C))
    sc_add = jnp.dot(pool_ref[...], scn, preferred_element_type=f32)     # pool over J + bcast (H, K*C)

    # ---------- residual add; single lane-dense output slab ----------
    out_main = g2n + sc_add                                              # (H, K*C)
    parts = [out_main, adj_mat]
    pad_w = out_ref.shape[1] - (K * C + KK)
    if pad_w > 0:
        parts.append(jnp.zeros((H, pad_w), f32))
    out_ref[...] = jnp.concatenate(parts, axis=1)


# ----------------------------- host-side weight preprocessing helpers -----------------------------
def _shift_mat(n, block, d):
    """S[r, r+d] = 1 when r and r+d fall in the same length-`block` group (zero-padded conv shift)."""
    r = jnp.arange(n)
    valid = (((r % block) + d) >= 0) & (((r % block) + d) < block)
    return jnp.eye(n, k=d, dtype=jnp.float32) * valid[:, None].astype(jnp.float32)


def _depthwise_band(wfe, K, C, dm):
    """(K*C, K*C) lane-mixing matrix of the depthwise conv for row-offset index dm."""
    w_d = wfe[:, dm, :]                                  # (K, KS)
    n = K * C
    ci = jnp.arange(n)[:, None]
    co = jnp.arange(n)[None, :]
    d = (ci % C) - (co % C)
    inband = ((ci // C) == (co // C)) & (jnp.abs(d) <= 1)
    vals = w_d[co // C, jnp.clip(d + 1, 0, 2)]
    return jnp.where(inband, vals, 0.0).astype(jnp.float32)


def _full_band(wsc, K, C, dj):
    """(K*C, K*C) lane-mixing matrix of the dense K->K shortcut conv for row-offset index dj."""
    w_d = wsc[:, :, dj, :]                               # (K_out, K_in, KS)
    n = K * C
    ci = jnp.arange(n)[:, None]
    co = jnp.arange(n)[None, :]
    d = (ci % C) - (co % C)
    inband = jnp.abs(d) <= 1
    vals = w_d[co // C, ci // C, jnp.clip(d + 1, 0, 2)]
    return jnp.where(inband, vals, 0.0).astype(jnp.float32)


# ----------------------------- Block forward (wrapper) -----------------------------
def block_forward(x, params):
    B, J, K, C = x.shape
    M, KS = MULTI_HEADS, KERNEL_SIZE
    f32 = jnp.float32
    eye_b = jnp.eye(B, dtype=f32)

    # host-side weight preprocessing: pure folding / layout expansion of the conv weights
    w_mh = jnp.dot(params["w_mh2"], params["w_mh1"])                     # fold the two 1x1 convs
    wmh_blk = jnp.kron(eye_b, w_mh)                                      # (B*M, B*J)
    wff1_blk = jnp.kron(eye_b, params["w_ff1"])                          # (B*4M, B*M)
    wff2_blk = jnp.kron(eye_b, params["w_ff2"])                          # (B*M, B*4M)
    pool_bcast = jnp.kron(eye_b, jnp.full((M, J), 1.0 / J, f32))         # avg over J + bcast over M

    sfe = jnp.stack([_shift_mat(B * M, M, t - KS // 2) for t in range(KS)])   # (KS, B*M, B*M)
    ssc = jnp.stack([_shift_mat(B * J, J, t - KS // 2) for t in range(KS)])   # (KS, B*J, B*J)
    wfeb = jnp.stack([_depthwise_band(params["w_fe"], K, C, t) for t in range(KS)])
    wscb = jnp.stack([_full_band(params["w_sc"], K, C, t) for t in range(KS)])

    idx = jnp.arange(K * C)
    blkc = ((idx[:, None] // C) == (idx[None, :] // C)).astype(f32)      # per-node block-sum matrix

    x_slab = x.reshape(B * J, K * C)                                     # rows=(b,j), lanes=(k,c)
    out_w = ((K * C + K * K + 127) // 128) * 128                         # lane-dense output slab

    kern = functools.partial(_block_kernel, B=B, J=J, K=K, M=M, C=C, KS=KS)
    vmem = pl.BlockSpec(memory_space=pltpu.MemorySpace.VMEM)

    # TODO(synk): on v7x a leading batch grid axis could use the 2nd TensorCore, but the in-kernel
    #             BatchNorms couple the batch, so at B=2 the whole block runs fused on one core.
    out_slab = pl.pallas_call(
        kern,
        out_shape=jax.ShapeDtypeStruct((B * M, out_w), f32),
        in_specs=[vmem] * 12,
        out_specs=vmem,
    )(x_slab, wmh_blk, params["w_attn1"].T, params["w_attn2"].T,
      sfe, wfeb, wff1_blk, wff2_blk, ssc, wscb, blkc, pool_bcast)

    out = out_slab[:, :K * C].reshape(B, M, K, C)                        # layout plumbing only
    adj = out_slab[:, K * C:K * C + K * K].reshape(B, M, K, K)
    return out, adj


# ----------------------------- deterministic parameter init -----------------------------
def init_params(key):
    K, J, M = NODE_SIZE, INPUT_SIZE, MULTI_HEADS
    KK = K * K
    ks = jax.random.split(key, 8)

    def w(k, shape, fan_in):
        return jax.random.normal(k, shape, jnp.float32) / jnp.sqrt(float(fan_in))

    return {
        "w_mh1":   w(ks[0], (M, J), J),                                   # Conv2d(J, M, 1)
        "w_mh2":   w(ks[1], (M, M), M),                                   # Conv2d(M, M, 1)
        "w_attn1": w(ks[2], (KK // 2, KK), KK),                           # Conv2d(K*K, K*K//2, 1)
        "w_attn2": w(ks[3], (KK, KK // 2), KK // 2),                      # Conv2d(K*K//2, K*K, 1)
        "w_fe":    w(ks[4], (K, KERNEL_SIZE, KERNEL_SIZE), KERNEL_SIZE ** 2),   # depthwise kxk
        "w_ff1":   w(ks[5], (MID_CH * 4, MID_CH), MID_CH),                # Conv2d(mid, 4*mid, 1)
        "w_ff2":   w(ks[6], (M, MID_CH * 4), MID_CH * 4),                 # Conv2d(4*mid, M, 1)
        "w_sc":    w(ks[7], (K, K, KERNEL_SIZE, KERNEL_SIZE), K * KERNEL_SIZE ** 2),  # shortcut conv
    }


if __name__ == "__main__":
    key = jax.random.PRNGKey(0)
    kx, kp = jax.random.split(key)
    x = jax.random.normal(kx, (BATCH, INPUT_SIZE, NODE_SIZE, SIG_LEN), jnp.float32)
    params = init_params(kp)

    out, adj = jax.jit(block_forward)(x, params)
    jax.block_until_ready(out)

    assert out.shape == (BATCH, MULTI_HEADS, NODE_SIZE, SIG_LEN), out.shape
    assert adj.shape == (BATCH, MULTI_HEADS, NODE_SIZE, NODE_SIZE), adj.shape
    assert bool(jnp.all(jnp.isfinite(out))) and bool(jnp.all(jnp.isfinite(adj)))
    print("KERNEL_OK")
</pallas_src>

<mosaic_0001>
module attributes {stable_mosaic.version = 11 : i64} {
  func.func @_block_kernel(%arg0: memref<6x64xf32, #tpu.memory_space<vmem>>, %arg1: memref<8x6xf32, #tpu.memory_space<vmem>>, %arg2: memref<16x8xf32, #tpu.memory_space<vmem>>, %arg3: memref<8x16xf32, #tpu.memory_space<vmem>>, %arg4: memref<3x8x8xf32, #tpu.memory_space<vmem>>, %arg5: memref<3x64x64xf32, #tpu.memory_space<vmem>>, %arg6: memref<32x8xf32, #tpu.memory_space<vmem>>, %arg7: memref<8x32xf32, #tpu.memory_space<vmem>>, %arg8: memref<3x6x6xf32, #tpu.memory_space<vmem>>, %arg9: memref<3x64x64xf32, #tpu.memory_space<vmem>>, %arg10: memref<64x64xf32, #tpu.memory_space<vmem>>, %arg11: memref<8x6xf32, #tpu.memory_space<vmem>>, %arg12: memref<8x128xf32, #tpu.memory_space<vmem>>) attributes {dimension_semantics = [], scalar_prefetch = 0 : i64, scratch_operands = 0 : i64, tpu.core_type = #tpu.core_type<tc>} {
    %c0 = arith.constant 0 : index
    %c0_0 = arith.constant 0 : index
    %0 = vector.load %arg0[%c0, %c0_0] : memref<6x64xf32, #tpu.memory_space<vmem>>, vector<6x64xf32>
    %c0_1 = arith.constant 0 : index
    %c0_2 = arith.constant 0 : index
    %1 = vector.load %arg10[%c0_1, %c0_2] : memref<64x64xf32, #tpu.memory_space<vmem>>, vector<64x64xf32>
    %c0_3 = arith.constant 0 : index
    %c0_4 = arith.constant 0 : index
    %2 = vector.load %arg1[%c0_3, %c0_4] : memref<8x6xf32, #tpu.memory_space<vmem>>, vector<8x6xf32>
    %cst = arith.constant dense<0.000000e+00> : vector<8x64xf32>
    %3 = tpu.matmul %2, %0, %cst {dimension_numbers = #tpu.dot_dimension_numbers<[1], [0], [0], [1], [0, 0, 1, 1], [], []>} : vector<8x6xf32>, vector<6x64xf32>, vector<8x64xf32> -> vector<8x64xf32>
    %4 = vector.extract_strided_slice %3 {offsets = [0, 0], sizes = [8, 16], strides = [1, 1]} : vector<8x64xf32> to vector<8x16xf32>
    %5 = vector.extract_strided_slice %3 {offsets = [0, 16], sizes = [8, 16], strides = [1, 1]} : vector<8x64xf32> to vector<8x16xf32>
    %6 = vector.extract_strided_slice %3 {offsets = [0, 32], sizes = [8, 16], strides = [1, 1]} : vector<8x64xf32> to vector<8x16xf32>
    %7 = vector.extract_strided_slice %3 {offsets = [0, 48], sizes = [8, 16], strides = [1, 1]} : vector<8x64xf32> to vector<8x16xf32>
    %cst_5 = arith.constant dense<0.000000e+00> : vector<8xf32>
    %8 = vector.multi_reduction <add>, %4, %cst_5 [1] : vector<8x16xf32> to vector<8xf32>
    %9 = vector.shape_cast %8 : vector<8xf32> to vector<8x1xf32>
    %cst_6 = arith.constant dense<0.000000e+00> : vector<8xf32>
    %10 = vector.multi_reduction <add>, %5, %cst_6 [1] : vector<8x16xf32> to vector<8xf32>
    %11 = vector.shape_cast %10 : vector<8xf32> to vector<8x1xf32>
    %cst_7 = arith.constant dense<0.000000e+00> : vector<8xf32>
    %12 = vector.multi_reduction <add>, %6, %cst_7 [1] : vector<8x16xf32> to vector<8xf32>
    %13 = vector.shape_cast %12 : vector<8xf32> to vector<8x1xf32>
    %cst_8 = arith.constant dense<0.000000e+00> : vector<8xf32>
    %14 = vector.multi_reduction <add>, %7, %cst_8 [1] : vector<8x16xf32> to vector<8xf32>
    %15 = vector.shape_cast %14 : vector<8xf32> to vector<8x1xf32>
    %cst_9 = arith.constant 6.250000e-02 : f32
    %16 = vector.broadcast %cst_9 : f32 to vector<8x1xf32>
    %17 = arith.mulf %9, %16 : vector<8x1xf32>
    %18 = vector.broadcast %17 : vector<8x1xf32> to vector<8x16xf32>
    %19 = arith.subf %4, %18 : vector<8x16xf32>
    %cst_10 = arith.constant 6.250000e-02 : f32
    %20 = vector.broadcast %cst_10 : f32 to vector<8x1xf32>
    %21 = arith.mulf %11, %20 : vector<8x1xf32>
    %22 = vector.broadcast %21 : vector<8x1xf32> to vector<8x16xf32>
    %23 = arith.subf %5, %22 : vector<8x16xf32>
    %cst_11 = arith.constant 6.250000e-02 : f32
    %24 = vector.broadcast %cst_11 : f32 to vector<8x1xf32>
    %25 = arith.mulf %13, %24 : vector<8x1xf32>
    %26 = vector.broadcast %25 : vector<8x1xf32> to vector<8x16xf32>
    %27 = arith.subf %6, %26 : vector<8x16xf32>
    %cst_12 = arith.constant 6.250000e-02 : f32
    %28 = vector.broadcast %cst_12 : f32 to vector<8x1xf32>
    %29 = arith.mulf %15, %28 : vector<8x1xf32>
    %30 = vector.broadcast %29 : vector<8x1xf32> to vector<8x16xf32>
    %31 = arith.subf %7, %30 : vector<8x16xf32>
    %32 = arith.mulf %19, %19 : vector<8x16xf32>
    %cst_13 = arith.constant dense<0.000000e+00> : vector<8xf32>
    %33 = vector.multi_reduction <add>, %32, %cst_13 [1] : vector<8x16xf32> to vector<8xf32>
    %34 = vector.shape_cast %33 : vector<8xf32> to vector<8x1xf32>
    %35 = math.rsqrt %34 : vector<8x1xf32>
    %36 = arith.mulf %23, %23 : vector<8x16xf32>
    %cst_14 = arith.constant dense<0.000000e+00> : vector<8xf32>
    %37 = vector.multi_reduction <add>, %36, %cst_14 [1] : vector<8x16xf32> to vector<8xf32>
    %38 = vector.shape_cast %37 : vector<8xf32> to vector<8x1xf32>
    %39 = math.rsqrt %38 : vector<8x1xf32>
    %40 = arith.mulf %27, %27 : vector<8x16xf32>
    %cst_15 = arith.constant dense<0.000000e+00> : vector<8xf32>
    %41 = vector.multi_reduction <add>, %40, %cst_15 [1] : vector<8x16xf32> to vector<8xf32>
    %42 = vector.shape_cast %41 : vector<8xf32> to vector<8x1xf32>
    %43 = math.rsqrt %42 : vector<8x1xf32>
    %44 = arith.mulf %31, %31 : vector<8x16xf32>
    %cst_16 = arith.constant dense<0.000000e+00> : vector<8xf32>
    %45 = vector.multi_reduction <add>, %44, %cst_16 [1] : vector<8x16xf32> to vector<8xf32>
    %46 = vector.shape_cast %45 : vector<8xf32> to vector<8x1xf32>
    %47 = math.rsqrt %46 : vector<8x1xf32>
    %cst_17 = arith.constant 1.000000e+00 : f32
    %48 = vector.broadcast %cst_17 : f32 to vector<8x1xf32>
    %cst_18 = arith.constant 6.250000e-02 : f32
    %49 = vector.broadcast %cst_18 : f32 to vector<8x1xf32>
    %50 = arith.mulf %9, %49 : vector<8x1xf32>
    %51 = arith.mulf %19, %23 : vector<8x16xf32>
    %cst_19 = arith.constant dense<0.000000e+00> : vector<8xf32>
    %52 = vector.multi_reduction <add>, %51, %cst_19 [1] : vector<8x16xf32> to vector<8xf32>
    %53 = vector.shape_cast %52 : vector<8xf32> to vector<8x1xf32>
    %54 = arith.mulf %35, %39 : vector<8x1xf32>
    %55 = arith.mulf %53, %54 : vector<8x1xf32>
    %56 = arith.cmpf oeq, %4, %5 : vector<8x16xf32>
    %57 = arith.addf %5, %5 : vector<8x16xf32>
    %58 = arith.select %56, %5, %57 : vector<8x16xi1>, vector<8x16xf32>
    %cst_20 = arith.constant dense<0.000000e+00> : vector<8xf32>
    %59 = vector.multi_reduction <add>, %58, %cst_20 [1] : vector<8x16xf32> to vector<8xf32>
    %60 = vector.shape_cast %59 : vector<8xf32> to vector<8x1xf32>
    %61 = arith.addf %4, %4 : vector<8x16xf32>
    %62 = arith.select %56, %4, %61 : vector<8x16xi1>, vector<8x16xf32>
    %cst_21 = arith.constant dense<0.000000e+00> : vector<8xf32>
    %63 = vector.multi_reduction <add>, %62, %cst_21 [1] : vector<8x16xf32> to vector<8xf32>
    %64 = vector.shape_cast %63 : vector<8xf32> to vector<8x1xf32>
    %65 = arith.addf %9, %60 : vector<8x1xf32>
    %cst_22 = arith.constant 3.125000e-02 : f32
    %66 = vector.broadcast %cst_22 : f32 to vector<8x1xf32>
    %67 = arith.mulf %65, %66 : vector<8x1xf32>
    %68 = arith.addf %11, %64 : vector<8x1xf32>
    %cst_23 = arith.constant 3.125000e-02 : f32
    %69 = vector.broadcast %cst_23 : f32 to vector<8x1xf32>
    %70 = arith.mulf %68, %69 : vector<8x1xf32>
    %71 = arith.mulf %19, %27 : vector<8x16xf32>
    %cst_24 = arith.constant dense<0.000000e+00> : vector<8xf32>
    %72 = vector.multi_reduction <add>, %71, %cst_24 [1] : vector<8x16xf32> to vector<8xf32>
    %73 = vector.shape_cast %72 : vector<8xf32> to vector<8x1xf32>
    %74 = arith.mulf %35, %43 : vector<8x1xf32>
    %75 = arith.mulf %73, %74 : vector<8x1xf32>
    %76 = arith.cmpf oeq, %4, %6 : vector<8x16xf32>
    %77 = arith.addf %6, %6 : vector<8x16xf32>
    %78 = arith.select %76, %6, %77 : vector<8x16xi1>, vector<8x16xf32>
    %cst_25 = arith.constant dense<0.000000e+00> : vector<8xf32>
    %79 = vector.multi_reduction <add>, %78, %cst_25 [1] : vector<8x16xf32> to vector<8xf32>
    %80 = vector.shape_cast %79 : vector<8xf32> to vector<8x1xf32>
    %81 = arith.addf %4, %4 : vector<8x16xf32>
    %82 = arith.select %76, %4, %81 : vector<8x16xi1>, vector<8x16xf32>
    %cst_26 = arith.constant dense<0.000000e+00> : vector<8xf32>
    %83 = vector.multi_reduction <add>, %82, %cst_26 [1] : vector<8x16xf32> to vector<8xf32>
    %84 = vector.shape_cast %83 : vector<8xf32> to vector<8x1xf32>
    %85 = arith.addf %9, %80 : vector<8x1xf32>
    %cst_27 = arith.constant 3.125000e-02 : f32
    %86 = vector.broadcast %cst_27 : f32 to vector<8x1xf32>
    %87 = arith.mulf %85, %86 : vector<8x1xf32>
    %88 = arith.addf %13, %84 : vector<8x1xf32>
    %cst_28 = arith.constant 3.125000e-02 : f32
    %89 = vector.broadcast %cst_28 : f32 to vector<8x1xf32>
    %90 = arith.mulf %88, %89 : vector<8x1xf32>
    %91 = arith.mulf %19, %31 : vector<8x16xf32>
    %cst_29 = arith.constant dense<0.000000e+00> : vector<8xf32>
    %92 = vector.multi_reduction <add>, %91, %cst_29 [1] : vector<8x16xf32> to vector<8xf32>
    %93 = vector.shape_cast %92 : vector<8xf32> to vector<8x1xf32>
    %94 = arith.mulf %35, %47 : vector<8x1xf32>
    %95 = arith.mulf %93, %94 : vector<8x1xf32>
    %96 = arith.cmpf oeq, %4, %7 : vector<8x16xf32>
    %97 = arith.addf %7, %7 : vector<8x16xf32>
    %98 = arith.select %96, %7, %97 : vector<8x16xi1>, vector<8x16xf32>
    %cst_30 = arith.constant dense<0.000000e+00> : vector<8xf32>
    %99 = vector.multi_reduction <add>, %98, %cst_30 [1] : vector<8x16xf32> to vector<8xf32>
    %100 = vector.shape_cast %99 : vector<8xf32> to vector<8x1xf32>
    %101 = arith.addf %4, %4 : vector<8x16xf32>
    %102 = arith.select %96, %4, %101 : vector<8x16xi1>, vector<8x16xf32>
    %cst_31 = arith.constant dense<0.000000e+00> : vector<8xf32>
    %103 = vector.multi_reduction <add>, %102, %cst_31 [1] : vector<8x16xf32> to vector<8xf32>
    %104 = vector.shape_cast %103 : vector<8xf32> to vector<8x1xf32>
    %105 = arith.addf %9, %100 : vector<8x1xf32>
    %cst_32 = arith.constant 3.125000e-02 : f32
    %106 = vector.broadcast %cst_32 : f32 to vector<8x1xf32>
    %107 = arith.mulf %105, %106 : vector<8x1xf32>
    %108 = arith.addf %15, %104 : vector<8x1xf32>
    %cst_33 = arith.constant 3.125000e-02 : f32
    %109 = vector.broadcast %cst_33 : f32 to vector<8x1xf32>
    %110 = arith.mulf %108, %109 : vector<8x1xf32>
    %cst_34 = arith.constant 6.250000e-02 : f32
    %111 = vector.broadcast %cst_34 : f32 to vector<8x1xf32>
    %112 = arith.mulf %11, %111 : vector<8x1xf32>
    %113 = arith.mulf %23, %27 : vector<8x16xf32>
    %cst_35 = arith.constant dense<0.000000e+00> : vector<8xf32>
    %114 = vector.multi_reduction <add>, %113, %cst_35 [1] : vector<8x16xf32> to vector<8xf32>
    %115 = vector.shape_cast %114 : vector<8xf32> to vector<8x1xf32>
    %116 = arith.mulf %39, %43 : vector<8x1xf32>
    %117 = arith.mulf %115, %116 : vector<8x1xf32>
    %118 = arith.cmpf oeq, %5, %6 : vector<8x16xf32>
    %119 = arith.addf %6, %6 : vector<8x16xf32>
    %120 = arith.select %118, %6, %119 : vector<8x16xi1>, vector<8x16xf32>
    %cst_36 = arith.constant dense<0.000000e+00> : vector<8xf32>
    %121 = vector.multi_reduction <add>, %120, %cst_36 [1] : vector<8x16xf32> to vector<8xf32>
    %122 = vector.shape_cast %121 : vector<8xf32> to vector<8x1xf32>
    %123 = arith.addf %5, %5 : vector<8x16xf32>
    %124 = arith.select %118, %5, %123 : vector<8x16xi1>, vector<8x16xf32>
    %cst_37 = arith.constant dense<0.000000e+00> : vector<8xf32>
    %125 = vector.multi_reduction <add>, %124, %cst_37 [1] : vector<8x16xf32> to vector<8xf32>
    %126 = vector.shape_cast %125 : vector<8xf32> to vector<8x1xf32>
    %127 = arith.addf %11, %122 : vector<8x1xf32>
    %cst_38 = arith.constant 3.125000e-02 : f32
    %128 = vector.broadcast %cst_38 : f32 to vector<8x1xf32>
    %129 = arith.mulf %127, %128 : vector<8x1xf32>
    %130 = arith.addf %13, %126 : vector<8x1xf32>
    %cst_39 = arith.constant 3.125000e-02 : f32
    %131 = vector.broadcast %cst_39 : f32 to vector<8x1xf32>
    %132 = arith.mulf %130, %131 : vector<8x1xf32>
    %133 = arith.mulf %23, %31 : vector<8x16xf32>
    %cst_40 = arith.constant dense<0.000000e+00> : vector<8xf32>
    %134 = vector.multi_reduction <add>, %133, %cst_40 [1] : vector<8x16xf32> to vector<8xf32>
    %135 = vector.shape_cast %134 : vector<8xf32> to vector<8x1xf32>
    %136 = arith.mulf %39, %47 : vector<8x1xf32>
    %137 = arith.mulf %135, %136 : vector<8x1xf32>
    %138 = arith.cmpf oeq, %5, %7 : vector<8x16xf32>
    %139 = arith.addf %7, %7 : vector<8x16xf32>
    %140 = arith.select %138, %7, %139 : vector<8x16xi1>, vector<8x16xf32>
    %cst_41 = arith.constant dense<0.000000e+00> : vector<8xf32>
    %141 = vector.multi_reduction <add>, %140, %cst_41 [1] : vector<8x16xf32> to vector<8xf32>
    %142 = vector.shape_cast %141 : vector<8xf32> to vector<8x1xf32>
    %143 = arith.addf %5, %5 : vector<8x16xf32>
    %144 = arith.select %138, %5, %143 : vector<8x16xi1>, vector<8x16xf32>
    %cst_42 = arith.constant dense<0.000000e+00> : vector<8xf32>
    %145 = vector.multi_reduction <add>, %144, %cst_42 [1] : vector<8x16xf32> to vector<8xf32>
    %146 = vector.shape_cast %145 : vector<8xf32> to vector<8x1xf32>
    %147 = arith.addf %11, %142 : vector<8x1xf32>
    %cst_43 = arith.constant 3.125000e-02 : f32
    %148 = vector.broadcast %cst_43 : f32 to vector<8x1xf32>
    %149 = arith.mulf %147, %148 : vector<8x1xf32>
    %150 = arith.addf %15, %146 : vector<8x1xf32>
    %cst_44 = arith.constant 3.125000e-02 : f32
    %151 = vector.broadcast %cst_44 : f32 to vector<8x1xf32>
    %152 = arith.mulf %150, %151 : vector<8x1xf32>
    %cst_45 = arith.constant 6.250000e-02 : f32
    %153 = vector.broadcast %cst_45 : f32 to vector<8x1xf32>
    %154 = arith.mulf %13, %153 : vector<8x1xf32>
    %155 = arith.mulf %27, %31 : vector<8x16xf32>
    %cst_46 = arith.constant dense<0.000000e+00> : vector<8xf32>
    %156 = vector.multi_reduction <add>, %155, %cst_46 [1] : vector<8x16xf32> to vector<8xf32>
    %157 = vector.shape_cast %156 : vector<8xf32> to vector<8x1xf32>
    %158 = arith.mulf %43, %47 : vector<8x1xf32>
    %159 = arith.mulf %157, %158 : vector<8x1xf32>
    %160 = arith.cmpf oeq, %6, %7 : vector<8x16xf32>
    %161 = arith.addf %7, %7 : vector<8x16xf32>
    %162 = arith.select %160, %7, %161 : vector<8x16xi1>, vector<8x16xf32>
    %cst_47 = arith.constant dense<0.000000e+00> : vector<8xf32>
    %163 = vector.multi_reduction <add>, %162, %cst_47 [1] : vector<8x16xf32> to vector<8xf32>
    %164 = vector.shape_cast %163 : vector<8xf32> to vector<8x1xf32>
    %165 = arith.addf %6, %6 : vector<8x16xf32>
    %166 = arith.select %160, %6, %165 : vector<8x16xi1>, vector<8x16xf32>
    %cst_48 = arith.constant dense<0.000000e+00> : vector<8xf32>
    %167 = vector.multi_reduction <add>, %166, %cst_48 [1] : vector<8x16xf32> to vector<8xf32>
    %168 = vector.shape_cast %167 : vector<8xf32> to vector<8x1xf32>
    %169 = arith.addf %13, %164 : vector<8x1xf32>
    %cst_49 = arith.constant 3.125000e-02 : f32
    %170 = vector.broadcast %cst_49 : f32 to vector<8x1xf32>
    %171 = arith.mulf %169, %170 : vector<8x1xf32>
    %172 = arith.addf %15, %168 : vector<8x1xf32>
    %cst_50 = arith.constant 3.125000e-02 : f32
    %173 = vector.broadcast %cst_50 : f32 to vector<8x1xf32>
    %174 = arith.mulf %172, %173 : vector<8x1xf32>
    %cst_51 = arith.constant 6.250000e-02 : f32
    %175 = vector.broadcast %cst_51 : f32 to vector<8x1xf32>
    %176 = arith.mulf %15, %175 : vector<8x1xf32>
    %177 = tpu.concatenate %48, %55, %75, %95 in 1 : vector<8x1xf32>, vector<8x1xf32>, vector<8x1xf32>, vector<8x1xf32> -> vector<8x4xf32>
    %178 = tpu.concatenate %55, %48, %117, %137 in 1 : vector<8x1xf32>, vector<8x1xf32>, vector<8x1xf32>, vector<8x1xf32> -> vector<8x4xf32>
    %179 = tpu.concatenate %75, %117, %48, %159 in 1 : vector<8x1xf32>, vector<8x1xf32>, vector<8x1xf32>, vector<8x1xf32> -> vector<8x4xf32>
    %180 = tpu.concatenate %95, %137, %159, %48 in 1 : vector<8x1xf32>, vector<8x1xf32>, vector<8x1xf32>, vector<8x1xf32> -> vector<8x4xf32>
    %181 = tpu.concatenate %177, %178, %179, %180 in 1 : vector<8x4xf32>, vector<8x4xf32>, vector<8x4xf32>, vector<8x4xf32> -> vector<8x16xf32>
    %182 = tpu.concatenate %50, %67, %87, %107, %70, %112, %129, %149, %90, %132, %154, %171, %110, %152, %174, %176 in 1 : vector<8x1xf32>, vector<8x1xf32>, vector<8x1xf32>, vector<8x1xf32>, vector<8x1xf32>, vector<8x1xf32>, vector<8x1xf32>, vector<8x1xf32>, vector<8x1xf32>, vector<8x1xf32>, vector<8x1xf32>, vector<8x1xf32>, vector<8x1xf32>, vector<8x1xf32>, vector<8x1xf32>, vector<8x1xf32> -> vector<8x16xf32>
    %c0_52 = arith.constant 0 : index
    %c0_53 = arith.constant 0 : index
    %183 = vector.load %arg2[%c0_52, %c0_53] : memref<16x8xf32, #tpu.memory_space<vmem>>, vector<16x8xf32>
    %cst_54 = arith.constant dense<0.000000e+00> : vector<8x8xf32>
    %184 = tpu.matmul %182, %183, %cst_54 {dimension_numbers = #tpu.dot_dimension_numbers<[1], [0], [0], [1], [0, 0, 1, 1], [], []>} : vector<8x16xf32>, vector<16x8xf32>, vector<8x8xf32> -> vector<8x8xf32>
    %cst_55 = arith.constant 0.707106769 : f32
    %185 = vector.broadcast %cst_55 : f32 to vector<8x8xf32>
    %186 = arith.mulf %184, %185 : vector<8x8xf32>
    %cst_56 = arith.constant 0.000000e+00 : f32
    %187 = vector.broadcast %cst_56 : f32 to vector<8x8xf32>
    %188 = arith.cmpf oge, %186, %187 : vector<8x8xf32>
    %cst_57 = arith.constant 1.000000e+00 : f32
    %cst_58 = arith.constant -1.000000e+00 : f32
    %189 = vector.broadcast %cst_57 : f32 to vector<8x8xf32>
    %190 = vector.broadcast %cst_58 : f32 to vector<8x8xf32>
    %191 = arith.select %188, %189, %190 : vector<8x8xi1>, vector<8x8xf32>
    %192 = math.absf %186 : vector<8x8xf32>
    %cst_59 = arith.constant 0.327591091 : f32
    %193 = vector.broadcast %cst_59 : f32 to vector<8x8xf32>
    %194 = arith.mulf %193, %192 : vector<8x8xf32>
    %cst_60 = arith.constant 1.000000e+00 : f32
    %195 = vector.broadcast %cst_60 : f32 to vector<8x8xf32>
    %196 = arith.addf %195, %194 : vector<8x8xf32>
    %197 = tpu.reciprocal %196 {approx = true} : vector<8x8xf32> -> vector<8x8xf32>
    %cst_61 = arith.constant 1.06140542 : f32
    %198 = vector.broadcast %cst_61 : f32 to vector<8x8xf32>
    %199 = arith.mulf %198, %197 : vector<8x8xf32>
    %cst_62 = arith.constant -1.45315206 : f32
    %200 = vector.broadcast %cst_62 : f32 to vector<8x8xf32>
    %201 = arith.addf %199, %200 : vector<8x8xf32>
    %202 = arith.mulf %201, %197 : vector<8x8xf32>
    %cst_63 = arith.constant 1.42141378 : f32
    %203 = vector.broadcast %cst_63 : f32 to vector<8x8xf32>
    %204 = arith.addf %202, %203 : vector<8x8xf32>
    %205 = arith.mulf %204, %197 : vector<8x8xf32>
    %cst_64 = arith.constant -0.284496725 : f32
    %206 = vector.broadcast %cst_64 : f32 to vector<8x8xf32>
    %207 = arith.addf %205, %206 : vector<8x8xf32>
    %208 = arith.mulf %207, %197 : vector<8x8xf32>
    %cst_65 = arith.constant 0.254829586 : f32
    %209 = vector.broadcast %cst_65 : f32 to vector<8x8xf32>
    %210 = arith.addf %208, %209 : vector<8x8xf32>
    %211 = arith.mulf %210, %197 : vector<8x8xf32>
    %cst_66 = arith.constant 0.000000e+00 : f32
    %212 = vector.broadcast %cst_66 : f32 to vector<8x8xf32>
    %213 = arith.subf %212, %192 : vector<8x8xf32>
    %214 = arith.mulf %213, %192 : vector<8x8xf32>
    %215 = math.exp %214 : vector<8x8xf32>
    %216 = arith.mulf %211, %215 : vector<8x8xf32>
    %cst_67 = arith.constant 1.000000e+00 : f32
    %217 = vector.broadcast %cst_67 : f32 to vector<8x8xf32>
    %218 = arith.subf %217, %216 : vector<8x8xf32>
    %219 = arith.mulf %191, %218 : vector<8x8xf32>
    %cst_68 = arith.constant 5.000000e-01 : f32
    %220 = vector.broadcast %cst_68 : f32 to vector<8x8xf32>
    %221 = arith.mulf %220, %184 : vector<8x8xf32>
    %cst_69 = arith.constant 1.000000e+00 : f32
    %222 = vector.broadcast %cst_69 : f32 to vector<8x8xf32>
    %223 = arith.addf %222, %219 : vector<8x8xf32>
    %224 = arith.mulf %221, %223 : vector<8x8xf32>
    %c0_70 = arith.constant 0 : index
    %c0_71 = arith.constant 0 : index
    %225 = vector.load %arg3[%c0_70, %c0_71] : memref<8x16xf32, #tpu.memory_space<vmem>>, vector<8x16xf32>
    %cst_72 = arith.constant dense<0.000000e+00> : vector<8x16xf32>
    %226 = tpu.matmul %224, %225, %cst_72 {dimension_numbers = #tpu.dot_dimension_numbers<[1], [0], [0], [1], [0, 0, 1, 1], [], []>} : vector<8x8xf32>, vector<8x16xf32>, vector<8x16xf32> -> vector<8x16xf32>
    %227 = arith.negf %226 : vector<8x16xf32>
    %228 = math.exp %227 : vector<8x16xf32>
    %cst_73 = arith.constant 1.000000e+00 : f32
    %229 = vector.broadcast %cst_73 : f32 to vector<8x16xf32>
    %230 = arith.addf %229, %228 : vector<8x16xf32>
    %231 = arith.divf %229, %230 : vector<8x16xf32>
    %cst_74 = arith.constant 0.000000e+00 : f32
    %232 = vector.broadcast %cst_74 : f32 to vector<8x4xf32>
    %233 = arith.cmpf ogt, %177, %232 : vector<8x4xf32>
    %234 = vector.extract_strided_slice %231 {offsets = [0, 0], sizes = [8, 4], strides = [1, 1]} : vector<8x16xf32> to vector<8x4xf32>
    %cst_75 = arith.constant -9.000000e+15 : f32
    %235 = vector.broadcast %cst_75 : f32 to vector<8x4xf32>
    %236 = arith.select %233, %234, %235 : vector<8x4xi1>, vector<8x4xf32>
    %cst_76 = arith.constant dense<0xFF800000> : vector<8xf32>
    %237 = vector.multi_reduction <maximumf>, %236, %cst_76 [1] : vector<8x4xf32> to vector<8xf32>
    %238 = vector.shape_cast %237 : vector<8xf32> to vector<8x1xf32>
    %239 = vector.broadcast %238 : vector<8x1xf32> to vector<8x4xf32>
    %240 = arith.subf %236, %239 : vector<8x4xf32>
    %241 = math.exp %240 : vector<8x4xf32>
    %cst_77 = arith.constant dense<0.000000e+00> : vector<8xf32>
    %242 = vector.multi_reduction <add>, %241, %cst_77 [1] : vector<8x4xf32> to vector<8xf32>
    %243 = vector.shape_cast %242 : vector<8xf32> to vector<8x1xf32>
    %244 = vector.broadcast %243 : vector<8x1xf32> to vector<8x4xf32>
    %245 = arith.divf %241, %244 : vector<8x4xf32>
    %246 = vector.extract_strided_slice %245 {offsets = [0, 0], sizes = [8, 1], strides = [1, 1]} : vector<8x4xf32> to vector<8x1xf32>
    %247 = vector.broadcast %246 : vector<8x1xf32> to vector<8x16xf32>
    %248 = arith.mulf %247, %4 : vector<8x16xf32>
    %249 = vector.extract_strided_slice %245 {offsets = [0, 1], sizes = [8, 1], strides = [1, 1]} : vector<8x4xf32> to vector<8x1xf32>
    %250 = vector.broadcast %249 : vector<8x1xf32> to vector<8x16xf32>
    %251 = arith.mulf %250, %5 : vector<8x16xf32>
    %252 = arith.addf %248, %251 : vector<8x16xf32>
    %253 = vector.extract_strided_slice %245 {offsets = [0, 2], sizes = [8, 1], strides = [1, 1]} : vector<8x4xf32> to vector<8x1xf32>
    %254 = vector.broadcast %253 : vector<8x1xf32> to vector<8x16xf32>
    %255 = arith.mulf %254, %6 : vector<8x16xf32>
    %256 = arith.addf %252, %255 : vector<8x16xf32>
    %257 = vector.extract_strided_slice %245 {offsets = [0, 3], sizes = [8, 1], strides = [1, 1]} : vector<8x4xf32> to vector<8x1xf32>
    %258 = vector.broadcast %257 : vector<8x1xf32> to vector<8x16xf32>
    %259 = arith.mulf %258, %7 : vector<8x16xf32>
    %260 = arith.addf %256, %259 : vector<8x16xf32>
    %cst_78 = arith.constant 0.000000e+00 : f32
    %261 = vector.broadcast %cst_78 : f32 to vector<8x4xf32>
    %262 = arith.cmpf ogt, %178, %261 : vector<8x4xf32>
    %263 = vector.extract_strided_slice %231 {offsets = [0, 4], sizes = [8, 4], strides = [1, 1]} : vector<8x16xf32> to vector<8x4xf32>
    %cst_79 = arith.constant -9.000000e+15 : f32
    %264 = vector.broadcast %cst_79 : f32 to vector<8x4xf32>
    %265 = arith.select %262, %263, %264 : vector<8x4xi1>, vector<8x4xf32>
    %cst_80 = arith.constant dense<0xFF800000> : vector<8xf32>
    %266 = vector.multi_reduction <maximumf>, %265, %cst_80 [1] : vector<8x4xf32> to vector<8xf32>
    %267 = vector.shape_cast %266 : vector<8xf32> to vector<8x1xf32>
    %268 = vector.broadcast %267 : vector<8x1xf32> to vector<8x4xf32>
    %269 = arith.subf %265, %268 : vector<8x4xf32>
    %270 = math.exp %269 : vector<8x4xf32>
    %cst_81 = arith.constant dense<0.000000e+00> : vector<8xf32>
    %271 = vector.multi_reduction <add>, %270, %cst_81 [1] : vector<8x4xf32> to vector<8xf32>
    %272 = vector.shape_cast %271 : vector<8xf32> to vector<8x1xf32>
    %273 = vector.broadcast %272 : vector<8x1xf32> to vector<8x4xf32>
    %274 = arith.divf %270, %273 : vector<8x4xf32>
    %275 = vector.extract_strided_slice %274 {offsets = [0, 0], sizes = [8, 1], strides = [1, 1]} : vector<8x4xf32> to vector<8x1xf32>
    %276 = vector.broadcast %275 : vector<8x1xf32> to vector<8x16xf32>
    %277 = arith.mulf %276, %4 : vector<8x16xf32>
    %278 = vector.extract_strided_slice %274 {offsets = [0, 1], sizes = [8, 1], strides = [1, 1]} : vector<8x4xf32> to vector<8x1xf32>
    %279 = vector.broadcast %278 : vector<8x1xf32> to vector<8x16xf32>
    %280 = arith.mulf %279, %5 : vector<8x16xf32>
    %281 = arith.addf %277, %280 : vector<8x16xf32>
    %282 = vector.extract_strided_slice %274 {offsets = [0, 2], sizes = [8, 1], strides = [1, 1]} : vector<8x4xf32> to vector<8x1xf32>
    %283 = vector.broadcast %282 : vector<8x1xf32> to vector<8x16xf32>
    %284 = arith.mulf %283, %6 : vector<8x16xf32>
    %285 = arith.addf %281, %284 : vector<8x16xf32>
    %286 = vector.extract_strided_slice %274 {offsets = [0, 3], sizes = [8, 1], strides = [1, 1]} : vector<8x4xf32> to vector<8x1xf32>
    %287 = vector.broadcast %286 : vector<8x1xf32> to vector<8x16xf32>
    %288 = arith.mulf %287, %7 : vector<8x16xf32>
    %289 = arith.addf %285, %288 : vector<8x16xf32>
    %cst_82 = arith.constant 0.000000e+00 : f32
    %290 = vector.broadcast %cst_82 : f32 to vector<8x4xf32>
    %291 = arith.cmpf ogt, %179, %290 : vector<8x4xf32>
    %292 = vector.extract_strided_slice %231 {offsets = [0, 8], sizes = [8, 4], strides = [1, 1]} : vector<8x16xf32> to vector<8x4xf32>
    %cst_83 = arith.constant -9.000000e+15 : f32
    %293 = vector.broadcast %cst_83 : f32 to vector<8x4xf32>
    %294 = arith.select %291, %292, %293 : vector<8x4xi1>, vector<8x4xf32>
    %cst_84 = arith.constant dense<0xFF800000> : vector<8xf32>
    %295 = vector.multi_reduction <maximumf>, %294, %cst_84 [1] : vector<8x4xf32> to vector<8xf32>
    %296 = vector.shape_cast %295 : vector<8xf32> to vector<8x1xf32>
    %297 = vector.broadcast %296 : vector<8x1xf32> to vector<8x4xf32>
    %298 = arith.subf %294, %297 : vector<8x4xf32>
    %299 = math.exp %298 : vector<8x4xf32>
    %cst_85 = arith.constant dense<0.000000e+00> : vector<8xf32>
    %300 = vector.multi_reduction <add>, %299, %cst_85 [1] : vector<8x4xf32> to vector<8xf32>
    %301 = vector.shape_cast %300 : vector<8xf32> to vector<8x1xf32>
    %302 = vector.broadcast %301 : vector<8x1xf32> to vector<8x4xf32>
    %303 = arith.divf %299, %302 : vector<8x4xf32>
    %304 = vector.extract_strided_slice %303 {offsets = [0, 0], sizes = [8, 1], strides = [1, 1]} : vector<8x4xf32> to vector<8x1xf32>
    %305 = vector.broadcast %304 : vector<8x1xf32> to vector<8x16xf32>
    %306 = arith.mulf %305, %4 : vector<8x16xf32>
    %307 = vector.extract_strided_slice %303 {offsets = [0, 1], sizes = [8, 1], strides = [1, 1]} : vector<8x4xf32> to vector<8x1xf32>
    %308 = vector.broadcast %307 : vector<8x1xf32> to vector<8x16xf32>
    %309 = arith.mulf %308, %5 : vector<8x16xf32>
    %310 = arith.addf %306, %309 : vector<8x16xf32>
    %311 = vector.extract_strided_slice %303 {offsets = [0, 2], sizes = [8, 1], strides = [1, 1]} : vector<8x4xf32> to vector<8x1xf32>
    %312 = vector.broadcast %311 : vector<8x1xf32> to vector<8x16xf32>
    %313 = arith.mulf %312, %6 : vector<8x16xf32>
    %314 = arith.addf %310, %313 : vector<8x16xf32>
    %315 = vector.extract_strided_slice %303 {offsets = [0, 3], sizes = [8, 1], strides = [1, 1]} : vector<8x4xf32> to vector<8x1xf32>
    %316 = vector.broadcast %315 : vector<8x1xf32> to vector<8x16xf32>
    %317 = arith.mulf %316, %7 : vector<8x16xf32>
    %318 = arith.addf %314, %317 : vector<8x16xf32>
    %cst_86 = arith.constant 0.000000e+00 : f32
    %319 = vector.broadcast %cst_86 : f32 to vector<8x4xf32>
    %320 = arith.cmpf ogt, %180, %319 : vector<8x4xf32>
    %321 = vector.extract_strided_slice %231 {offsets = [0, 12], sizes = [8, 4], strides = [1, 1]} : vector<8x16xf32> to vector<8x4xf32>
    %cst_87 = arith.constant -9.000000e+15 : f32
    %322 = vector.broadcast %cst_87 : f32 to vector<8x4xf32>
    %323 = arith.select %320, %321, %322 : vector<8x4xi1>, vector<8x4xf32>
    %cst_88 = arith.constant dense<0xFF800000> : vector<8xf32>
    %324 = vector.multi_reduction <maximumf>, %323, %cst_88 [1] : vector<8x4xf32> to vector<8xf32>
    %325 = vector.shape_cast %324 : vector<8xf32> to vector<8x1xf32>
    %326 = vector.broadcast %325 : vector<8x1xf32> to vector<8x4xf32>
    %327 = arith.subf %323, %326 : vector<8x4xf32>
    %328 = math.exp %327 : vector<8x4xf32>
    %cst_89 = arith.constant dense<0.000000e+00> : vector<8xf32>
    %329 = vector.multi_reduction <add>, %328, %cst_89 [1] : vector<8x4xf32> to vector<8xf32>
    %330 = vector.shape_cast %329 : vector<8xf32> to vector<8x1xf32>
    %331 = vector.broadcast %330 : vector<8x1xf32> to vector<8x4xf32>
    %332 = arith.divf %328, %331 : vector<8x4xf32>
    %333 = vector.extract_strided_slice %332 {offsets = [0, 0], sizes = [8, 1], strides = [1, 1]} : vector<8x4xf32> to vector<8x1xf32>
    %334 = vector.broadcast %333 : vector<8x1xf32> to vector<8x16xf32>
    %335 = arith.mulf %334, %4 : vector<8x16xf32>
    %336 = vector.extract_strided_slice %332 {offsets = [0, 1], sizes = [8, 1], strides = [1, 1]} : vector<8x4xf32> to vector<8x1xf32>
    %337 = vector.broadcast %336 : vector<8x1xf32> to vector<8x16xf32>
    %338 = arith.mulf %337, %5 : vector<8x16xf32>
    %339 = arith.addf %335, %338 : vector<8x16xf32>
    %340 = vector.extract_strided_slice %332 {offsets = [0, 2], sizes = [8, 1], strides = [1, 1]} : vector<8x4xf32> to vector<8x1xf32>
    %341 = vector.broadcast %340 : vector<8x1xf32> to vector<8x16xf32>
    %342 = arith.mulf %341, %6 : vector<8x16xf32>
    %343 = arith.addf %339, %342 : vector<8x16xf32>
    %344 = vector.extract_strided_slice %332 {offsets = [0, 3], sizes = [8, 1], strides = [1, 1]} : vector<8x4xf32> to vector<8x1xf32>
    %345 = vector.broadcast %344 : vector<8x1xf32> to vector<8x16xf32>
    %346 = arith.mulf %345, %7 : vector<8x16xf32>
    %347 = arith.addf %343, %346 : vector<8x16xf32>
    %348 = tpu.concatenate %260, %289, %318, %347 in 1 : vector<8x16xf32>, vector<8x16xf32>, vector<8x16xf32>, vector<8x16xf32> -> vector<8x64xf32>
    %cst_90 = arith.constant dense<0.000000e+00> : vector<8xf32>
    %349 = vector.multi_reduction <add>, %348, %cst_90 [1] : vector<8x64xf32> to vector<8xf32>
    %350 = vector.shape_cast %349 : vector<8xf32> to vector<8x1xf32>
    %351 = vector.extract_strided_slice %350 {offsets = [0, 0], sizes = [4, 1], strides = [1, 1]} : vector<8x1xf32> to vector<4x1xf32>
    %352 = vector.extract_strided_slice %350 {offsets = [4, 0], sizes = [4, 1], strides = [1, 1]} : vector<8x1xf32> to vector<4x1xf32>
    %353 = arith.addf %351, %352 : vector<4x1xf32>
    %cst_91 = arith.constant 7.812500e-03 : f32
    %354 = vector.broadcast %cst_91 : f32 to vector<4x1xf32>
    %355 = arith.mulf %353, %354 : vector<4x1xf32>
    %356 = tpu.concatenate %355, %355 in 0 : vector<4x1xf32>, vector<4x1xf32> -> vector<8x1xf32>
    %357 = vector.broadcast %356 : vector<8x1xf32> to vector<8x64xf32>
    %358 = arith.subf %348, %357 : vector<8x64xf32>
    %359 = arith.mulf %358, %358 : vector<8x64xf32>
    %cst_92 = arith.constant dense<0.000000e+00> : vector<8xf32>
    %360 = vector.multi_reduction <add>, %359, %cst_92 [1] : vector<8x64xf32> to vector<8xf32>
    %361 = vector.shape_cast %360 : vector<8xf32> to vector<8x1xf32>
    %362 = vector.extract_strided_slice %361 {offsets = [0, 0], sizes = [4, 1], strides = [1, 1]} : vector<8x1xf32> to vector<4x1xf32>
    %363 = vector.extract_strided_slice %361 {offsets = [4, 0], sizes = [4, 1], strides = [1, 1]} : vector<8x1xf32> to vector<4x1xf32>
    %364 = arith.addf %362, %363 : vector<4x1xf32>
    %cst_93 = arith.constant 7.812500e-03 : f32
    %365 = vector.broadcast %cst_93 : f32 to vector<4x1xf32>
    %366 = arith.mulf %364, %365 : vector<4x1xf32>
    %cst_94 = arith.constant 9.99999974E-6 : f32
    %367 = vector.broadcast %cst_94 : f32 to vector<4x1xf32>
    %368 = arith.addf %366, %367 : vector<4x1xf32>
    %369 = math.rsqrt %368 : vector<4x1xf32>
    %370 = tpu.concatenate %369, %369 in 0 : vector<4x1xf32>, vector<4x1xf32> -> vector<8x1xf32>
    %371 = vector.broadcast %370 : vector<8x1xf32> to vector<8x64xf32>
    %372 = arith.mulf %358, %371 : vector<8x64xf32>
    %cst_95 = arith.constant 0.707106769 : f32
    %373 = vector.broadcast %cst_95 : f32 to vector<8x64xf32>
    %374 = arith.mulf %372, %373 : vector<8x64xf32>
    %cst_96 = arith.constant 0.000000e+00 : f32
    %375 = vector.broadcast %cst_96 : f32 to vector<8x64xf32>
    %376 = arith.cmpf oge, %374, %375 : vector<8x64xf32>
    %cst_97 = arith.constant 1.000000e+00 : f32
    %cst_98 = arith.constant -1.000000e+00 : f32
    %377 = vector.broadcast %cst_97 : f32 to vector<8x64xf32>
    %378 = vector.broadcast %cst_98 : f32 to vector<8x64xf32>
    %379 = arith.select %376, %377, %378 : vector<8x64xi1>, vector<8x64xf32>
    %380 = math.absf %374 : vector<8x64xf32>
    %cst_99 = arith.constant 0.327591091 : f32
    %381 = vector.broadcast %cst_99 : f32 to vector<8x64xf32>
    %382 = arith.mulf %381, %380 : vector<8x64xf32>
    %cst_100 = arith.constant 1.000000e+00 : f32
    %383 = vector.broadcast %cst_100 : f32 to vector<8x64xf32>
    %384 = arith.addf %383, %382 : vector<8x64xf32>
    %385 = tpu.reciprocal %384 {approx = true} : vector<8x64xf32> -> vector<8x64xf32>
    %cst_101 = arith.constant 1.06140542 : f32
    %386 = vector.broadcast %cst_101 : f32 to vector<8x64xf32>
    %387 = arith.mulf %386, %385 : vector<8x64xf32>
    %cst_102 = arith.constant -1.45315206 : f32
    %388 = vector.broadcast %cst_102 : f32 to vector<8x64xf32>
    %389 = arith.addf %387, %388 : vector<8x64xf32>
    %390 = arith.mulf %389, %385 : vector<8x64xf32>
    %cst_103 = arith.constant 1.42141378 : f32
    %391 = vector.broadcast %cst_103 : f32 to vector<8x64xf32>
    %392 = arith.addf %390, %391 : vector<8x64xf32>
    %393 = arith.mulf %392, %385 : vector<8x64xf32>
    %cst_104 = arith.constant -0.284496725 : f32
    %394 = vector.broadcast %cst_104 : f32 to vector<8x64xf32>
    %395 = arith.addf %393, %394 : vector<8x64xf32>
    %396 = arith.mulf %395, %385 : vector<8x64xf32>
    %cst_105 = arith.constant 0.254829586 : f32
    %397 = vector.broadcast %cst_105 : f32 to vector<8x64xf32>
    %398 = arith.addf %396, %397 : vector<8x64xf32>
    %399 = arith.mulf %398, %385 : vector<8x64xf32>
    %cst_106 = arith.constant 0.000000e+00 : f32
    %400 = vector.broadcast %cst_106 : f32 to vector<8x64xf32>
    %401 = arith.subf %400, %380 : vector<8x64xf32>
    %402 = arith.mulf %401, %380 : vector<8x64xf32>
    %403 = math.exp %402 : vector<8x64xf32>
    %404 = arith.mulf %399, %403 : vector<8x64xf32>
    %cst_107 = arith.constant 1.000000e+00 : f32
    %405 = vector.broadcast %cst_107 : f32 to vector<8x64xf32>
    %406 = arith.subf %405, %404 : vector<8x64xf32>
    %407 = arith.mulf %379, %406 : vector<8x64xf32>
    %cst_108 = arith.constant 5.000000e-01 : f32
    %408 = vector.broadcast %cst_108 : f32 to vector<8x64xf32>
    %409 = arith.mulf %408, %372 : vector<8x64xf32>
    %cst_109 = arith.constant 1.000000e+00 : f32
    %410 = vector.broadcast %cst_109 : f32 to vector<8x64xf32>
    %411 = arith.addf %410, %407 : vector<8x64xf32>
    %412 = arith.mulf %409, %411 : vector<8x64xf32>
    %c0_110 = arith.constant 0 : index
    %c0_111 = arith.constant 0 : index
    %c0_112 = arith.constant 0 : index
    %413 = vector.load %arg4[%c0_110, %c0_111, %c0_112] : memref<3x8x8xf32, #tpu.memory_space<vmem>>, vector<1x8x8xf32>
    %414 = vector.shape_cast %413 : vector<1x8x8xf32> to vector<8x8xf32>
    %cst_113 = arith.constant dense<0.000000e+00> : vector<8x64xf32>
    %415 = tpu.matmul %414, %412, %cst_113 {dimension_numbers = #tpu.dot_dimension_numbers<[1], [0], [0], [1], [0, 0, 1, 1], [], []>} : vector<8x8xf32>, vector<8x64xf32>, vector<8x64xf32> -> vector<8x64xf32>
    %c0_114 = arith.constant 0 : index
    %c0_115 = arith.constant 0 : index
    %c0_116 = arith.constant 0 : index
    %416 = vector.load %arg5[%c0_114, %c0_115, %c0_116] : memref<3x64x64xf32, #tpu.memory_space<vmem>>, vector<1x64x64xf32>
    %417 = vector.shape_cast %416 : vector<1x64x64xf32> to vector<64x64xf32>
    %cst_117 = arith.constant dense<0.000000e+00> : vector<8x64xf32>
    %418 = tpu.matmul %415, %417, %cst_117 {dimension_numbers = #tpu.dot_dimension_numbers<[1], [0], [0], [1], [0, 0, 1, 1], [], []>} : vector<8x64xf32>, vector<64x64xf32>, vector<8x64xf32> -> vector<8x64xf32>
    %c1 = arith.constant 1 : index
    %c0_118 = arith.constant 0 : index
    %c0_119 = arith.constant 0 : index
    %419 = vector.load %arg5[%c1, %c0_118, %c0_119] : memref<3x64x64xf32, #tpu.memory_space<vmem>>, vector<1x64x64xf32>
    %420 = vector.shape_cast %419 : vector<1x64x64xf32> to vector<64x64xf32>
    %cst_120 = arith.constant dense<0.000000e+00> : vector<8x64xf32>
    %421 = tpu.matmul %412, %420, %cst_120 {dimension_numbers = #tpu.dot_dimension_numbers<[1], [0], [0], [1], [0, 0, 1, 1], [], []>} : vector<8x64xf32>, vector<64x64xf32>, vector<8x64xf32> -> vector<8x64xf32>
    %422 = arith.addf %418, %421 : vector<8x64xf32>
    %c2 = arith.constant 2 : index
    %c0_121 = arith.constant 0 : index
    %c0_122 = arith.constant 0 : index
    %423 = vector.load %arg4[%c2, %c0_121, %c0_122] : memref<3x8x8xf32, #tpu.memory_space<vmem>>, vector<1x8x8xf32>
    %424 = vector.shape_cast %423 : vector<1x8x8xf32> to vector<8x8xf32>
    %cst_123 = arith.constant dense<0.000000e+00> : vector<8x64xf32>
    %425 = tpu.matmul %424, %412, %cst_123 {dimension_numbers = #tpu.dot_dimension_numbers<[1], [0], [0], [1], [0, 0, 1, 1], [], []>} : vector<8x8xf32>, vector<8x64xf32>, vector<8x64xf32> -> vector<8x64xf32>
    %c2_124 = arith.constant 2 : index
    %c0_125 = arith.constant 0 : index
    %c0_126 = arith.constant 0 : index
    %426 = vector.load %arg5[%c2_124, %c0_125, %c0_126] : memref<3x64x64xf32, #tpu.memory_space<vmem>>, vector<1x64x64xf32>
    %427 = vector.shape_cast %426 : vector<1x64x64xf32> to vector<64x64xf32>
    %cst_127 = arith.constant dense<0.000000e+00> : vector<8x64xf32>
    %428 = tpu.matmul %425, %427, %cst_127 {dimension_numbers = #tpu.dot_dimension_numbers<[1], [0], [0], [1], [0, 0, 1, 1], [], []>} : vector<8x64xf32>, vector<64x64xf32>, vector<8x64xf32> -> vector<8x64xf32>
    %429 = arith.addf %422, %428 : vector<8x64xf32>
    %cst_128 = arith.constant dense<0.000000e+00> : vector<8x64xf32>
    %430 = tpu.matmul %429, %1, %cst_128 {dimension_numbers = #tpu.dot_dimension_numbers<[1], [0], [0], [1], [0, 0, 1, 1], [], []>} : vector<8x64xf32>, vector<64x64xf32>, vector<8x64xf32> -> vector<8x64xf32>
    %cst_129 = arith.constant dense<0.000000e+00> : vector<64xf32>
    %431 = vector.multi_reduction <add>, %430, %cst_129 [0] : vector<8x64xf32> to vector<64xf32>
    %432 = vector.shape_cast %431 : vector<64xf32> to vector<1x64xf32>
    %cst_130 = arith.constant 7.812500e-03 : f32
    %433 = vector.broadcast %cst_130 : f32 to vector<1x64xf32>
    %434 = arith.mulf %432, %433 : vector<1x64xf32>
    %435 = vector.broadcast %434 : vector<1x64xf32> to vector<8x64xf32>
    %436 = arith.subf %429, %435 : vector<8x64xf32>
    %437 = arith.mulf %436, %436 : vector<8x64xf32>
    %cst_131 = arith.constant dense<0.000000e+00> : vector<8x64xf32>
    %438 = tpu.matmul %437, %1, %cst_131 {dimension_numbers = #tpu.dot_dimension_numbers<[1], [0], [0], [1], [0, 0, 1, 1], [], []>} : vector<8x64xf32>, vector<64x64xf32>, vector<8x64xf32> -> vector<8x64xf32>
    %cst_132 = arith.constant dense<0.000000e+00> : vector<64xf32>
    %439 = vector.multi_reduction <add>, %438, %cst_132 [0] : vector<8x64xf32> to vector<64xf32>
    %440 = vector.shape_cast %439 : vector<64xf32> to vector<1x64xf32>
    %cst_133 = arith.constant 7.812500e-03 : f32
    %441 = vector.broadcast %cst_133 : f32 to vector<1x64xf32>
    %442 = arith.mulf %440, %441 : vector<1x64xf32>
    %cst_134 = arith.constant 9.99999974E-6 : f32
    %443 = vector.broadcast %cst_134 : f32 to vector<1x64xf32>
    %444 = arith.addf %442, %443 : vector<1x64xf32>
    %445 = math.rsqrt %444 : vector<1x64xf32>
    %446 = vector.broadcast %445 : vector<1x64xf32> to vector<8x64xf32>
    %447 = arith.mulf %436, %446 : vector<8x64xf32>
    %cst_135 = arith.constant 0.707106769 : f32
    %448 = vector.broadcast %cst_135 : f32 to vector<8x64xf32>
    %449 = arith.mulf %447, %448 : vector<8x64xf32>
    %cst_136 = arith.constant 0.000000e+00 : f32
    %450 = vector.broadcast %cst_136 : f32 to vector<8x64xf32>
    %451 = arith.cmpf oge, %449, %450 : vector<8x64xf32>
    %cst_137 = arith.constant 1.000000e+00 : f32
    %cst_138 = arith.constant -1.000000e+00 : f32
    %452 = vector.broadcast %cst_137 : f32 to vector<8x64xf32>
    %453 = vector.broadcast %cst_138 : f32 to vector<8x64xf32>
    %454 = arith.select %451, %452, %453 : vector<8x64xi1>, vector<8x64xf32>
    %455 = math.absf %449 : vector<8x64xf32>
    %cst_139 = arith.constant 0.327591091 : f32
    %456 = vector.broadcast %cst_139 : f32 to vector<8x64xf32>
    %457 = arith.mulf %456, %455 : vector<8x64xf32>
    %cst_140 = arith.constant 1.000000e+00 : f32
    %458 = vector.broadcast %cst_140 : f32 to vector<8x64xf32>
    %459 = arith.addf %458, %457 : vector<8x64xf32>
    %460 = tpu.reciprocal %459 {approx = true} : vector<8x64xf32> -> vector<8x64xf32>
    %cst_141 = arith.constant 1.06140542 : f32
    %461 = vector.broadcast %cst_141 : f32 to vector<8x64xf32>
    %462 = arith.mulf %461, %460 : vector<8x64xf32>
    %cst_142 = arith.constant -1.45315206 : f32
    %463 = vector.broadcast %cst_142 : f32 to vector<8x64xf32>
    %464 = arith.addf %462, %463 : vector<8x64xf32>
    %465 = arith.mulf %464, %460 : vector<8x64xf32>
    %cst_143 = arith.constant 1.42141378 : f32
    %466 = vector.broadcast %cst_143 : f32 to vector<8x64xf32>
    %467 = arith.addf %465, %466 : vector<8x64xf32>
    %468 = arith.mulf %467, %460 : vector<8x64xf32>
    %cst_144 = arith.constant -0.284496725 : f32
    %469 = vector.broadcast %cst_144 : f32 to vector<8x64xf32>
    %470 = arith.addf %468, %469 : vector<8x64xf32>
    %471 = arith.mulf %470, %460 : vector<8x64xf32>
    %cst_145 = arith.constant 0.254829586 : f32
    %472 = vector.broadcast %cst_145 : f32 to vector<8x64xf32>
    %473 = arith.addf %471, %472 : vector<8x64xf32>
    %474 = arith.mulf %473, %460 : vector<8x64xf32>
    %cst_146 = arith.constant 0.000000e+00 : f32
    %475 = vector.broadcast %cst_146 : f32 to vector<8x64xf32>
    %476 = arith.subf %475, %455 : vector<8x64xf32>
    %477 = arith.mulf %476, %455 : vector<8x64xf32>
    %478 = math.exp %477 : vector<8x64xf32>
    %479 = arith.mulf %474, %478 : vector<8x64xf32>
    %cst_147 = arith.constant 1.000000e+00 : f32
    %480 = vector.broadcast %cst_147 : f32 to vector<8x64xf32>
    %481 = arith.subf %480, %479 : vector<8x64xf32>
    %482 = arith.mulf %454, %481 : vector<8x64xf32>
    %cst_148 = arith.constant 5.000000e-01 : f32
    %483 = vector.broadcast %cst_148 : f32 to vector<8x64xf32>
    %484 = arith.mulf %483, %447 : vector<8x64xf32>
    %cst_149 = arith.constant 1.000000e+00 : f32
    %485 = vector.broadcast %cst_149 : f32 to vector<8x64xf32>
    %486 = arith.addf %485, %482 : vector<8x64xf32>
    %487 = arith.mulf %484, %486 : vector<8x64xf32>
    %c0_150 = arith.constant 0 : index
    %c0_151 = arith.constant 0 : index
    %488 = vector.load %arg6[%c0_150, %c0_151] : memref<32x8xf32, #tpu.memory_space<vmem>>, vector<32x8xf32>
    %cst_152 = arith.constant dense<0.000000e+00> : vector<32x64xf32>
    %489 = tpu.matmul %488, %487, %cst_152 {dimension_numbers = #tpu.dot_dimension_numbers<[1], [0], [0], [1], [0, 0, 1, 1], [], []>} : vector<32x8xf32>, vector<8x64xf32>, vector<32x64xf32> -> vector<32x64xf32>
    %cst_153 = arith.constant dense<0.000000e+00> : vector<32xf32>
    %490 = vector.multi_reduction <add>, %489, %cst_153 [1] : vector<32x64xf32> to vector<32xf32>
    %491 = vector.shape_cast %490 : vector<32xf32> to vector<32x1xf32>
    %492 = vector.extract_strided_slice %491 {offsets = [0, 0], sizes = [16, 1], strides = [1, 1]} : vector<32x1xf32> to vector<16x1xf32>
    %493 = vector.extract_strided_slice %491 {offsets = [16, 0], sizes = [16, 1], strides = [1, 1]} : vector<32x1xf32> to vector<16x1xf32>
    %494 = arith.addf %492, %493 : vector<16x1xf32>
    %cst_154 = arith.constant 7.812500e-03 : f32
    %495 = vector.broadcast %cst_154 : f32 to vector<16x1xf32>
    %496 = arith.mulf %494, %495 : vector<16x1xf32>
    %497 = tpu.concatenate %496, %496 in 0 : vector<16x1xf32>, vector<16x1xf32> -> vector<32x1xf32>
    %498 = vector.broadcast %497 : vector<32x1xf32> to vector<32x64xf32>
    %499 = arith.subf %489, %498 : vector<32x64xf32>
    %500 = arith.mulf %499, %499 : vector<32x64xf32>
    %cst_155 = arith.constant dense<0.000000e+00> : vector<32xf32>
    %501 = vector.multi_reduction <add>, %500, %cst_155 [1] : vector<32x64xf32> to vector<32xf32>
    %502 = vector.shape_cast %501 : vector<32xf32> to vector<32x1xf32>
    %503 = vector.extract_strided_slice %502 {offsets = [0, 0], sizes = [16, 1], strides = [1, 1]} : vector<32x1xf32> to vector<16x1xf32>
    %504 = vector.extract_strided_slice %502 {offsets = [16, 0], sizes = [16, 1], strides = [1, 1]} : vector<32x1xf32> to vector<16x1xf32>
    %505 = arith.addf %503, %504 : vector<16x1xf32>
    %cst_156 = arith.constant 7.812500e-03 : f32
    %506 = vector.broadcast %cst_156 : f32 to vector<16x1xf32>
    %507 = arith.mulf %505, %506 : vector<16x1xf32>
    %cst_157 = arith.constant 9.99999974E-6 : f32
    %508 = vector.broadcast %cst_157 : f32 to vector<16x1xf32>
    %509 = arith.addf %507, %508 : vector<16x1xf32>
    %510 = math.rsqrt %509 : vector<16x1xf32>
    %511 = tpu.concatenate %510, %510 in 0 : vector<16x1xf32>, vector<16x1xf32> -> vector<32x1xf32>
    %512 = vector.broadcast %511 : vector<32x1xf32> to vector<32x64xf32>
    %513 = arith.mulf %499, %512 : vector<32x64xf32>
    %cst_158 = arith.constant 0.707106769 : f32
    %514 = vector.broadcast %cst_158 : f32 to vector<32x64xf32>
    %515 = arith.mulf %513, %514 : vector<32x64xf32>
    %cst_159 = arith.constant 0.000000e+00 : f32
    %516 = vector.broadcast %cst_159 : f32 to vector<32x64xf32>
    %517 = arith.cmpf oge, %515, %516 : vector<32x64xf32>
    %cst_160 = arith.constant 1.000000e+00 : f32
    %cst_161 = arith.constant -1.000000e+00 : f32
    %518 = vector.broadcast %cst_160 : f32 to vector<32x64xf32>
    %519 = vector.broadcast %cst_161 : f32 to vector<32x64xf32>
    %520 = arith.select %517, %518, %519 : vector<32x64xi1>, vector<32x64xf32>
    %521 = math.absf %515 : vector<32x64xf32>
    %cst_162 = arith.constant 0.327591091 : f32
    %522 = vector.broadcast %cst_162 : f32 to vector<32x64xf32>
    %523 = arith.mulf %522, %521 : vector<32x64xf32>
    %cst_163 = arith.constant 1.000000e+00 : f32
    %524 = vector.broadcast %cst_163 : f32 to vector<32x64xf32>
    %525 = arith.addf %524, %523 : vector<32x64xf32>
    %526 = tpu.reciprocal %525 {approx = true} : vector<32x64xf32> -> vector<32x64xf32>
    %cst_164 = arith.constant 1.06140542 : f32
    %527 = vector.broadcast %cst_164 : f32 to vector<32x64xf32>
    %528 = arith.mulf %527, %526 : vector<32x64xf32>
    %cst_165 = arith.constant -1.45315206 : f32
    %529 = vector.broadcast %cst_165 : f32 to vector<32x64xf32>
    %530 = arith.addf %528, %529 : vector<32x64xf32>
    %531 = arith.mulf %530, %526 : vector<32x64xf32>
    %cst_166 = arith.constant 1.42141378 : f32
    %532 = vector.broadcast %cst_166 : f32 to vector<32x64xf32>
    %533 = arith.addf %531, %532 : vector<32x64xf32>
    %534 = arith.mulf %533, %526 : vector<32x64xf32>
    %cst_167 = arith.constant -0.284496725 : f32
    %535 = vector.broadcast %cst_167 : f32 to vector<32x64xf32>
    %536 = arith.addf %534, %535 : vector<32x64xf32>
    %537 = arith.mulf %536, %526 : vector<32x64xf32>
    %cst_168 = arith.constant 0.254829586 : f32
    %538 = vector.broadcast %cst_168 : f32 to vector<32x64xf32>
    %539 = arith.addf %537, %538 : vector<32x64xf32>
    %540 = arith.mulf %539, %526 : vector<32x64xf32>
    %cst_169 = arith.constant 0.000000e+00 : f32
    %541 = vector.broadcast %cst_169 : f32 to vector<32x64xf32>
    %542 = arith.subf %541, %521 : vector<32x64xf32>
    %543 = arith.mulf %542, %521 : vector<32x64xf32>
    %544 = math.exp %543 : vector<32x64xf32>
    %545 = arith.mulf %540, %544 : vector<32x64xf32>
    %cst_170 = arith.constant 1.000000e+00 : f32
    %546 = vector.broadcast %cst_170 : f32 to vector<32x64xf32>
    %547 = arith.subf %546, %545 : vector<32x64xf32>
    %548 = arith.mulf %520, %547 : vector<32x64xf32>
    %cst_171 = arith.constant 5.000000e-01 : f32
    %549 = vector.broadcast %cst_171 : f32 to vector<32x64xf32>
    %550 = arith.mulf %549, %513 : vector<32x64xf32>
    %cst_172 = arith.constant 1.000000e+00 : f32
    %551 = vector.broadcast %cst_172 : f32 to vector<32x64xf32>
    %552 = arith.addf %551, %548 : vector<32x64xf32>
    %553 = arith.mulf %550, %552 : vector<32x64xf32>
    %c0_173 = arith.constant 0 : index
    %c0_174 = arith.constant 0 : index
    %554 = vector.load %arg7[%c0_173, %c0_174] : memref<8x32xf32, #tpu.memory_space<vmem>>, vector<8x32xf32>
    %cst_175 = arith.constant dense<0.000000e+00> : vector<8x64xf32>
    %555 = tpu.matmul %554, %553, %cst_175 {dimension_numbers = #tpu.dot_dimension_numbers<[1], [0], [0], [1], [0, 0, 1, 1], [], []>} : vector<8x32xf32>, vector<32x64xf32>, vector<8x64xf32> -> vector<8x64xf32>
    %cst_176 = arith.constant dense<0.000000e+00> : vector<8xf32>
    %556 = vector.multi_reduction <add>, %555, %cst_176 [1] : vector<8x64xf32> to vector<8xf32>
    %557 = vector.shape_cast %556 : vector<8xf32> to vector<8x1xf32>
    %558 = vector.extract_strided_slice %557 {offsets = [0, 0], sizes = [4, 1], strides = [1, 1]} : vector<8x1xf32> to vector<4x1xf32>
    %559 = vector.extract_strided_slice %557 {offsets = [4, 0], sizes = [4, 1], strides = [1, 1]} : vector<8x1xf32> to vector<4x1xf32>
    %560 = arith.addf %558, %559 : vector<4x1xf32>
    %cst_177 = arith.constant 7.812500e-03 : f32
    %561 = vector.broadcast %cst_177 : f32 to vector<4x1xf32>
    %562 = arith.mulf %560, %561 : vector<4x1xf32>
    %563 = tpu.concatenate %562, %562 in 0 : vector<4x1xf32>, vector<4x1xf32> -> vector<8x1xf32>
    %564 = vector.broadcast %563 : vector<8x1xf32> to vector<8x64xf32>
    %565 = arith.subf %555, %564 : vector<8x64xf32>
    %566 = arith.mulf %565, %565 : vector<8x64xf32>
    %cst_178 = arith.constant dense<0.000000e+00> : vector<8xf32>
    %567 = vector.multi_reduction <add>, %566, %cst_178 [1] : vector<8x64xf32> to vector<8xf32>
    %568 = vector.shape_cast %567 : vector<8xf32> to vector<8x1xf32>
    %569 = vector.extract_strided_slice %568 {offsets = [0, 0], sizes = [4, 1], strides = [1, 1]} : vector<8x1xf32> to vector<4x1xf32>
    %570 = vector.extract_strided_slice %568 {offsets = [4, 0], sizes = [4, 1], strides = [1, 1]} : vector<8x1xf32> to vector<4x1xf32>
    %571 = arith.addf %569, %570 : vector<4x1xf32>
    %cst_179 = arith.constant 7.812500e-03 : f32
    %572 = vector.broadcast %cst_179 : f32 to vector<4x1xf32>
    %573 = arith.mulf %571, %572 : vector<4x1xf32>
    %cst_180 = arith.constant 9.99999974E-6 : f32
    %574 = vector.broadcast %cst_180 : f32 to vector<4x1xf32>
    %575 = arith.addf %573, %574 : vector<4x1xf32>
    %576 = math.rsqrt %575 : vector<4x1xf32>
    %577 = tpu.concatenate %576, %576 in 0 : vector<4x1xf32>, vector<4x1xf32> -> vector<8x1xf32>
    %578 = vector.broadcast %577 : vector<8x1xf32> to vector<8x64xf32>
    %579 = arith.mulf %565, %578 : vector<8x64xf32>
    %c0_181 = arith.constant 0 : index
    %c0_182 = arith.constant 0 : index
    %c0_183 = arith.constant 0 : index
    %580 = vector.load %arg8[%c0_181, %c0_182, %c0_183] : memref<3x6x6xf32, #tpu.memory_space<vmem>>, vector<1x6x6xf32>
    %581 = vector.shape_cast %580 : vector<1x6x6xf32> to vector<6x6xf32>
    %cst_184 = arith.constant dense<0.000000e+00> : vector<6x64xf32>
    %582 = tpu.matmul %581, %0, %cst_184 {dimension_numbers = #tpu.dot_dimension_numbers<[1], [0], [0], [1], [0, 0, 1, 1], [], []>} : vector<6x6xf32>, vector<6x64xf32>, vector<6x64xf32> -> vector<6x64xf32>
    %c0_185 = arith.constant 0 : index
    %c0_186 = arith.constant 0 : index
    %c0_187 = arith.constant 0 : index
    %583 = vector.load %arg9[%c0_185, %c0_186, %c0_187] : memref<3x64x64xf32, #tpu.memory_space<vmem>>, vector<1x64x64xf32>
    %584 = vector.shape_cast %583 : vector<1x64x64xf32> to vector<64x64xf32>
    %cst_188 = arith.constant dense<0.000000e+00> : vector<6x64xf32>
    %585 = tpu.matmul %582, %584, %cst_188 {dimension_numbers = #tpu.dot_dimension_numbers<[1], [0], [0], [1], [0, 0, 1, 1], [], []>} : vector<6x64xf32>, vector<64x64xf32>, vector<6x64xf32> -> vector<6x64xf32>
    %c1_189 = arith.constant 1 : index
    %c0_190 = arith.constant 0 : index
    %c0_191 = arith.constant 0 : index
    %586 = vector.load %arg9[%c1_189, %c0_190, %c0_191] : memref<3x64x64xf32, #tpu.memory_space<vmem>>, vector<1x64x64xf32>
    %587 = vector.shape_cast %586 : vector<1x64x64xf32> to vector<64x64xf32>
    %cst_192 = arith.constant dense<0.000000e+00> : vector<6x64xf32>
    %588 = tpu.matmul %0, %587, %cst_192 {dimension_numbers = #tpu.dot_dimension_numbers<[1], [0], [0], [1], [0, 0, 1, 1], [], []>} : vector<6x64xf32>, vector<64x64xf32>, vector<6x64xf32> -> vector<6x64xf32>
    %589 = arith.addf %585, %588 : vector<6x64xf32>
    %c2_193 = arith.constant 2 : index
    %c0_194 = arith.constant 0 : index
    %c0_195 = arith.constant 0 : index
    %590 = vector.load %arg8[%c2_193, %c0_194, %c0_195] : memref<3x6x6xf32, #tpu.memory_space<vmem>>, vector<1x6x6xf32>
    %591 = vector.shape_cast %590 : vector<1x6x6xf32> to vector<6x6xf32>
    %cst_196 = arith.constant dense<0.000000e+00> : vector<6x64xf32>
    %592 = tpu.matmul %591, %0, %cst_196 {dimension_numbers = #tpu.dot_dimension_numbers<[1], [0], [0], [1], [0, 0, 1, 1], [], []>} : vector<6x6xf32>, vector<6x64xf32>, vector<6x64xf32> -> vector<6x64xf32>
    %c2_197 = arith.constant 2 : index
    %c0_198 = arith.constant 0 : index
    %c0_199 = arith.constant 0 : index
    %593 = vector.load %arg9[%c2_197, %c0_198, %c0_199] : memref<3x64x64xf32, #tpu.memory_space<vmem>>, vector<1x64x64xf32>
    %594 = vector.shape_cast %593 : vector<1x64x64xf32> to vector<64x64xf32>
    %cst_200 = arith.constant dense<0.000000e+00> : vector<6x64xf32>
    %595 = tpu.matmul %592, %594, %cst_200 {dimension_numbers = #tpu.dot_dimension_numbers<[1], [0], [0], [1], [0, 0, 1, 1], [], []>} : vector<6x64xf32>, vector<64x64xf32>, vector<6x64xf32> -> vector<6x64xf32>
    %596 = arith.addf %589, %595 : vector<6x64xf32>
    %cst_201 = arith.constant dense<0.000000e+00> : vector<6x64xf32>
    %597 = tpu.matmul %596, %1, %cst_201 {dimension_numbers = #tpu.dot_dimension_numbers<[1], [0], [0], [1], [0, 0, 1, 1], [], []>} : vector<6x64xf32>, vector<64x64xf32>, vector<6x64xf32> -> vector<6x64xf32>
    %cst_202 = arith.constant dense<0.000000e+00> : vector<64xf32>
    %598 = vector.multi_reduction <add>, %597, %cst_202 [0] : vector<6x64xf32> to vector<64xf32>
    %599 = vector.shape_cast %598 : vector<64xf32> to vector<1x64xf32>
    %cst_203 = arith.constant 0.010416667 : f32
    %600 = vector.broadcast %cst_203 : f32 to vector<1x64xf32>
    %601 = arith.mulf %599, %600 : vector<1x64xf32>
    %602 = vector.broadcast %601 : vector<1x64xf32> to vector<6x64xf32>
    %603 = arith.subf %596, %602 : vector<6x64xf32>
    %604 = arith.mulf %603, %603 : vector<6x64xf32>
    %cst_204 = arith.constant dense<0.000000e+00> : vector<6x64xf32>
    %605 = tpu.matmul %604, %1, %cst_204 {dimension_numbers = #tpu.dot_dimension_numbers<[1], [0], [0], [1], [0, 0, 1, 1], [], []>} : vector<6x64xf32>, vector<64x64xf32>, vector<6x64xf32> -> vector<6x64xf32>
    %cst_205 = arith.constant dense<0.000000e+00> : vector<64xf32>
    %606 = vector.multi_reduction <add>, %605, %cst_205 [0] : vector<6x64xf32> to vector<64xf32>
    %607 = vector.shape_cast %606 : vector<64xf32> to vector<1x64xf32>
    %cst_206 = arith.constant 0.010416667 : f32
    %608 = vector.broadcast %cst_206 : f32 to vector<1x64xf32>
    %609 = arith.mulf %607, %608 : vector<1x64xf32>
    %cst_207 = arith.constant 9.99999974E-6 : f32
    %610 = vector.broadcast %cst_207 : f32 to vector<1x64xf32>
    %611 = arith.addf %609, %610 : vector<1x64xf32>
    %612 = math.rsqrt %611 : vector<1x64xf32>
    %613 = vector.broadcast %612 : vector<1x64xf32> to vector<6x64xf32>
    %614 = arith.mulf %603, %613 : vector<6x64xf32>
    %c0_208 = arith.constant 0 : index
    %c0_209 = arith.constant 0 : index
    %615 = vector.load %arg11[%c0_208, %c0_209] : memref<8x6xf32, #tpu.memory_space<vmem>>, vector<8x6xf32>
    %cst_210 = arith.constant dense<0.000000e+00> : vector<8x64xf32>
    %616 = tpu.matmul %615, %614, %cst_210 {dimension_numbers = #tpu.dot_dimension_numbers<[1], [0], [0], [1], [0, 0, 1, 1], [], []>} : vector<8x6xf32>, vector<6x64xf32>, vector<8x64xf32> -> vector<8x64xf32>
    %617 = arith.addf %579, %616 : vector<8x64xf32>
    %cst_211 = arith.constant 0.000000e+00 : f32
    %618 = vector.broadcast %cst_211 : f32 to vector<8x48xf32>
    %619 = tpu.concatenate %617, %181, %618 in 1 : vector<8x64xf32>, vector<8x16xf32>, vector<8x48xf32> -> vector<8x128xf32>
    %c0_212 = arith.constant 0 : index
    %c0_213 = arith.constant 0 : index
    %620 = vector.load %arg12[%c0_212, %c0_213] : memref<8x128xf32, #tpu.memory_space<vmem>>, vector<8x128xf32>
    tpu.vector_store %arg12[%c0_212, %c0_213], %619 {strides = array<i32>} : memref<8x128xf32, #tpu.memory_space<vmem>>, vector<8x128xf32>,
    return
  }
}

</mosaic_0001>

<llo_original>
// kernel: block_forward.1
$region0: #{block_forward.1}
  #allocation0 [shape = 'u32[]', space=smem, size = 0x4, offset = 0x4, fixed_abs, tag = 'smem constant byte address 0x4 - core index']
  #allocation1 [shape = 'u32[144,128]{1,0:T(1,128)}', space=vmem, size = 0x12000, scoped, tag = 'internal scratch']
  %s0 = inlined_call_operand.vmem [shape: f32[6,64], index: 0, kind: input, shape index: {}]
  %s1 = inlined_call_operand.vmem [shape: f32[8,6], index: 1, kind: input, shape index: {}]
  %s2 = inlined_call_operand.vmem [shape: f32[16,8], index: 2, kind: input, shape index: {}]
  %s3 = inlined_call_operand.vmem [shape: f32[8,16], index: 3, kind: input, shape index: {}]
  %s4 = inlined_call_operand.vmem [shape: f32[3,8,8], index: 4, kind: input, shape index: {}]
  %s5 = inlined_call_operand.vmem [shape: f32[3,64,64], index: 5, kind: input, shape index: {}]
  %s6 = inlined_call_operand.vmem [shape: f32[32,8], index: 6, kind: input, shape index: {}]
  %s7 = inlined_call_operand.vmem [shape: f32[8,32], index: 7, kind: input, shape index: {}]
  %s8 = inlined_call_operand.vmem [shape: f32[3,6,6], index: 8, kind: input, shape index: {}]
  %s9 = inlined_call_operand.vmem [shape: f32[3,64,64], index: 9, kind: input, shape index: {}]
  %s10 = inlined_call_operand.vmem [shape: f32[64,64], index: 10, kind: input, shape index: {}]
  %s11 = inlined_call_operand.vmem [shape: f32[8,6], index: 11, kind: input, shape index: {}]
  %s12 = inlined_call_operand.vmem [shape: f32[8,128], index: 12, kind: output, shape index: {}]
  %s13 = sld [smem:[#allocation0]]
  $region58: #{block_forward.1} parent=0
    _
  %s15 = ssub.s32 1, %s13
  %s16 = scalar_select 0, %s15, %s13
  // Predicated region
  $region2: #{block_forward.1} parent=0 // pred_check
    _
  $region3: #{block_forward.1} parent=0 // pred_check_branch
    %18 = sbr.rel (0) target = $region5
  $region4: #{block_forward.1} parent=0 // pred_region
    _
  $region5: #{block_forward.1} parent=0 // pred_fallthru
    _
  // Predicated region
  $region6: #{block_forward.1} parent=0 // pred_check
    _
  $region7: #{block_forward.1} parent=0 // pred_check_branch
    %20 = sbr.rel (0) target = $region9
  $region8: #{block_forward.1} parent=0 // pred_region
    _
  $region9: #{block_forward.1} parent=0 // pred_fallthru
    _
  // Predicated region
  $region10: #{block_forward.1} parent=0 // pred_check
    _
  $region11: #{block_forward.1} parent=0 // pred_check_branch
    %22 = sbr.rel (0) target = $region13
  $region12: #{block_forward.1} parent=0 // pred_region
    _
  $region13: #{block_forward.1} parent=0 // pred_fallthru
    _
  // Predicated region
  $region14: #{block_forward.1} parent=0 // pred_check
    _
  $region15: #{block_forward.1} parent=0 // pred_check_branch
    %24 = sbr.rel (0) target = $region17
  $region16: #{block_forward.1} parent=0 // pred_region
    _
  $region17: #{block_forward.1} parent=0 // pred_fallthru
    _
  // Predicated region
  $region18: #{block_forward.1} parent=0 // pred_check
    _
  $region19: #{block_forward.1} parent=0 // pred_check_branch
    %26 = sbr.rel (0) target = $region21
  $region20: #{block_forward.1} parent=0 // pred_region
    _
  $region21: #{block_forward.1} parent=0 // pred_fallthru
    _
  // Predicated region
  $region22: #{block_forward.1} parent=0 // pred_check
    _
  $region23: #{block_forward.1} parent=0 // pred_check_branch
    %28 = sbr.rel (0) target = $region25
  $region24: #{block_forward.1} parent=0 // pred_region
    _
  $region25: #{block_forward.1} parent=0 // pred_fallthru
    _
  // Predicated region
  $region26: #{block_forward.1} parent=0 // pred_check
    _
  $region27: #{block_forward.1} parent=0 // pred_check_branch
    %30 = sbr.rel (0) target = $region29
  $region28: #{block_forward.1} parent=0 // pred_region
    _
  $region29: #{block_forward.1} parent=0 // pred_fallthru
    _
  // Predicated region
  $region30: #{block_forward.1} parent=0 // pred_check
    _
  $region31: #{block_forward.1} parent=0 // pred_check_branch
    %32 = sbr.rel (0) target = $region33
  $region32: #{block_forward.1} parent=0 // pred_region
    _
  $region33: #{block_forward.1} parent=0 // pred_fallthru
    _
  // Predicated region
  $region34: #{block_forward.1} parent=0 // pred_check
    _
  $region35: #{block_forward.1} parent=0 // pred_check_branch
    %34 = sbr.rel (0) target = $region37
  $region36: #{block_forward.1} parent=0 // pred_region
    _
  $region37: #{block_forward.1} parent=0 // pred_fallthru
    _
  // Predicated region
  $region38: #{block_forward.1} parent=0 // pred_check
    _
  $region39: #{block_forward.1} parent=0 // pred_check_branch
    %36 = sbr.rel (0) target = $region41
  $region40: #{block_forward.1} parent=0 // pred_region
    _
  $region41: #{block_forward.1} parent=0 // pred_fallthru
    _
  // Predicated region
  $region42: #{block_forward.1} parent=0 // pred_check
    _
  $region43: #{block_forward.1} parent=0 // pred_check_branch
    %38 = sbr.rel (0) target = $region45
  $region44: #{block_forward.1} parent=0 // pred_region
    _
  $region45: #{block_forward.1} parent=0 // pred_fallthru
    _
  // Predicated region
  $region46: #{block_forward.1} parent=0 // pred_check
    _
  $region47: #{block_forward.1} parent=0 // pred_check_branch
    %40 = sbr.rel (0) target = $region49
  $region48: #{block_forward.1} parent=0 // pred_region
    _
  $region49: #{block_forward.1} parent=0 // pred_fallthru
    _
  %v41 = vld [vmem:[%s0] sm:$0x3f]
  %v42 = vld [vmem:[%s10] sm:$0xff]
  %v43 = vld [vmem:[%s10 + $0x8] sm:$0xff]
  %v44 = vld [vmem:[%s10 + $0x10] sm:$0xff]
  %v45 = vld [vmem:[%s10 + $0x18] sm:$0xff]
  %v46 = vld [vmem:[%s10 + $0x20] sm:$0xff]
  %v47 = vld [vmem:[%s10 + $0x28] sm:$0xff]
  %v48 = vld [vmem:[%s10 + $0x30] sm:$0xff]
  %v49 = vld [vmem:[%s10 + $0x38] sm:$0xff]
  %v50 = vld [vmem:[%s1] sm:$0xff]
  %vm51 = vcmask 48128
  %v53 = vsel %vm51, %v50, 0
  %vm55 = vcmask 1045504
  %v57 = vsel %vm55, %v41, 0
  %59 = vmatprep.subr.mxu0 0.0
  %60 = vmatpush1.msra.mxu0 0.0
  %61 = vmatprep.subr.mxu0 0.0
  %62 = vmatpush1.msra.mxu0 0.0
  %63 = vmatprep.subr.mxu0 0.0
  %64 = vmatpush1.msra.mxu0 0.0
  %65 = vmatprep.subr.mxu0 0.0
  %66 = vmatpush1.msra.mxu0 0.0
  %67 = vmatprep.subr.mxu0 0.0
  %68 = vmatpush1.msra.mxu0 0.0
  %69 = vmatprep.subr.mxu0 0.0
  %70 = vmatpush1.msra.mxu0 0.0
  %71 = vmatprep.subr.mxu0 0.0
  %72 = vmatpush1.msra.mxu0 0.0
  %73 = vmatprep.subr.mxu0 0.0
  %74 = vmatpush1.msra.mxu0 0.0
  %75 = vmatprep.subr.mxu0 0.0
  %76 = vmatpush1.msra.mxu0 0.0
  %77 = vmatprep.subr.mxu0 0.0
  %78 = vmatpush1.msra.mxu0 0.0
  %79 = vmatprep.subr.mxu0 0.0
  %80 = vmatpush1.msra.mxu0 0.0
  %81 = vmatprep.subr.mxu0 0.0
  %82 = vmatpush1.msra.mxu0 0.0
  %83 = vmatprep.subr.mxu0 0.0
  %84 = vmatpush1.msra.mxu0 0.0
  %85 = vmatprep.subr.mxu0 0.0
  %86 = vmatpush1.msra.mxu0 0.0
  %87 = vmatprep.subr.mxu0 0.0
  %88 = vmatpush1.msra.mxu0 0.0
  %89 = vmatprep.subr.mxu0 0.0
  %90 = vmatpush1.msra.mxu0 %v57
  %91 = vmatprep.subr.mxu0 0.0
  %92 = vmatpush2.msra.mxu0 0.0
  %93 = vmatprep.subr.mxu0 0.0
  %94 = vmatpush2.msra.mxu0 0.0
  %95 = vmatprep.subr.mxu0 0.0
  %96 = vmatpush2.msra.mxu0 0.0
  %97 = vmatprep.subr.mxu0 0.0
  %98 = vmatpush2.msra.mxu0 0.0
  %99 = vmatprep.subr.mxu0 0.0
  %100 = vmatpush2.msra.mxu0 0.0
  %101 = vmatprep.subr.mxu0 0.0
  %102 = vmatpush2.msra.mxu0 0.0
  %103 = vmatprep.subr.mxu0 0.0
  %104 = vmatpush2.msra.mxu0 0.0
  %105 = vmatprep.subr.mxu0 0.0
  %106 = vmatpush2.msra.mxu0 0.0
  %107 = vmatprep.subr.mxu0 0.0
  %108 = vmatpush2.msra.mxu0 0.0
  %109 = vmatprep.subr.mxu0 0.0
  %110 = vmatpush2.msra.mxu0 0.0
  %111 = vmatprep.subr.mxu0 0.0
  %112 = vmatpush2.msra.mxu0 0.0
  %113 = vmatprep.subr.mxu0 0.0
  %114 = vmatpush2.msra.mxu0 0.0
  %115 = vmatprep.subr.mxu0 0.0
  %116 = vmatpush2.msra.mxu0 0.0
  %117 = vmatprep.subr.mxu0 0.0
  %118 = vmatpush2.msra.mxu0 0.0
  %119 = vmatprep.subr.mxu0 0.0
  %120 = vmatpush2.msra.mxu0 0.0
  %121 = vmatprep.subr.mxu0 0.0
  %122 = vmatpush2.msra.mxu0 0.0
  %123 = vmatprep.mubr.f32.mxu0 0.0
  %124 = vmatmul.mubr.f32.gmra.mxu0 %v53
  %v125 = vpop.f32.mrf.mxu0
  %v126 = vadd.f32 0.0, %v125
  %v127 = vpop.f32.mrf.mxu0
  %128 = vdwg.mxu0
  %vm129 = vcmask 130048
  %v130 = vsel %vm129, %v126, 0.0
  %131 = vadd.xlane.f32.xlu0 %v130
  %v132 = vpop.xlane.xlu0 %131
  %134 = vrot.lane.b32.xlu0 %v126, 112
  %v135 = vpop.permute.xlu0 %134
  %v137 = vsel %vm129, %v135, 0.0
  %138 = vadd.xlane.f32.xlu0 %v137
  %v139 = vpop.xlane.xlu0 %138
  %140 = vrot.lane.b32.xlu0 %v126, 96
  %v141 = vpop.permute.xlu0 %140
  %v143 = vsel %vm129, %v141, 0.0
  %144 = vadd.xlane.f32.xlu0 %v143
  %v145 = vpop.xlane.xlu0 %144
  %146 = vrot.lane.b32.xlu0 %v126, 80
  %v147 = vpop.permute.xlu0 %146
  %v149 = vsel %vm129, %v147, 0.0
  %150 = vadd.xlane.f32.xlu0 %v149
  %v151 = vpop.xlane.xlu0 %150
  %v152 = vmul.f32 %v132, 0.0625
  %v153 = vsub.f32 %v126, %v152
  %v154 = vmul.f32 %v139, 0.0625
  %v155 = vsub.f32 %v126, %v154
  %v156 = vmul.f32 %v145, 0.0625
  %v157 = vsub.f32 %v126, %v156
  %v158 = vmul.f32 %v151, 0.0625
  %v159 = vsub.f32 %v126, %v158
  %v160 = vmul.f32 %v153, %v153
  %v161 = vsel %vm129, %v160, 0.0
  %162 = vadd.xlane.f32.xlu0 %v161
  %v163 = vpop.xlane.xlu0 %162
  %v164 = vrsqrt.pop %v163
  %v165 = vmul.f32 %v155, %v155
  %167 = vrot.lane.b32.xlu0 %v165, 112
  %v168 = vpop.permute.xlu0 %167
  %v170 = vsel %vm129, %v168, 0.0
  %171 = vadd.xlane.f32.xlu0 %v170
  %v172 = vpop.xlane.xlu0 %171
  %v173 = vrsqrt.pop %v172
  %v174 = vmul.f32 %v157, %v157
  %176 = vrot.lane.b32.xlu0 %v174, 96
  %v177 = vpop.permute.xlu0 %176
  %v179 = vsel %vm129, %v177, 0.0
  %180 = vadd.xlane.f32.xlu0 %v179
  %v181 = vpop.xlane.xlu0 %180
  %v182 = vrsqrt.pop %v181
  %v183 = vmul.f32 %v159, %v159
  %185 = vrot.lane.b32.xlu0 %v183, 80
  %v186 = vpop.permute.xlu0 %185
  %v188 = vsel %vm129, %v186, 0.0
  %189 = vadd.xlane.f32.xlu0 %v188
  %v190 = vpop.xlane.xlu0 %189
  %v191 = vrsqrt.pop %v190
  %193 = vrot.lane.b32.xlu0 %v155, 112
  %v194 = vpop.permute.xlu0 %193
  %v196 = vmul.f32 %v153, %v194
  %v197 = vsel %vm129, %v196, 0.0
  %198 = vadd.xlane.f32.xlu0 %v197
  %v199 = vpop.xlane.xlu0 %198
  %v200 = vmul.f32 %v164, %v173
  %v201 = vmul.f32 %v199, %v200
  %vm202 = vcmp.eq.f32.partialorder %v126, %v135
  %v203 = vadd.f32 %v126, %v126
  %205 = vrot.lane.b32.xlu0 %v203, 112
  %v206 = vpop.permute.xlu0 %205
  %v208 = vsel %vm202, %v135, %v206
  %v209 = vsel %vm129, %v208, 0.0
  %210 = vadd.xlane.f32.xlu0 %v209
  %v211 = vpop.xlane.xlu0 %210
  %v212 = vsel %vm202, %v126, %v203
  %v213 = vsel %vm129, %v212, 0.0
  %214 = vadd.xlane.f32.xlu0 %v213
  %v215 = vpop.xlane.xlu0 %214
  %v216 = vadd.f32 %v132, %v211
  %v217 = vmul.f32 %v216, 0.03125
  %v218 = vadd.f32 %v139, %v215
  %v219 = vmul.f32 %v218, 0.03125
  %221 = vrot.lane.b32.xlu0 %v157, 96
  %v222 = vpop.permute.xlu0 %221
  %v224 = vmul.f32 %v153, %v222
  %v225 = vsel %vm129, %v224, 0.0
  %226 = vadd.xlane.f32.xlu0 %v225
  %v227 = vpop.xlane.xlu0 %226
  %v228 = vmul.f32 %v164, %v182
  %v229 = vmul.f32 %v227, %v228
  %vm230 = vcmp.eq.f32.partialorder %v126, %v141
  %231 = vrot.lane.b32.xlu0 %v203, 96
  %v232 = vpop.permute.xlu0 %231
  %v234 = vsel %vm230, %v141, %v232
  %v235 = vsel %vm129, %v234, 0.0
  %236 = vadd.xlane.f32.xlu0 %v235
  %v237 = vpop.xlane.xlu0 %236
  %v238 = vsel %vm230, %v126, %v203
  %v239 = vsel %vm129, %v238, 0.0
  %240 = vadd.xlane.f32.xlu0 %v239
  %v241 = vpop.xlane.xlu0 %240
  %v242 = vadd.f32 %v132, %v237
  %v243 = vmul.f32 %v242, 0.03125
  %v244 = vadd.f32 %v145, %v241
  %v245 = vmul.f32 %v244, 0.03125
  %247 = vrot.lane.b32.xlu0 %v159, 80
  %v248 = vpop.permute.xlu0 %247
  %v250 = vmul.f32 %v153, %v248
  %v251 = vsel %vm129, %v250, 0.0
  %252 = vadd.xlane.f32.xlu0 %v251
  %v253 = vpop.xlane.xlu0 %252
  %v254 = vmul.f32 %v164, %v191
  %v255 = vmul.f32 %v253, %v254
  %vm256 = vcmp.eq.f32.partialorder %v126, %v147
  %257 = vrot.lane.b32.xlu0 %v203, 80
  %v258 = vpop.permute.xlu0 %257
  %v260 = vsel %vm256, %v147, %v258
  %v261 = vsel %vm129, %v260, 0.0
  %262 = vadd.xlane.f32.xlu0 %v261
  %v263 = vpop.xlane.xlu0 %262
  %v264 = vsel %vm256, %v126, %v203
  %v265 = vsel %vm129, %v264, 0.0
  %266 = vadd.xlane.f32.xlu0 %v265
  %v267 = vpop.xlane.xlu0 %266
  %v268 = vadd.f32 %v132, %v263
  %v269 = vmul.f32 %v268, 0.03125
  %v270 = vadd.f32 %v151, %v267
  %v271 = vmul.f32 %v270, 0.03125
  %272 = vrot.lane.b32.xlu0 %v157, 112
  %v273 = vpop.permute.xlu0 %272
  %v275 = vmul.f32 %v155, %v273
  %277 = vrot.lane.b32.xlu0 %v275, 112
  %v278 = vpop.permute.xlu0 %277
  %v280 = vsel %vm129, %v278, 0.0
  %281 = vadd.xlane.f32.xlu0 %v280
  %v282 = vpop.xlane.xlu0 %281
  %v283 = vmul.f32 %v173, %v182
  %v284 = vmul.f32 %v282, %v283
  %286 = vrot.lane.b32.xlu0 %v208, 112
  %v287 = vpop.permute.xlu0 %286
  %v289 = vsel %vm129, %v287, 0.0
  %290 = vadd.xlane.f32.xlu0 %v289
  %v291 = vpop.xlane.xlu0 %290
  %293 = vrot.lane.b32.xlu0 %v212, 112
  %v294 = vpop.permute.xlu0 %293
  %v296 = vsel %vm129, %v294, 0.0
  %297 = vadd.xlane.f32.xlu0 %v296
  %v298 = vpop.xlane.xlu0 %297
  %v299 = vadd.f32 %v139, %v291
  %v300 = vmul.f32 %v299, 0.03125
  %v301 = vadd.f32 %v145, %v298
  %v302 = vmul.f32 %v301, 0.03125
  %303 = vrot.lane.b32.xlu0 %v159, 96
  %v304 = vpop.permute.xlu0 %303
  %v306 = vmul.f32 %v155, %v304
  %308 = vrot.lane.b32.xlu0 %v306, 112
  %v309 = vpop.permute.xlu0 %308
  %v311 = vsel %vm129, %v309, 0.0
  %312 = vadd.xlane.f32.xlu0 %v311
  %v313 = vpop.xlane.xlu0 %312
  %v314 = vmul.f32 %v173, %v191
  %v315 = vmul.f32 %v313, %v314
  %317 = vrot.lane.b32.xlu0 %v234, 112
  %v318 = vpop.permute.xlu0 %317
  %v320 = vsel %vm129, %v318, 0.0
  %321 = vadd.xlane.f32.xlu0 %v320
  %v322 = vpop.xlane.xlu0 %321
  %324 = vrot.lane.b32.xlu0 %v238, 112
  %v325 = vpop.permute.xlu0 %324
  %v327 = vsel %vm129, %v325, 0.0
  %328 = vadd.xlane.f32.xlu0 %v327
  %v329 = vpop.xlane.xlu0 %328
  %v330 = vadd.f32 %v139, %v322
  %v331 = vmul.f32 %v330, 0.03125
  %v332 = vadd.f32 %v151, %v329
  %v333 = vmul.f32 %v332, 0.03125
  %334 = vrot.lane.b32.xlu0 %v159, 112
  %v335 = vpop.permute.xlu0 %334
  %v337 = vmul.f32 %v157, %v335
  %339 = vrot.lane.b32.xlu0 %v337, 96
  %v340 = vpop.permute.xlu0 %339
  %v342 = vsel %vm129, %v340, 0.0
  %343 = vadd.xlane.f32.xlu0 %v342
  %v344 = vpop.xlane.xlu0 %343
  %v345 = vmul.f32 %v182, %v191
  %v346 = vmul.f32 %v344, %v345
  %347 = vrot.lane.b32.xlu0 %v208, 96
  %v348 = vpop.permute.xlu0 %347
  %v350 = vsel %vm129, %v348, 0.0
  %351 = vadd.xlane.f32.xlu0 %v350
  %v352 = vpop.xlane.xlu0 %351
  %353 = vrot.lane.b32.xlu0 %v212, 96
  %v354 = vpop.permute.xlu0 %353
  %v356 = vsel %vm129, %v354, 0.0
  %357 = vadd.xlane.f32.xlu0 %v356
  %v358 = vpop.xlane.xlu0 %357
  %v359 = vadd.f32 %v145, %v352
  %v360 = vmul.f32 %v359, 0.03125
  %v361 = vadd.f32 %v151, %v358
  %v362 = vmul.f32 %v361, 0.03125
  %vm363 = vcmask 7168
  %v364 = vsel %vm363, 1.0, %v201
  %vm365 = vcmask 15360
  %v366 = vsel %vm365, %v364, %v229
  %vm367 = vcmask 23552
  %v368 = vsel %vm367, %v366, %v255
  %v369 = vsel %vm363, %v201, 1.0
  %v370 = vsel %vm365, %v369, %v284
  %v371 = vsel %vm367, %v370, %v315
  %v372 = vsel %vm363, %v229, %v284
  %v373 = vsel %vm365, %v372, 1.0
  %v374 = vsel %vm367, %v373, %v346
  %v375 = vsel %vm363, %v255, %v315
  %v376 = vsel %vm365, %v375, %v346
  %v377 = vsel %vm367, %v376, 1.0
  %379 = vrot.lane.b32.xlu0 %v371, 4
  %v380 = vpop.permute.xlu0 %379
  %383 = vrot.lane.b32.xlu0 %v374, 8
  %v384 = vpop.permute.xlu0 %383
  %387 = vrot.lane.b32.xlu0 %v377, 12
  %v388 = vpop.permute.xlu0 %387
  %vm390 = vcmask 31744
  %v391 = vsel %vm390, %v368, %v380
  %vm392 = vcmask 64512
  %v393 = vsel %vm392, %v391, %v384
  %vm394 = vcmask 97280
  %v395 = vsel %vm394, %v393, %v388
  %v396 = vsel %vm363, %v152, %v217
  %v397 = vsel %vm365, %v396, %v243
  %v398 = vsel %vm367, %v397, %v269
  %v399 = vsel %vm390, %v398, %v219
  %vm400 = vcmask 39936
  %v401 = vsel %vm400, %v399, %v154
  %v402 = vsel %vm51, %v401, %v300
  %vm403 = vcmask 56320
  %v404 = vsel %vm403, %v402, %v331
  %v405 = vsel %vm392, %v404, %v245
  %vm406 = vcmask 72704
  %v407 = vsel %vm406, %v405, %v302
  %vm408 = vcmask 80896
  %v409 = vsel %vm408, %v407, %v156
  %vm410 = vcmask 89088
  %v411 = vsel %vm410, %v409, %v360
  %v412 = vsel %vm394, %v411, %v271
  %vm413 = vcmask 105472
  %v414 = vsel %vm413, %v412, %v333
  %vm415 = vcmask 113664
  %v416 = vsel %vm415, %v414, %v362
  %vm417 = vcmask 121856
  %v418 = vsel %vm417, %v416, %v158
  %v419 = vld [vmem:[%s2] sm:$0xff]
  %v420 = vld [vmem:[%s2 + $0x8] sm:$0xff]
  %v422 = vsel %vm129, %v418, 0
  %424 = vmatprep.subr.mxu0 0.0
  %425 = vmatpush1.msra.mxu0 0.0
  %426 = vmatprep.subr.mxu0 0.0
  %427 = vmatpush1.msra.mxu0 0.0
  %428 = vmatprep.subr.mxu0 0.0
  %429 = vmatpush1.msra.mxu0 0.0
  %430 = vmatprep.subr.mxu0 0.0
  %431 = vmatpush1.msra.mxu0 0.0
  %432 = vmatprep.subr.mxu0 0.0
  %433 = vmatpush1.msra.mxu0 0.0
  %434 = vmatprep.subr.mxu0 0.0
  %435 = vmatpush1.msra.mxu0 0.0
  %436 = vmatprep.subr.mxu0 0.0
  %437 = vmatpush1.msra.mxu0 0.0
  %438 = vmatprep.subr.mxu0 0.0
  %439 = vmatpush1.msra.mxu0 0.0
  %440 = vmatprep.subr.mxu0 0.0
  %441 = vmatpush1.msra.mxu0 0.0
  %442 = vmatprep.subr.mxu0 0.0
  %443 = vmatpush1.msra.mxu0 0.0
  %444 = vmatprep.subr.mxu0 0.0
  %445 = vmatpush1.msra.mxu0 0.0
  %446 = vmatprep.subr.mxu0 0.0
  %447 = vmatpush1.msra.mxu0 0.0
  %448 = vmatprep.subr.mxu0 0.0
  %449 = vmatpush1.msra.mxu0 0.0
  %450 = vmatprep.subr.mxu0 0.0
  %451 = vmatpush1.msra.mxu0 0.0
  %452 = vmatprep.subr.mxu0 0.0
  %453 = vmatpush1.msra.mxu0 %v420
  %454 = vmatprep.subr.mxu0 0.0
  %455 = vmatpush1.msra.mxu0 %v419
  %456 = vmatprep.subr.mxu0 0.0
  %457 = vmatpush2.msra.mxu0 0.0
  %458 = vmatprep.subr.mxu0 0.0
  %459 = vmatpush2.msra.mxu0 0.0
  %460 = vmatprep.subr.mxu0 0.0
  %461 = vmatpush2.msra.mxu0 0.0
  %462 = vmatprep.subr.mxu0 0.0
  %463 = vmatpush2.msra.mxu0 0.0
  %464 = vmatprep.subr.mxu0 0.0
  %465 = vmatpush2.msra.mxu0 0.0
  %466 = vmatprep.subr.mxu0 0.0
  %467 = vmatpush2.msra.mxu0 0.0
  %468 = vmatprep.subr.mxu0 0.0
  %469 = vmatpush2.msra.mxu0 0.0
  %470 = vmatprep.subr.mxu0 0.0
  %471 = vmatpush2.msra.mxu0 0.0
  %472 = vmatprep.subr.mxu0 0.0
  %473 = vmatpush2.msra.mxu0 0.0
  %474 = vmatprep.subr.mxu0 0.0
  %475 = vmatpush2.msra.mxu0 0.0
  %476 = vmatprep.subr.mxu0 0.0
  %477 = vmatpush2.msra.mxu0 0.0
  %478 = vmatprep.subr.mxu0 0.0
  %479 = vmatpush2.msra.mxu0 0.0
  %480 = vmatprep.subr.mxu0 0.0
  %481 = vmatpush2.msra.mxu0 0.0
  %482 = vmatprep.subr.mxu0 0.0
  %483 = vmatpush2.msra.mxu0 0.0
  %484 = vmatprep.subr.mxu0 0.0
  %485 = vmatpush2.msra.mxu0 0.0
  %486 = vmatprep.subr.mxu0 0.0
  %487 = vmatpush2.msra.mxu0 0.0
  %488 = vmatprep.mubr.f32.mxu0 0.0
  %489 = vmatmul.mubr.f32.gmra.mxu0 %v422
  %v490 = vpop.f32.mrf.mxu0
  %v491 = vadd.f32 0.0, %v490
  %v492 = vpop.f32.mrf.mxu0
  %493 = vdwg.mxu0
  %v494 = vmul.f32 %v491, 0.70710677
  %vm495 = vcmp.ge.f32.partialorder %v494, 0.0
  %v496 = vsel %vm495, 1.0, -1.0
  %v497 = vand.u32 2147483647, %v494
  %v498 = vmul.f32 %v497, 0.3275911
  %v499 = vadd.f32 %v498, 1.0
  %v500 = vrcp.pop %v499
  %v501 = vmul.f32 %v500, 1.0614054
  %v502 = vadd.f32 %v501, -1.4531521
  %v503 = vmul.f32 %v502, %v500
  %v504 = vadd.f32 %v503, 1.4214138
  %v505 = vmul.f32 %v504, %v500
  %v506 = vadd.f32 %v505, -0.28449672
  %v507 = vmul.f32 %v506, %v500
  %v508 = vadd.f32 %v507, 0.2548296
  %v509 = vmul.f32 %v508, %v500
  %v510 = vsub.f32 0.0, %v497
  %v511 = vmul.f32 %v510, %v497
  %v512 = vmul.f32 %v511, 1.442695
  %v513 = vpow.pop %v512
  %v514 = vmul.f32 %v509, %v513
  %v515 = vsub.f32 1.0, %v514
  %v516 = vmul.f32 %v496, %v515
  %v517 = vmul.f32 %v491, 0.5
  %v518 = vadd.f32 %v516, 1.0
  %v519 = vmul.f32 %v517, %v518
  %v520 = vld [vmem:[%s3] sm:$0xff]
  %v522 = vsel %vm392, %v519, 0
  %524 = vmatprep.subr.mxu0 0.0
  %525 = vmatpush1.msra.mxu0 0.0
  %526 = vmatprep.subr.mxu0 0.0
  %527 = vmatpush1.msra.mxu0 0.0
  %528 = vmatprep.subr.mxu0 0.0
  %529 = vmatpush1.msra.mxu0 0.0
  %530 = vmatprep.subr.mxu0 0.0
  %531 = vmatpush1.msra.mxu0 0.0
  %532 = vmatprep.subr.mxu0 0.0
  %533 = vmatpush1.msra.mxu0 0.0
  %534 = vmatprep.subr.mxu0 0.0
  %535 = vmatpush1.msra.mxu0 0.0
  %536 = vmatprep.subr.mxu0 0.0
  %537 = vmatpush1.msra.mxu0 0.0
  %538 = vmatprep.subr.mxu0 0.0
  %539 = vmatpush1.msra.mxu0 0.0
  %540 = vmatprep.subr.mxu0 0.0
  %541 = vmatpush1.msra.mxu0 0.0
  %542 = vmatprep.subr.mxu0 0.0
  %543 = vmatpush1.msra.mxu0 0.0
  %544 = vmatprep.subr.mxu0 0.0
  %545 = vmatpush1.msra.mxu0 0.0
  %546 = vmatprep.subr.mxu0 0.0
  %547 = vmatpush1.msra.mxu0 0.0
  %548 = vmatprep.subr.mxu0 0.0
  %549 = vmatpush1.msra.mxu0 0.0
  %550 = vmatprep.subr.mxu0 0.0
  %551 = vmatpush1.msra.mxu0 0.0
  %552 = vmatprep.subr.mxu0 0.0
  %553 = vmatpush1.msra.mxu0 0.0
  %554 = vmatprep.subr.mxu0 0.0
  %555 = vmatpush1.msra.mxu0 %v520
  %556 = vmatprep.subr.mxu0 0.0
  %557 = vmatpush2.msra.mxu0 0.0
  %558 = vmatprep.subr.mxu0 0.0
  %559 = vmatpush2.msra.mxu0 0.0
  %560 = vmatprep.subr.mxu0 0.0
  %561 = vmatpush2.msra.mxu0 0.0
  %562 = vmatprep.subr.mxu0 0.0
  %563 = vmatpush2.msra.mxu0 0.0
  %564 = vmatprep.subr.mxu0 0.0
  %565 = vmatpush2.msra.mxu0 0.0
  %566 = vmatprep.subr.mxu0 0.0
  %567 = vmatpush2.msra.mxu0 0.0
  %568 = vmatprep.subr.mxu0 0.0
  %569 = vmatpush2.msra.mxu0 0.0
  %570 = vmatprep.subr.mxu0 0.0
  %571 = vmatpush2.msra.mxu0 0.0
  %572 = vmatprep.subr.mxu0 0.0
  %573 = vmatpush2.msra.mxu0 0.0
  %574 = vmatprep.subr.mxu0 0.0
  %575 = vmatpush2.msra.mxu0 0.0
  %576 = vmatprep.subr.mxu0 0.0
  %577 = vmatpush2.msra.mxu0 0.0
  %578 = vmatprep.subr.mxu0 0.0
  %579 = vmatpush2.msra.mxu0 0.0
  %580 = vmatprep.subr.mxu0 0.0
  %581 = vmatpush2.msra.mxu0 0.0
  %582 = vmatprep.subr.mxu0 0.0
  %583 = vmatpush2.msra.mxu0 0.0
  %584 = vmatprep.subr.mxu0 0.0
  %585 = vmatpush2.msra.mxu0 0.0
  %586 = vmatprep.subr.mxu0 0.0
  %587 = vmatpush2.msra.mxu0 0.0
  %588 = vmatprep.mubr.f32.mxu0 0.0
  %589 = vmatmul.mubr.f32.gmra.mxu0 %v522
  %v590 = vpop.f32.mrf.mxu0
  %v591 = vadd.f32 0.0, %v590
  %v592 = vpop.f32.mrf.mxu0
  %593 = vdwg.mxu0
  %v594 = vxor.u32 %v591, 2147483648
  %v595 = vmul.f32 %v594, 1.442695
  %v596 = vpow.pop %v595
  %v597 = vadd.f32 %v596, 1.0
  %v598 = vrcp.pop %v597
  %v599 = vmul.f32 1.0, %v598
  %vm600 = vcmp.gt.f32.partialorder %v368, 0.0
  %v601 = vsel %vm600, %v599, -9e+15
  %v602 = vsel %vm390, %v601, -inf
  %603 = vmax.xlane.f32.xlu0 %v602
  %v604 = vpop.xlane.xlu0 %603
  %v605 = vsub.f32 %v601, %v604
  %v606 = vmul.f32 %v605, 1.442695
  %v607 = vpow.pop %v606
  %v608 = vsel %vm390, %v607, 0.0
  %609 = vadd.xlane.f32.xlu0 %v608
  %v610 = vpop.xlane.xlu0 %609
  %v611 = vrcp.pop %v610
  %v612 = vmul.f32 %v607, %v611
  %614 = vset.pattern.permute.xlu0 0
  %615 = vperm.xlu0 %614, %v612
  %v616 = vpop.permute.xlu0 %615
  %v618 = vmul.f32 %v616, %v126
  %619 = vset.pattern.permute.xlu0 1
  %620 = vperm.xlu0 %619, %v612
  %v621 = vpop.permute.xlu0 %620
  %v623 = vmul.f32 %v621, %v126
  %625 = vrot.lane.b32.xlu0 %v623, 112
  %v626 = vpop.permute.xlu0 %625
  %v628 = vadd.f32 %v618, %v626
  %629 = vset.pattern.permute.xlu0 2
  %630 = vperm.xlu0 %629, %v612
  %v631 = vpop.permute.xlu0 %630
  %v633 = vmul.f32 %v631, %v126
  %635 = vrot.lane.b32.xlu0 %v633, 96
  %v636 = vpop.permute.xlu0 %635
  %v638 = vadd.f32 %v628, %v636
  %639 = vset.pattern.permute.xlu0 3
  %640 = vperm.xlu0 %639, %v612
  %v641 = vpop.permute.xlu0 %640
  %v643 = vmul.f32 %v641, %v126
  %645 = vrot.lane.b32.xlu0 %v643, 80
  %v646 = vpop.permute.xlu0 %645
  %v648 = vadd.f32 %v638, %v646
  %vm649 = vcmp.gt.f32.partialorder %v371, 0.0
  %651 = vrot.lane.b32.xlu0 %v599, 124
  %v652 = vpop.permute.xlu0 %651
  %v654 = vsel %vm649, %v652, -9e+15
  %v655 = vsel %vm390, %v654, -inf
  %656 = vmax.xlane.f32.xlu0 %v655
  %v657 = vpop.xlane.xlu0 %656
  %v658 = vsub.f32 %v654, %v657
  %v659 = vmul.f32 %v658, 1.442695
  %v660 = vpow.pop %v659
  %v661 = vsel %vm390, %v660, 0.0
  %662 = vadd.xlane.f32.xlu0 %v661
  %v663 = vpop.xlane.xlu0 %662
  %v664 = vrcp.pop %v663
  %v665 = vmul.f32 %v660, %v664
  %667 = vset.pattern.permute.xlu0 0
  %668 = vperm.xlu0 %667, %v665
  %v669 = vpop.permute.xlu0 %668
  %v671 = vmul.f32 %v669, %v126
  %672 = vset.pattern.permute.xlu0 1
  %673 = vperm.xlu0 %672, %v665
  %v674 = vpop.permute.xlu0 %673
  %v676 = vmul.f32 %v674, %v126
  %678 = vrot.lane.b32.xlu0 %v676, 112
  %v679 = vpop.permute.xlu0 %678
  %v681 = vadd.f32 %v671, %v679
  %682 = vset.pattern.permute.xlu0 2
  %683 = vperm.xlu0 %682, %v665
  %v684 = vpop.permute.xlu0 %683
  %v686 = vmul.f32 %v684, %v126
  %688 = vrot.lane.b32.xlu0 %v686, 96
  %v689 = vpop.permute.xlu0 %688
  %v691 = vadd.f32 %v681, %v689
  %692 = vset.pattern.permute.xlu0 3
  %693 = vperm.xlu0 %692, %v665
  %v694 = vpop.permute.xlu0 %693
  %v696 = vmul.f32 %v694, %v126
  %698 = vrot.lane.b32.xlu0 %v696, 80
  %v699 = vpop.permute.xlu0 %698
  %v701 = vadd.f32 %v691, %v699
  %vm702 = vcmp.gt.f32.partialorder %v374, 0.0
  %703 = vrot.lane.b32.xlu0 %v599, 120
  %v704 = vpop.permute.xlu0 %703
  %v706 = vsel %vm702, %v704, -9e+15
  %v707 = vsel %vm390, %v706, -inf
  %708 = vmax.xlane.f32.xlu0 %v707
  %v709 = vpop.xlane.xlu0 %708
  %v710 = vsub.f32 %v706, %v709
  %v711 = vmul.f32 %v710, 1.442695
  %v712 = vpow.pop %v711
  %v713 = vsel %vm390, %v712, 0.0
  %714 = vadd.xlane.f32.xlu0 %v713
  %v715 = vpop.xlane.xlu0 %714
  %v716 = vrcp.pop %v715
  %v717 = vmul.f32 %v712, %v716
  %719 = vset.pattern.permute.xlu0 0
  %720 = vperm.xlu0 %719, %v717
  %v721 = vpop.permute.xlu0 %720
  %v723 = vmul.f32 %v721, %v126
  %724 = vset.pattern.permute.xlu0 1
  %725 = vperm.xlu0 %724, %v717
  %v726 = vpop.permute.xlu0 %725
  %v728 = vmul.f32 %v726, %v126
  %730 = vrot.lane.b32.xlu0 %v728, 112
  %v731 = vpop.permute.xlu0 %730
  %v733 = vadd.f32 %v723, %v731
  %734 = vset.pattern.permute.xlu0 2
  %735 = vperm.xlu0 %734, %v717
  %v736 = vpop.permute.xlu0 %735
  %v738 = vmul.f32 %v736, %v126
  %740 = vrot.lane.b32.xlu0 %v738, 96
  %v741 = vpop.permute.xlu0 %740
  %v743 = vadd.f32 %v733, %v741
  %744 = vset.pattern.permute.xlu0 3
  %745 = vperm.xlu0 %744, %v717
  %v746 = vpop.permute.xlu0 %745
  %v748 = vmul.f32 %v746, %v126
  %750 = vrot.lane.b32.xlu0 %v748, 80
  %v751 = vpop.permute.xlu0 %750
  %v753 = vadd.f32 %v743, %v751
  %vm754 = vcmp.gt.f32.partialorder %v377, 0.0
  %755 = vrot.lane.b32.xlu0 %v599, 116
  %v756 = vpop.permute.xlu0 %755
  %v758 = vsel %vm754, %v756, -9e+15
  %v759 = vsel %vm390, %v758, -inf
  %760 = vmax.xlane.f32.xlu0 %v759
  %v761 = vpop.xlane.xlu0 %760
  %v762 = vsub.f32 %v758, %v761
  %v763 = vmul.f32 %v762, 1.442695
  %v764 = vpow.pop %v763
  %v765 = vsel %vm390, %v764, 0.0
  %766 = vadd.xlane.f32.xlu0 %v765
  %v767 = vpop.xlane.xlu0 %766
  %v768 = vrcp.pop %v767
  %v769 = vmul.f32 %v764, %v768
  %771 = vset.pattern.permute.xlu0 0
  %772 = vperm.xlu0 %771, %v769
  %v773 = vpop.permute.xlu0 %772
  %v775 = vmul.f32 %v773, %v126
  %776 = vset.pattern.permute.xlu0 1
  %777 = vperm.xlu0 %776, %v769
  %v778 = vpop.permute.xlu0 %777
  %v780 = vmul.f32 %v778, %v126
  %782 = vrot.lane.b32.xlu0 %v780, 112
  %v783 = vpop.permute.xlu0 %782
  %v785 = vadd.f32 %v775, %v783
  %786 = vset.pattern.permute.xlu0 2
  %787 = vperm.xlu0 %786, %v769
  %v788 = vpop.permute.xlu0 %787
  %v790 = vmul.f32 %v788, %v126
  %792 = vrot.lane.b32.xlu0 %v790, 96
  %v793 = vpop.permute.xlu0 %792
  %v795 = vadd.f32 %v785, %v793
  %796 = vset.pattern.permute.xlu0 3
  %797 = vperm.xlu0 %796, %v769
  %v798 = vpop.permute.xlu0 %797
  %v800 = vmul.f32 %v798, %v126
  %802 = vrot.lane.b32.xlu0 %v800, 80
  %v803 = vpop.permute.xlu0 %802
  %v805 = vadd.f32 %v795, %v803
  %807 = vrot.lane.b32.xlu0 %v701, 16
  %v808 = vpop.permute.xlu0 %807
  %811 = vrot.lane.b32.xlu0 %v753, 32
  %v812 = vpop.permute.xlu0 %811
  %815 = vrot.lane.b32.xlu0 %v805, 48
  %v816 = vpop.permute.xlu0 %815
  %v818 = vsel %vm129, %v648, %v808
  %vm819 = vcmask 261120
  %v820 = vsel %vm819, %v818, %v812
  %vm821 = vcmask 392192
  %v822 = vsel %vm821, %v820, %v816
  %vm823 = vcmask 523264
  %v824 = vsel %vm823, %v822, 0.0
  %825 = vadd.xlane.f32.xlu0 %v824
  %v826 = vpop.xlane.xlu0 %825
  %v828 = vrot.slane %v826, 4
  %v830 = vadd.f32 %v826, %v828
  %v831 = vmul.f32 %v830, 0.0078125
  %v833 = vrot.slane %v831, 4
  %vm835 = vcmask 1043456
  %v836 = vsel %vm835, %v831, %v833
  %838 = vset.pattern.permute.xlu0 0
  %839 = vperm.xlu0 %838, %v836
  %v840 = vpop.permute.xlu0 %839
  %v842 = vsub.f32 %v822, %v840
  %v843 = vmul.f32 %v842, %v842
  %v844 = vsel %vm823, %v843, 0.0
  %845 = vadd.xlane.f32.xlu0 %v844
  %v846 = vpop.xlane.xlu0 %845
  %v848 = vrot.slane %v846, 4
  %v850 = vadd.f32 %v846, %v848
  %v851 = vmul.f32 %v850, 0.0078125
  %v852 = vadd.f32 %v851, 1e-05
  %v853 = vrsqrt.pop %v852
  %v855 = vrot.slane %v853, 4
  %v857 = vsel %vm835, %v853, %v855
  %859 = vset.pattern.permute.xlu0 0
  %860 = vperm.xlu0 %859, %v857
  %v861 = vpop.permute.xlu0 %860
  %v863 = vmul.f32 %v842, %v861
  %v864 = vmul.f32 %v863, 0.70710677
  %vm865 = vcmp.ge.f32.partialorder %v864, 0.0
  %v866 = vsel %vm865, 1.0, -1.0
  %v867 = vand.u32 2147483647, %v864
  %v868 = vmul.f32 %v867, 0.3275911
  %v869 = vadd.f32 %v868, 1.0
  %v870 = vrcp.pop %v869
  %v871 = vmul.f32 %v870, 1.0614054
  %v872 = vadd.f32 %v871, -1.4531521
  %v873 = vmul.f32 %v872, %v870
  %v874 = vadd.f32 %v873, 1.4214138
  %v875 = vmul.f32 %v874, %v870
  %v876 = vadd.f32 %v875, -0.28449672
  %v877 = vmul.f32 %v876, %v870
  %v878 = vadd.f32 %v877, 0.2548296
  %v879 = vmul.f32 %v878, %v870
  %v880 = vsub.f32 0.0, %v867
  %v881 = vmul.f32 %v880, %v867
  %v882 = vmul.f32 %v881, 1.442695
  %v883 = vpow.pop %v882
  %v884 = vmul.f32 %v879, %v883
  %v885 = vsub.f32 1.0, %v884
  %v886 = vmul.f32 %v866, %v885
  %v887 = vmul.f32 %v863, 0.5
  %v888 = vadd.f32 %v886, 1.0
  %v889 = vmul.f32 %v887, %v888
  %v890 = vld [vmem:[%s4] sm:$0xff]
  %v892 = vsel %vm392, %v890, 0
  %894 = vmatprep.subr.mxu0 0.0
  %895 = vmatpush1.msra.mxu0 0.0
  %896 = vmatprep.subr.mxu0 0.0
  %897 = vmatpush1.msra.mxu0 0.0
  %898 = vmatprep.subr.mxu0 0.0
  %899 = vmatpush1.msra.mxu0 0.0
  %900 = vmatprep.subr.mxu0 0.0
  %901 = vmatpush1.msra.mxu0 0.0
  %902 = vmatprep.subr.mxu0 0.0
  %903 = vmatpush1.msra.mxu0 0.0
  %904 = vmatprep.subr.mxu0 0.0
  %905 = vmatpush1.msra.mxu0 0.0
  %906 = vmatprep.subr.mxu0 0.0
  %907 = vmatpush1.msra.mxu0 0.0
  %908 = vmatprep.subr.mxu0 0.0
  %909 = vmatpush1.msra.mxu0 0.0
  %910 = vmatprep.subr.mxu0 0.0
  %911 = vmatpush1.msra.mxu0 0.0
  %912 = vmatprep.subr.mxu0 0.0
  %913 = vmatpush1.msra.mxu0 0.0
  %914 = vmatprep.subr.mxu0 0.0
  %915 = vmatpush1.msra.mxu0 0.0
  %916 = vmatprep.subr.mxu0 0.0
  %917 = vmatpush1.msra.mxu0 0.0
  %918 = vmatprep.subr.mxu0 0.0
  %919 = vmatpush1.msra.mxu0 0.0
  %920 = vmatprep.subr.mxu0 0.0
  %921 = vmatpush1.msra.mxu0 0.0
  %922 = vmatprep.subr.mxu0 0.0
  %923 = vmatpush1.msra.mxu0 0.0
  %924 = vmatprep.subr.mxu0 0.0
  %925 = vmatpush1.msra.mxu0 %v889
  %926 = vmatprep.subr.mxu0 0.0
  %927 = vmatpush2.msra.mxu0 0.0
  %928 = vmatprep.subr.mxu0 0.0
  %929 = vmatpush2.msra.mxu0 0.0
  %930 = vmatprep.subr.mxu0 0.0
  %931 = vmatpush2.msra.mxu0 0.0
  %932 = vmatprep.subr.mxu0 0.0
  %933 = vmatpush2.msra.mxu0 0.0
  %934 = vmatprep.subr.mxu0 0.0
  %935 = vmatpush2.msra.mxu0 0.0
  %936 = vmatprep.subr.mxu0 0.0
  %937 = vmatpush2.msra.mxu0 0.0
  %938 = vmatprep.subr.mxu0 0.0
  %939 = vmatpush2.msra.mxu0 0.0
  %940 = vmatprep.subr.mxu0 0.0
  %941 = vmatpush2.msra.mxu0 0.0
  %942 = vmatprep.subr.mxu0 0.0
  %943 = vmatpush2.msra.mxu0 0.0
  %944 = vmatprep.subr.mxu0 0.0
  %945 = vmatpush2.msra.mxu0 0.0
  %946 = vmatprep.subr.mxu0 0.0
  %947 = vmatpush2.msra.mxu0 0.0
  %948 = vmatprep.subr.mxu0 0.0
  %949 = vmatpush2.msra.mxu0 0.0
  %950 = vmatprep.subr.mxu0 0.0
  %951 = vmatpush2.msra.mxu0 0.0
  %952 = vmatprep.subr.mxu0 0.0
  %953 = vmatpush2.msra.mxu0 0.0
  %954 = vmatprep.subr.mxu0 0.0
  %955 = vmatpush2.msra.mxu0 0.0
  %956 = vmatprep.subr.mxu0 0.0
  %957 = vmatpush2.msra.mxu0 0.0
  %958 = vmatprep.mubr.f32.mxu0 0.0
  %959 = vmatmul.mubr.f32.gmra.mxu0 %v892
  %v960 = vpop.f32.mrf.mxu0
  %v961 = vadd.f32 0.0, %v960
  %v962 = vpop.f32.mrf.mxu0
  %963 = vdwg.mxu0
  %v964 = vld [vmem:[%s5] sm:$0xff]
  %v965 = vld [vmem:[%s5 + $0x8] sm:$0xff]
  %v966 = vld [vmem:[%s5 + $0x10] sm:$0xff]
  %v967 = vld [vmem:[%s5 + $0x18] sm:$0xff]
  %v968 = vld [vmem:[%s5 + $0x20] sm:$0xff]
  %v969 = vld [vmem:[%s5 + $0x28] sm:$0xff]
  %v970 = vld [vmem:[%s5 + $0x30] sm:$0xff]
  %v971 = vld [vmem:[%s5 + $0x38] sm:$0xff]
  %s972 = scalar_lea.vmem %s5, 64
  %v973 = vld [vmem:[%s972] sm:$0xff]
  %v974 = vld [vmem:[%s972 + $0x8] sm:$0xff]
  %v975 = vld [vmem:[%s972 + $0x10] sm:$0xff]
  %v976 = vld [vmem:[%s972 + $0x18] sm:$0xff]
  %v977 = vld [vmem:[%s972 + $0x20] sm:$0xff]
  %v978 = vld [vmem:[%s972 + $0x28] sm:$0xff]
  %v979 = vld [vmem:[%s972 + $0x30] sm:$0xff]
  %v980 = vld [vmem:[%s972 + $0x38] sm:$0xff]
  %v982 = vsel %vm823, %v889, 0
  %984 = vmatprep.subr.mxu0 0.0
  %985 = vmatpush1.msra.mxu0 0.0
  %986 = vmatprep.subr.mxu0 0.0
  %987 = vmatpush1.msra.mxu0 0.0
  %988 = vmatprep.subr.mxu0 0.0
  %989 = vmatpush1.msra.mxu0 0.0
  %990 = vmatprep.subr.mxu0 0.0
  %991 = vmatpush1.msra.mxu0 0.0
  %992 = vmatprep.subr.mxu0 0.0
  %993 = vmatpush1.msra.mxu0 0.0
  %994 = vmatprep.subr.mxu0 0.0
  %995 = vmatpush1.msra.mxu0 0.0
  %996 = vmatprep.subr.mxu0 0.0
  %997 = vmatpush1.msra.mxu0 0.0
  %998 = vmatprep.subr.mxu0 0.0
  %999 = vmatpush1.msra.mxu0 0.0
  %1000 = vmatprep.subr.mxu0 0.0
  %1001 = vmatpush1.msra.mxu0 %v980
  %1002 = vmatprep.subr.mxu0 0.0
  %1003 = vmatpush1.msra.mxu0 %v979
  %1004 = vmatprep.subr.mxu0 0.0
  %1005 = vmatpush1.msra.mxu0 %v978
  %1006 = vmatprep.subr.mxu0 0.0
  %1007 = vmatpush1.msra.mxu0 %v977
  %1008 = vmatprep.subr.mxu0 0.0
  %1009 = vmatpush1.msra.mxu0 %v976
  %1010 = vmatprep.subr.mxu0 0.0
  %1011 = vmatpush1.msra.mxu0 %v975
  %1012 = vmatprep.subr.mxu0 0.0
  %1013 = vmatpush1.msra.mxu0 %v974
  %1014 = vmatprep.subr.mxu0 0.0
  %1015 = vmatpush1.msra.mxu0 %v973
  %1016 = vmatprep.subr.mxu0 0.0
  %1017 = vmatpush2.msra.mxu0 0.0
  %1018 = vmatprep.subr.mxu0 0.0
  %1019 = vmatpush2.msra.mxu0 0.0
  %1020 = vmatprep.subr.mxu0 0.0
  %1021 = vmatpush2.msra.mxu0 0.0
  %1022 = vmatprep.subr.mxu0 0.0
  %1023 = vmatpush2.msra.mxu0 0.0
  %1024 = vmatprep.subr.mxu0 0.0
  %1025 = vmatpush2.msra.mxu0 0.0
  %1026 = vmatprep.subr.mxu0 0.0
  %1027 = vmatpush2.msra.mxu0 0.0
  %1028 = vmatprep.subr.mxu0 0.0
  %1029 = vmatpush2.msra.mxu0 0.0
  %1030 = vmatprep.subr.mxu0 0.0
  %1031 = vmatpush2.msra.mxu0 0.0
  %1032 = vmatprep.subr.mxu0 0.0
  %1033 = vmatpush2.msra.mxu0 0.0
  %1034 = vmatprep.subr.mxu0 0.0
  %1035 = vmatpush2.msra.mxu0 0.0
  %1036 = vmatprep.subr.mxu0 0.0
  %1037 = vmatpush2.msra.mxu0 0.0
  %1038 = vmatprep.subr.mxu0 0.0
  %1039 = vmatpush2.msra.mxu0 0.0
  %1040 = vmatprep.subr.mxu0 0.0
  %1041 = vmatpush2.msra.mxu0 0.0
  %1042 = vmatprep.subr.mxu0 0.0
  %1043 = vmatpush2.msra.mxu0 0.0
  %1044 = vmatprep.subr.mxu0 0.0
  %1045 = vmatpush2.msra.mxu0 0.0
  %1046 = vmatprep.subr.mxu0 0.0
  %1047 = vmatpush2.msra.mxu0 0.0
  %1048 = vmatprep.mubr.f32.mxu0 0.0
  %1049 = vmatmul.mubr.f32.gmra.mxu0 %v982
  %v1050 = vpop.f32.mrf.mxu0
  %v1051 = vadd.f32 0.0, %v1050
  %v1052 = vpop.f32.mrf.mxu0
  %1053 = vdwg.mxu0
  %v1055 = vsel %vm823, %v961, 0
  %1057 = vmatprep.subr.mxu0 0.0
  %1058 = vmatpush1.msra.mxu0 0.0
  %1059 = vmatprep.subr.mxu0 0.0
  %1060 = vmatpush1.msra.mxu0 0.0
  %1061 = vmatprep.subr.mxu0 0.0
  %1062 = vmatpush1.msra.mxu0 0.0
  %1063 = vmatprep.subr.mxu0 0.0
  %1064 = vmatpush1.msra.mxu0 0.0
  %1065 = vmatprep.subr.mxu0 0.0
  %1066 = vmatpush1.msra.mxu0 0.0
  %1067 = vmatprep.subr.mxu0 0.0
  %1068 = vmatpush1.msra.mxu0 0.0
  %1069 = vmatprep.subr.mxu0 0.0
  %1070 = vmatpush1.msra.mxu0 0.0
  %1071 = vmatprep.subr.mxu0 0.0
  %1072 = vmatpush1.msra.mxu0 0.0
  %1073 = vmatprep.subr.mxu0 0.0
  %1074 = vmatpush1.msra.mxu0 %v971
  %1075 = vmatprep.subr.mxu0 0.0
  %1076 = vmatpush1.msra.mxu0 %v970
  %1077 = vmatprep.subr.mxu0 0.0
  %1078 = vmatpush1.msra.mxu0 %v969
  %1079 = vmatprep.subr.mxu0 0.0
  %1080 = vmatpush1.msra.mxu0 %v968
  %1081 = vmatprep.subr.mxu0 0.0
  %1082 = vmatpush1.msra.mxu0 %v967
  %1083 = vmatprep.subr.mxu0 0.0
  %1084 = vmatpush1.msra.mxu0 %v966
  %1085 = vmatprep.subr.mxu0 0.0
  %1086 = vmatpush1.msra.mxu0 %v965
  %1087 = vmatprep.subr.mxu0 0.0
  %1088 = vmatpush1.msra.mxu0 %v964
  %1089 = vmatprep.subr.mxu0 0.0
  %1090 = vmatpush2.msra.mxu0 0.0
  %1091 = vmatprep.subr.mxu0 0.0
  %1092 = vmatpush2.msra.mxu0 0.0
  %1093 = vmatprep.subr.mxu0 0.0
  %1094 = vmatpush2.msra.mxu0 0.0
  %1095 = vmatprep.subr.mxu0 0.0
  %1096 = vmatpush2.msra.mxu0 0.0
  %1097 = vmatprep.subr.mxu0 0.0
  %1098 = vmatpush2.msra.mxu0 0.0
  %1099 = vmatprep.subr.mxu0 0.0
  %1100 = vmatpush2.msra.mxu0 0.0
  %1101 = vmatprep.subr.mxu0 0.0
  %1102 = vmatpush2.msra.mxu0 0.0
  %1103 = vmatprep.subr.mxu0 0.0
  %1104 = vmatpush2.msra.mxu0 0.0
  %1105 = vmatprep.subr.mxu0 0.0
  %1106 = vmatpush2.msra.mxu0 0.0
  %1107 = vmatprep.subr.mxu0 0.0
  %1108 = vmatpush2.msra.mxu0 0.0
  %1109 = vmatprep.subr.mxu0 0.0
  %1110 = vmatpush2.msra.mxu0 0.0
  %1111 = vmatprep.subr.mxu0 0.0
  %1112 = vmatpush2.msra.mxu0 0.0
  %1113 = vmatprep.subr.mxu0 0.0
  %1114 = vmatpush2.msra.mxu0 0.0
  %1115 = vmatprep.subr.mxu0 0.0
  %1116 = vmatpush2.msra.mxu0 0.0
  %1117 = vmatprep.subr.mxu0 0.0
  %1118 = vmatpush2.msra.mxu0 0.0
  %1119 = vmatprep.subr.mxu0 0.0
  %1120 = vmatpush2.msra.mxu0 0.0
  %1121 = vmatprep.mubr.f32.mxu0 0.0
  %1122 = vmatmul.mubr.f32.gmra.mxu0 %v1055
  %v1123 = vpop.f32.mrf.mxu0
  %v1124 = vadd.f32 %v1051, %v1123
  %v1125 = vpop.f32.mrf.mxu0
  %1126 = vdwg.mxu0
  %s1127 = scalar_lea.vmem %s4, 16
  %v1128 = vld [vmem:[%s1127] sm:$0xff]
  %v1130 = vsel %vm392, %v1128, 0
  %1132 = vmatprep.subr.mxu0 0.0
  %1133 = vmatpush1.msra.mxu0 0.0
  %1134 = vmatprep.subr.mxu0 0.0
  %1135 = vmatpush1.msra.mxu0 0.0
  %1136 = vmatprep.subr.mxu0 0.0
  %1137 = vmatpush1.msra.mxu0 0.0
  %1138 = vmatprep.subr.mxu0 0.0
  %1139 = vmatpush1.msra.mxu0 0.0
  %1140 = vmatprep.subr.mxu0 0.0
  %1141 = vmatpush1.msra.mxu0 0.0
  %1142 = vmatprep.subr.mxu0 0.0
  %1143 = vmatpush1.msra.mxu0 0.0
  %1144 = vmatprep.subr.mxu0 0.0
  %1145 = vmatpush1.msra.mxu0 0.0
  %1146 = vmatprep.subr.mxu0 0.0
  %1147 = vmatpush1.msra.mxu0 0.0
  %1148 = vmatprep.subr.mxu0 0.0
  %1149 = vmatpush1.msra.mxu0 0.0
  %1150 = vmatprep.subr.mxu0 0.0
  %1151 = vmatpush1.msra.mxu0 0.0
  %1152 = vmatprep.subr.mxu0 0.0
  %1153 = vmatpush1.msra.mxu0 0.0
  %1154 = vmatprep.subr.mxu0 0.0
  %1155 = vmatpush1.msra.mxu0 0.0
  %1156 = vmatprep.subr.mxu0 0.0
  %1157 = vmatpush1.msra.mxu0 0.0
  %1158 = vmatprep.subr.mxu0 0.0
  %1159 = vmatpush1.msra.mxu0 0.0
  %1160 = vmatprep.subr.mxu0 0.0
  %1161 = vmatpush1.msra.mxu0 0.0
  %1162 = vmatprep.subr.mxu0 0.0
  %1163 = vmatpush1.msra.mxu0 %v889
  %1164 = vmatprep.subr.mxu0 0.0
  %1165 = vmatpush2.msra.mxu0 0.0
  %1166 = vmatprep.subr.mxu0 0.0
  %1167 = vmatpush2.msra.mxu0 0.0
  %1168 = vmatprep.subr.mxu0 0.0
  %1169 = vmatpush2.msra.mxu0 0.0
  %1170 = vmatprep.subr.mxu0 0.0
  %1171 = vmatpush2.msra.mxu0 0.0
  %1172 = vmatprep.subr.mxu0 0.0
  %1173 = vmatpush2.msra.mxu0 0.0
  %1174 = vmatprep.subr.mxu0 0.0
  %1175 = vmatpush2.msra.mxu0 0.0
  %1176 = vmatprep.subr.mxu0 0.0
  %1177 = vmatpush2.msra.mxu0 0.0
  %1178 = vmatprep.subr.mxu0 0.0
  %1179 = vmatpush2.msra.mxu0 0.0
  %1180 = vmatprep.subr.mxu0 0.0
  %1181 = vmatpush2.msra.mxu0 0.0
  %1182 = vmatprep.subr.mxu0 0.0
  %1183 = vmatpush2.msra.mxu0 0.0
  %1184 = vmatprep.subr.mxu0 0.0
  %1185 = vmatpush2.msra.mxu0 0.0
  %1186 = vmatprep.subr.mxu0 0.0
  %1187 = vmatpush2.msra.mxu0 0.0
  %1188 = vmatprep.subr.mxu0 0.0
  %1189 = vmatpush2.msra.mxu0 0.0
  %1190 = vmatprep.subr.mxu0 0.0
  %1191 = vmatpush2.msra.mxu0 0.0
  %1192 = vmatprep.subr.mxu0 0.0
  %1193 = vmatpush2.msra.mxu0 0.0
  %1194 = vmatprep.subr.mxu0 0.0
  %1195 = vmatpush2.msra.mxu0 0.0
  %1196 = vmatprep.mubr.f32.mxu0 0.0
  %1197 = vmatmul.mubr.f32.gmra.mxu0 %v1130
  %v1198 = vpop.f32.mrf.mxu0
  %v1199 = vadd.f32 0.0, %v1198
  %v1200 = vpop.f32.mrf.mxu0
  %1201 = vdwg.mxu0
  %s1202 = scalar_lea.vmem %s5, 128
  %v1203 = vld [vmem:[%s1202] sm:$0xff]
  %v1204 = vld [vmem:[%s1202 + $0x8] sm:$0xff]
  %v1205 = vld [vmem:[%s1202 + $0x10] sm:$0xff]
  %v1206 = vld [vmem:[%s1202 + $0x18] sm:$0xff]
  %v1207 = vld [vmem:[%s1202 + $0x20] sm:$0xff]
  %v1208 = vld [vmem:[%s1202 + $0x28] sm:$0xff]
  %v1209 = vld [vmem:[%s1202 + $0x30] sm:$0xff]
  %v1210 = vld [vmem:[%s1202 + $0x38] sm:$0xff]
  %v1212 = vsel %vm823, %v1199, 0
  %1214 = vmatprep.subr.mxu0 0.0
  %1215 = vmatpush1.msra.mxu0 0.0
  %1216 = vmatprep.subr.mxu0 0.0
  %1217 = vmatpush1.msra.mxu0 0.0
  %1218 = vmatprep.subr.mxu0 0.0
  %1219 = vmatpush1.msra.mxu0 0.0
  %1220 = vmatprep.subr.mxu0 0.0
  %1221 = vmatpush1.msra.mxu0 0.0
  %1222 = vmatprep.subr.mxu0 0.0
  %1223 = vmatpush1.msra.mxu0 0.0
  %1224 = vmatprep.subr.mxu0 0.0
  %1225 = vmatpush1.msra.mxu0 0.0
  %1226 = vmatprep.subr.mxu0 0.0
  %1227 = vmatpush1.msra.mxu0 0.0
  %1228 = vmatprep.subr.mxu0 0.0
  %1229 = vmatpush1.msra.mxu0 0.0
  %1230 = vmatprep.subr.mxu0 0.0
  %1231 = vmatpush1.msra.mxu0 %v1210
  %1232 = vmatprep.subr.mxu0 0.0
  %1233 = vmatpush1.msra.mxu0 %v1209
  %1234 = vmatprep.subr.mxu0 0.0
  %1235 = vmatpush1.msra.mxu0 %v1208
  %1236 = vmatprep.subr.mxu0 0.0
  %1237 = vmatpush1.msra.mxu0 %v1207
  %1238 = vmatprep.subr.mxu0 0.0
  %1239 = vmatpush1.msra.mxu0 %v1206
  %1240 = vmatprep.subr.mxu0 0.0
  %1241 = vmatpush1.msra.mxu0 %v1205
  %1242 = vmatprep.subr.mxu0 0.0
  %1243 = vmatpush1.msra.mxu0 %v1204
  %1244 = vmatprep.subr.mxu0 0.0
  %1245 = vmatpush1.msra.mxu0 %v1203
  %1246 = vmatprep.subr.mxu0 0.0
  %1247 = vmatpush2.msra.mxu0 0.0
  %1248 = vmatprep.subr.mxu0 0.0
  %1249 = vmatpush2.msra.mxu0 0.0
  %1250 = vmatprep.subr.mxu0 0.0
  %1251 = vmatpush2.msra.mxu0 0.0
  %1252 = vmatprep.subr.mxu0 0.0
  %1253 = vmatpush2.msra.mxu0 0.0
  %1254 = vmatprep.subr.mxu0 0.0
  %1255 = vmatpush2.msra.mxu0 0.0
  %1256 = vmatprep.subr.mxu0 0.0
  %1257 = vmatpush2.msra.mxu0 0.0
  %1258 = vmatprep.subr.mxu0 0.0
  %1259 = vmatpush2.msra.mxu0 0.0
  %1260 = vmatprep.subr.mxu0 0.0
  %1261 = vmatpush2.msra.mxu0 0.0
  %1262 = vmatprep.subr.mxu0 0.0
  %1263 = vmatpush2.msra.mxu0 0.0
  %1264 = vmatprep.subr.mxu0 0.0
  %1265 = vmatpush2.msra.mxu0 0.0
  %1266 = vmatprep.subr.mxu0 0.0
  %1267 = vmatpush2.msra.mxu0 0.0
  %1268 = vmatprep.subr.mxu0 0.0
  %1269 = vmatpush2.msra.mxu0 0.0
  %1270 = vmatprep.subr.mxu0 0.0
  %1271 = vmatpush2.msra.mxu0 0.0
  %1272 = vmatprep.subr.mxu0 0.0
  %1273 = vmatpush2.msra.mxu0 0.0
  %1274 = vmatprep.subr.mxu0 0.0
  %1275 = vmatpush2.msra.mxu0 0.0
  %1276 = vmatprep.subr.mxu0 0.0
  %1277 = vmatpush2.msra.mxu0 0.0
  %1278 = vmatprep.mubr.f32.mxu0 0.0
  %1279 = vmatmul.mubr.f32.gmra.mxu0 %v1212
  %v1280 = vpop.f32.mrf.mxu0
  %v1281 = vadd.f32 0.0, %v1280
  %v1282 = vpop.f32.mrf.mxu0
  %1283 = vdwg.mxu0
  %v1284 = vadd.f32 %v1124, %v1281
  %v1286 = vsel %vm823, %v1284, 0
  %1288 = vmatprep.subr.mxu0 0.0
  %1289 = vmatpush1.msra.mxu0 0.0
  %1290 = vmatprep.subr.mxu0 0.0
  %1291 = vmatpush1.msra.mxu0 0.0
  %1292 = vmatprep.subr.mxu0 0.0
  %1293 = vmatpush1.msra.mxu0 0.0
  %1294 = vmatprep.subr.mxu0 0.0
  %1295 = vmatpush1.msra.mxu0 0.0
  %1296 = vmatprep.subr.mxu0 0.0
  %1297 = vmatpush1.msra.mxu0 0.0
  %1298 = vmatprep.subr.mxu0 0.0
  %1299 = vmatpush1.msra.mxu0 0.0
  %1300 = vmatprep.subr.mxu0 0.0
  %1301 = vmatpush1.msra.mxu0 0.0
  %1302 = vmatprep.subr.mxu0 0.0
  %1303 = vmatpush1.msra.mxu0 0.0
  %1304 = vmatprep.subr.mxu0 0.0
  %1305 = vmatpush1.msra.mxu0 %v49
  %1306 = vmatprep.subr.mxu0 0.0
  %1307 = vmatpush1.msra.mxu0 %v48
  %1308 = vmatprep.subr.mxu0 0.0
  %1309 = vmatpush1.msra.mxu0 %v47
  %1310 = vmatprep.subr.mxu0 0.0
  %1311 = vmatpush1.msra.mxu0 %v46
  %1312 = vmatprep.subr.mxu0 0.0
  %1313 = vmatpush1.msra.mxu0 %v45
  %1314 = vmatprep.subr.mxu0 0.0
  %1315 = vmatpush1.msra.mxu0 %v44
  %1316 = vmatprep.subr.mxu0 0.0
  %1317 = vmatpush1.msra.mxu0 %v43
  %1318 = vmatprep.subr.mxu0 0.0
  %1319 = vmatpush1.msra.mxu0 %v42
  %1320 = vmatprep.subr.mxu0 0.0
  %1321 = vmatpush2.msra.mxu0 0.0
  %1322 = vmatprep.subr.mxu0 0.0
  %1323 = vmatpush2.msra.mxu0 0.0
  %1324 = vmatprep.subr.mxu0 0.0
  %1325 = vmatpush2.msra.mxu0 0.0
  %1326 = vmatprep.subr.mxu0 0.0
  %1327 = vmatpush2.msra.mxu0 0.0
  %1328 = vmatprep.subr.mxu0 0.0
  %1329 = vmatpush2.msra.mxu0 0.0
  %1330 = vmatprep.subr.mxu0 0.0
  %1331 = vmatpush2.msra.mxu0 0.0
  %1332 = vmatprep.subr.mxu0 0.0
  %1333 = vmatpush2.msra.mxu0 0.0
  %1334 = vmatprep.subr.mxu0 0.0
  %1335 = vmatpush2.msra.mxu0 0.0
  %1336 = vmatprep.subr.mxu0 0.0
  %1337 = vmatpush2.msra.mxu0 0.0
  %1338 = vmatprep.subr.mxu0 0.0
  %1339 = vmatpush2.msra.mxu0 0.0
  %1340 = vmatprep.subr.mxu0 0.0
  %1341 = vmatpush2.msra.mxu0 0.0
  %1342 = vmatprep.subr.mxu0 0.0
  %1343 = vmatpush2.msra.mxu0 0.0
  %1344 = vmatprep.subr.mxu0 0.0
  %1345 = vmatpush2.msra.mxu0 0.0
  %1346 = vmatprep.subr.mxu0 0.0
  %1347 = vmatpush2.msra.mxu0 0.0
  %1348 = vmatprep.subr.mxu0 0.0
  %1349 = vmatpush2.msra.mxu0 0.0
  %1350 = vmatprep.subr.mxu0 0.0
  %1351 = vmatpush2.msra.mxu0 0.0
  %1352 = vmatprep.mubr.f32.mxu0 0.0
  %1353 = vmatmul.mubr.f32.gmra.mxu0 %v1286
  %v1354 = vpop.f32.mrf.mxu0
  %v1355 = vadd.f32 0.0, %v1354
  %v1356 = vpop.f32.mrf.mxu0
  %1357 = vdwg.mxu0
  %v1358 = vsel %vm823, %v1355, 0.0
  %v1359 = vrot.slane %v1358, 4
  %v1360 = vadd.f32 %v1358, %v1359
  %v1361 = vrot.slane %v1360, 2
  %v1362 = vadd.f32 %v1360, %v1361
  %v1363 = vrot.slane %v1362, 1
  %v1364 = vadd.f32 %v1362, %v1363
  %v1365 = vmul.f32 %v1364, 0.0078125
  %v1366 = vsub.f32 %v1284, %v1365
  %v1367 = vmul.f32 %v1366, %v1366
  %v1369 = vsel %vm823, %v1367, 0
  %1371 = vmatprep.subr.mxu0 0.0
  %1372 = vmatpush1.msra.mxu0 0.0
  %1373 = vmatprep.subr.mxu0 0.0
  %1374 = vmatpush1.msra.mxu0 0.0
  %1375 = vmatprep.subr.mxu0 0.0
  %1376 = vmatpush1.msra.mxu0 0.0
  %1377 = vmatprep.subr.mxu0 0.0
  %1378 = vmatpush1.msra.mxu0 0.0
  %1379 = vmatprep.subr.mxu0 0.0
  %1380 = vmatpush1.msra.mxu0 0.0
  %1381 = vmatprep.subr.mxu0 0.0
  %1382 = vmatpush1.msra.mxu0 0.0
  %1383 = vmatprep.subr.mxu0 0.0
  %1384 = vmatpush1.msra.mxu0 0.0
  %1385 = vmatprep.subr.mxu0 0.0
  %1386 = vmatpush1.msra.mxu0 0.0
  %1387 = vmatprep.subr.mxu0 0.0
  %1388 = vmatpush1.msra.mxu0 %v49
  %1389 = vmatprep.subr.mxu0 0.0
  %1390 = vmatpush1.msra.mxu0 %v48
  %1391 = vmatprep.subr.mxu0 0.0
  %1392 = vmatpush1.msra.mxu0 %v47
  %1393 = vmatprep.subr.mxu0 0.0
  %1394 = vmatpush1.msra.mxu0 %v46
  %1395 = vmatprep.subr.mxu0 0.0
  %1396 = vmatpush1.msra.mxu0 %v45
  %1397 = vmatprep.subr.mxu0 0.0
  %1398 = vmatpush1.msra.mxu0 %v44
  %1399 = vmatprep.subr.mxu0 0.0
  %1400 = vmatpush1.msra.mxu0 %v43
  %1401 = vmatprep.subr.mxu0 0.0
  %1402 = vmatpush1.msra.mxu0 %v42
  %1403 = vmatprep.subr.mxu0 0.0
  %1404 = vmatpush2.msra.mxu0 0.0
  %1405 = vmatprep.subr.mxu0 0.0
  %1406 = vmatpush2.msra.mxu0 0.0
  %1407 = vmatprep.subr.mxu0 0.0
  %1408 = vmatpush2.msra.mxu0 0.0
  %1409 = vmatprep.subr.mxu0 0.0
  %1410 = vmatpush2.msra.mxu0 0.0
  %1411 = vmatprep.subr.mxu0 0.0
  %1412 = vmatpush2.msra.mxu0 0.0
  %1413 = vmatprep.subr.mxu0 0.0
  %1414 = vmatpush2.msra.mxu0 0.0
  %1415 = vmatprep.subr.mxu0 0.0
  %1416 = vmatpush2.msra.mxu0 0.0
  %1417 = vmatprep.subr.mxu0 0.0
  %1418 = vmatpush2.msra.mxu0 0.0
  %1419 = vmatprep.subr.mxu0 0.0
  %1420 = vmatpush2.msra.mxu0 0.0
  %1421 = vmatprep.subr.mxu0 0.0
  %1422 = vmatpush2.msra.mxu0 0.0
  %1423 = vmatprep.subr.mxu0 0.0
  %1424 = vmatpush2.msra.mxu0 0.0
  %1425 = vmatprep.subr.mxu0 0.0
  %1426 = vmatpush2.msra.mxu0 0.0
  %1427 = vmatprep.subr.mxu0 0.0
  %1428 = vmatpush2.msra.mxu0 0.0
  %1429 = vmatprep.subr.mxu0 0.0
  %1430 = vmatpush2.msra.mxu0 0.0
  %1431 = vmatprep.subr.mxu0 0.0
  %1432 = vmatpush2.msra.mxu0 0.0
  %1433 = vmatprep.subr.mxu0 0.0
  %1434 = vmatpush2.msra.mxu0 0.0
  %1435 = vmatprep.mubr.f32.mxu0 0.0
  %1436 = vmatmul.mubr.f32.gmra.mxu0 %v1369
  %v1437 = vpop.f32.mrf.mxu0
  %v1438 = vadd.f32 0.0, %v1437
  %v1439 = vpop.f32.mrf.mxu0
  %1440 = vdwg.mxu0
  %v1441 = vsel %vm823, %v1438, 0.0
  %v1442 = vrot.slane %v1441, 4
  %v1443 = vadd.f32 %v1441, %v1442
  %v1444 = vrot.slane %v1443, 2
  %v1445 = vadd.f32 %v1443, %v1444
  %v1446 = vrot.slane %v1445, 1
  %v1447 = vadd.f32 %v1445, %v1446
  %v1448 = vmul.f32 %v1447, 0.0078125
  %v1449 = vadd.f32 %v1448, 1e-05
  %v1450 = vrsqrt.pop %v1449
  %v1451 = vmul.f32 %v1366, %v1450
  %v1452 = vmul.f32 %v1451, 0.70710677
  %vm1453 = vcmp.ge.f32.partialorder %v1452, 0.0
  %v1454 = vsel %vm1453, 1.0, -1.0
  %v1455 = vand.u32 2147483647, %v1452
  %v1456 = vmul.f32 %v1455, 0.3275911
  %v1457 = vadd.f32 %v1456, 1.0
  %v1458 = vrcp.pop %v1457
  %v1459 = vmul.f32 %v1458, 1.0614054
  %v1460 = vadd.f32 %v1459, -1.4531521
  %v1461 = vmul.f32 %v1460, %v1458
  %v1462 = vadd.f32 %v1461, 1.4214138
  %v1463 = vmul.f32 %v1462, %v1458
  %v1464 = vadd.f32 %v1463, -0.28449672
  %v1465 = vmul.f32 %v1464, %v1458
  %v1466 = vadd.f32 %v1465, 0.2548296
  %v1467 = vmul.f32 %v1466, %v1458
  %v1468 = vsub.f32 0.0, %v1455
  %v1469 = vmul.f32 %v1468, %v1455
  %v1470 = vmul.f32 %v1469, 1.442695
  %v1471 = vpow.pop %v1470
  %v1472 = vmul.f32 %v1467, %v1471
  %v1473 = vsub.f32 1.0, %v1472
  %v1474 = vmul.f32 %v1454, %v1473
  %v1475 = vmul.f32 %v1451, 0.5
  %v1476 = vadd.f32 %v1474, 1.0
  %v1477 = vmul.f32 %v1475, %v1476
  %v1478 = vld [vmem:[%s6] sm:$0xff]
  %v1479 = vld [vmem:[%s6 + $0x8] sm:$0xff]
  %v1480 = vld [vmem:[%s6 + $0x10] sm:$0xff]
  %v1481 = vld [vmem:[%s6 + $0x18] sm:$0xff]
  %v1483 = vsel %vm392, %v1478, 0
  %v1486 = vsel %vm392, %v1479, 0
  %v1489 = vsel %vm392, %v1480, 0
  %v1492 = vsel %vm392, %v1481, 0
  %1494 = vmatprep.subr.mxu0 0.0
  %1495 = vmatpush1.msra.mxu0 0.0
  %1496 = vmatprep.subr.mxu0 0.0
  %1497 = vmatpush1.msra.mxu0 0.0
  %1498 = vmatprep.subr.mxu0 0.0
  %1499 = vmatpush1.msra.mxu0 0.0
  %1500 = vmatprep.subr.mxu0 0.0
  %1501 = vmatpush1.msra.mxu0 0.0
  %1502 = vmatprep.subr.mxu0 0.0
  %1503 = vmatpush1.msra.mxu0 0.0
  %1504 = vmatprep.subr.mxu0 0.0
  %1505 = vmatpush1.msra.mxu0 0.0
  %1506 = vmatprep.subr.mxu0 0.0
  %1507 = vmatpush1.msra.mxu0 0.0
  %1508 = vmatprep.subr.mxu0 0.0
  %1509 = vmatpush1.msra.mxu0 0.0
  %1510 = vmatprep.subr.mxu0 0.0
  %1511 = vmatpush1.msra.mxu0 0.0
  %1512 = vmatprep.subr.mxu0 0.0
  %1513 = vmatpush1.msra.mxu0 0.0
  %1514 = vmatprep.subr.mxu0 0.0
  %1515 = vmatpush1.msra.mxu0 0.0
  %1516 = vmatprep.subr.mxu0 0.0
  %1517 = vmatpush1.msra.mxu0 0.0
  %1518 = vmatprep.subr.mxu0 0.0
  %1519 = vmatpush1.msra.mxu0 0.0
  %1520 = vmatprep.subr.mxu0 0.0
  %1521 = vmatpush1.msra.mxu0 0.0
  %1522 = vmatprep.subr.mxu0 0.0
  %1523 = vmatpush1.msra.mxu0 0.0
  %1524 = vmatprep.subr.mxu0 0.0
  %1525 = vmatpush1.msra.mxu0 %v1477
  %1526 = vmatprep.subr.mxu0 0.0
  %1527 = vmatpush2.msra.mxu0 0.0
  %1528 = vmatprep.subr.mxu0 0.0
  %1529 = vmatpush2.msra.mxu0 0.0
  %1530 = vmatprep.subr.mxu0 0.0
  %1531 = vmatpush2.msra.mxu0 0.0
  %1532 = vmatprep.subr.mxu0 0.0
  %1533 = vmatpush2.msra.mxu0 0.0
  %1534 = vmatprep.subr.mxu0 0.0
  %1535 = vmatpush2.msra.mxu0 0.0
  %1536 = vmatprep.subr.mxu0 0.0
  %1537 = vmatpush2.msra.mxu0 0.0
  %1538 = vmatprep.subr.mxu0 0.0
  %1539 = vmatpush2.msra.mxu0 0.0
  %1540 = vmatprep.subr.mxu0 0.0
  %1541 = vmatpush2.msra.mxu0 0.0
  %1542 = vmatprep.subr.mxu0 0.0
  %1543 = vmatpush2.msra.mxu0 0.0
  %1544 = vmatprep.subr.mxu0 0.0
  %1545 = vmatpush2.msra.mxu0 0.0
  %1546 = vmatprep.subr.mxu0 0.0
  %1547 = vmatpush2.msra.mxu0 0.0
  %1548 = vmatprep.subr.mxu0 0.0
  %1549 = vmatpush2.msra.mxu0 0.0
  %1550 = vmatprep.subr.mxu0 0.0
  %1551 = vmatpush2.msra.mxu0 0.0
  %1552 = vmatprep.subr.mxu0 0.0
  %1553 = vmatpush2.msra.mxu0 0.0
  %1554 = vmatprep.subr.mxu0 0.0
  %1555 = vmatpush2.msra.mxu0 0.0
  %1556 = vmatprep.subr.mxu0 0.0
  %1557 = vmatpush2.msra.mxu0 0.0
  %1558 = vmatprep.mubr.f32.mxu0 0.0
  %1559 = vmatmul.mubr.f32.gmra.mxu0 %v1483
  %v1560 = vpop.f32.mrf.mxu0
  %v1561 = vadd.f32 0.0, %v1560
  %v1562 = vpop.f32.mrf.mxu0
  %1563 = vmatprep.mubr.f32.mxu0 0.0
  %1564 = vmatmul.mubr.f32.gmra.mxu0 %v1486
  %v1565 = vpop.f32.mrf.mxu0
  %v1566 = vadd.f32 0.0, %v1565
  %v1567 = vpop.f32.mrf.mxu0
  %1568 = vmatprep.mubr.f32.mxu0 0.0
  %1569 = vmatmul.mubr.f32.gmra.mxu0 %v1489
  %v1570 = vpop.f32.mrf.mxu0
  %v1571 = vadd.f32 0.0, %v1570
  %v1572 = vpop.f32.mrf.mxu0
  %1573 = vmatprep.mubr.f32.mxu0 0.0
  %1574 = vmatmul.mubr.f32.gmra.mxu0 %v1492
  %v1575 = vpop.f32.mrf.mxu0
  %v1576 = vadd.f32 0.0, %v1575
  %v1577 = vpop.f32.mrf.mxu0
  %1578 = vdwg.mxu0
  %v1579 = vsel %vm823, %v1561, 0.0
  %1580 = vadd.xlane.f32.xlu0 %v1579
  %v1581 = vpop.xlane.xlu0 %1580
  %v1582 = vsel %vm823, %v1566, 0.0
  %1583 = vadd.xlane.f32.xlu0 %v1582
  %v1584 = vpop.xlane.xlu0 %1583
  %v1585 = vsel %vm823, %v1571, 0.0
  %1586 = vadd.xlane.f32.xlu0 %v1585
  %v1587 = vpop.xlane.xlu0 %1586
  %v1588 = vsel %vm823, %v1576, 0.0
  %1589 = vadd.xlane.f32.xlu0 %v1588
  %v1590 = vpop.xlane.xlu0 %1589
  %v1591 = vadd.f32 %v1581, %v1587
  %v1592 = vadd.f32 %v1584, %v1590
  %v1593 = vmul.f32 %v1591, 0.0078125
  %v1594 = vmul.f32 %v1592, 0.0078125
  %1596 = vset.pattern.permute.xlu0 0
  %1597 = vperm.xlu0 %1596, %v1593
  %v1598 = vpop.permute.xlu0 %1597
  %1601 = vset.pattern.permute.xlu0 0
  %1602 = vperm.xlu0 %1601, %v1594
  %v1603 = vpop.permute.xlu0 %1602
  %v1605 = vsub.f32 %v1561, %v1598
  %v1606 = vsub.f32 %v1566, %v1603
  %v1607 = vsub.f32 %v1571, %v1598
  %v1608 = vsub.f32 %v1576, %v1603
  %v1609 = vmul.f32 %v1605, %v1605
  %v1610 = vmul.f32 %v1606, %v1606
  %v1611 = vmul.f32 %v1607, %v1607
  %v1612 = vmul.f32 %v1608, %v1608
  %v1613 = vsel %vm823, %v1609, 0.0
  %1614 = vadd.xlane.f32.xlu0 %v1613
  %v1615 = vpop.xlane.xlu0 %1614
  %v1616 = vsel %vm823, %v1610, 0.0
  %1617 = vadd.xlane.f32.xlu0 %v1616
  %v1618 = vpop.xlane.xlu0 %1617
  %v1619 = vsel %vm823, %v1611, 0.0
  %1620 = vadd.xlane.f32.xlu0 %v1619
  %v1621 = vpop.xlane.xlu0 %1620
  %v1622 = vsel %vm823, %v1612, 0.0
  %1623 = vadd.xlane.f32.xlu0 %v1622
  %v1624 = vpop.xlane.xlu0 %1623
  %v1625 = vadd.f32 %v1615, %v1621
  %v1626 = vadd.f32 %v1618, %v1624
  %v1627 = vmul.f32 %v1625, 0.0078125
  %v1628 = vmul.f32 %v1626, 0.0078125
  %v1629 = vadd.f32 %v1627, 1e-05
  %v1630 = vadd.f32 %v1628, 1e-05
  %v1631 = vrsqrt.pop %v1629
  %v1632 = vrsqrt.pop %v1630
  %1634 = vset.pattern.permute.xlu0 0
  %1635 = vperm.xlu0 %1634, %v1631
  %v1636 = vpop.permute.xlu0 %1635
  %1639 = vset.pattern.permute.xlu0 0
  %1640 = vperm.xlu0 %1639, %v1632
  %v1641 = vpop.permute.xlu0 %1640
  %v1643 = vmul.f32 %v1605, %v1636
  %v1644 = vmul.f32 %v1606, %v1641
  %v1645 = vmul.f32 %v1607, %v1636
  %v1646 = vmul.f32 %v1608, %v1641
  %v1647 = vmul.f32 %v1643, 0.70710677
  %v1648 = vmul.f32 %v1644, 0.70710677
  %v1649 = vmul.f32 %v1645, 0.70710677
  %v1650 = vmul.f32 %v1646, 0.70710677
  %vm1651 = vcmp.ge.f32.partialorder %v1647, 0.0
  %vm1652 = vcmp.ge.f32.partialorder %v1648, 0.0
  %vm1653 = vcmp.ge.f32.partialorder %v1649, 0.0
  %vm1654 = vcmp.ge.f32.partialorder %v1650, 0.0
  %v1655 = vsel %vm1651, 1.0, -1.0
  %v1656 = vsel %vm1652, 1.0, -1.0
  %v1657 = vsel %vm1653, 1.0, -1.0
  %v1658 = vsel %vm1654, 1.0, -1.0
  %v1659 = vand.u32 2147483647, %v1647
  %v1660 = vand.u32 2147483647, %v1648
  %v1661 = vand.u32 2147483647, %v1649
  %v1662 = vand.u32 2147483647, %v1650
  %v1663 = vmul.f32 %v1659, 0.3275911
  %v1664 = vmul.f32 %v1660, 0.3275911
  %v1665 = vmul.f32 %v1661, 0.3275911
  %v1666 = vmul.f32 %v1662, 0.3275911
  %v1667 = vadd.f32 %v1663, 1.0
  %v1668 = vadd.f32 %v1664, 1.0
  %v1669 = vadd.f32 %v1665, 1.0
  %v1670 = vadd.f32 %v1666, 1.0
  %v1671 = vrcp.pop %v1667
  %v1672 = vrcp.pop %v1668
  %v1673 = vrcp.pop %v1669
  %v1674 = vrcp.pop %v1670
  %v1675 = vmul.f32 %v1671, 1.0614054
  %v1676 = vmul.f32 %v1672, 1.0614054
  %v1677 = vmul.f32 %v1673, 1.0614054
  %v1678 = vmul.f32 %v1674, 1.0614054
  %v1679 = vadd.f32 %v1675, -1.4531521
  %v1680 = vadd.f32 %v1676, -1.4531521
  %v1681 = vadd.f32 %v1677, -1.4531521
  %v1682 = vadd.f32 %v1678, -1.4531521
  %v1683 = vmul.f32 %v1679, %v1671
  %v1684 = vmul.f32 %v1680, %v1672
  %v1685 = vmul.f32 %v1681, %v1673
  %v1686 = vmul.f32 %v1682, %v1674
  %v1687 = vadd.f32 %v1683, 1.4214138
  %v1688 = vadd.f32 %v1684, 1.4214138
  %v1689 = vadd.f32 %v1685, 1.4214138
  %v1690 = vadd.f32 %v1686, 1.4214138
  %v1691 = vmul.f32 %v1687, %v1671
  %v1692 = vmul.f32 %v1688, %v1672
  %v1693 = vmul.f32 %v1689, %v1673
  %v1694 = vmul.f32 %v1690, %v1674
  %v1695 = vadd.f32 %v1691, -0.28449672
  %v1696 = vadd.f32 %v1692, -0.28449672
  %v1697 = vadd.f32 %v1693, -0.28449672
  %v1698 = vadd.f32 %v1694, -0.28449672
  %v1699 = vmul.f32 %v1695, %v1671
  %v1700 = vmul.f32 %v1696, %v1672
  %v1701 = vmul.f32 %v1697, %v1673
  %v1702 = vmul.f32 %v1698, %v1674
  %v1703 = vadd.f32 %v1699, 0.2548296
  %v1704 = vadd.f32 %v1700, 0.2548296
  %v1705 = vadd.f32 %v1701, 0.2548296
  %v1706 = vadd.f32 %v1702, 0.2548296
  %v1707 = vmul.f32 %v1703, %v1671
  %v1708 = vmul.f32 %v1704, %v1672
  %v1709 = vmul.f32 %v1705, %v1673
  %v1710 = vmul.f32 %v1706, %v1674
  %v1711 = vsub.f32 0.0, %v1659
  %v1712 = vsub.f32 0.0, %v1660
  %v1713 = vsub.f32 0.0, %v1661
  %v1714 = vsub.f32 0.0, %v1662
  %v1715 = vmul.f32 %v1711, %v1659
  %v1716 = vmul.f32 %v1712, %v1660
  %v1717 = vmul.f32 %v1713, %v1661
  %v1718 = vmul.f32 %v1714, %v1662
  %v1719 = vmul.f32 %v1715, 1.442695
  %v1720 = vpow.pop %v1719
  %v1721 = vmul.f32 %v1716, 1.442695
  %v1722 = vpow.pop %v1721
  %v1723 = vmul.f32 %v1717, 1.442695
  %v1724 = vpow.pop %v1723
  %v1725 = vmul.f32 %v1718, 1.442695
  %v1726 = vpow.pop %v1725
  %v1727 = vmul.f32 %v1707, %v1720
  %v1728 = vmul.f32 %v1708, %v1722
  %v1729 = vmul.f32 %v1709, %v1724
  %v1730 = vmul.f32 %v1710, %v1726
  %v1731 = vsub.f32 1.0, %v1727
  %v1732 = vsub.f32 1.0, %v1728
  %v1733 = vsub.f32 1.0, %v1729
  %v1734 = vsub.f32 1.0, %v1730
  %v1735 = vmul.f32 %v1655, %v1731
  %v1736 = vmul.f32 %v1656, %v1732
  %v1737 = vmul.f32 %v1657, %v1733
  %v1738 = vmul.f32 %v1658, %v1734
  %v1739 = vmul.f32 %v1643, 0.5
  %v1740 = vmul.f32 %v1644, 0.5
  %v1741 = vmul.f32 %v1645, 0.5
  %v1742 = vmul.f32 %v1646, 0.5
  %v1743 = vadd.f32 %v1735, 1.0
  %v1744 = vadd.f32 %v1736, 1.0
  %v1745 = vadd.f32 %v1737, 1.0
  %v1746 = vadd.f32 %v1738, 1.0
  %v1747 = vmul.f32 %v1739, %v1743
  %v1748 = vmul.f32 %v1740, %v1744
  %v1749 = vmul.f32 %v1741, %v1745
  %v1750 = vmul.f32 %v1742, %v1746
  %v1751 = vld [vmem:[%s7] sm:$0xff]
  %v1753 = vsel %vm819, %v1751, 0
  %1755 = vmatprep.subr.mxu0 0.0
  %1756 = vmatpush1.msra.mxu0 0.0
  %1757 = vmatprep.subr.mxu0 0.0
  %1758 = vmatpush1.msra.mxu0 0.0
  %1759 = vmatprep.subr.mxu0 0.0
  %1760 = vmatpush1.msra.mxu0 0.0
  %1761 = vmatprep.subr.mxu0 0.0
  %1762 = vmatpush1.msra.mxu0 0.0
  %1763 = vmatprep.subr.mxu0 0.0
  %1764 = vmatpush1.msra.mxu0 0.0
  %1765 = vmatprep.subr.mxu0 0.0
  %1766 = vmatpush1.msra.mxu0 0.0
  %1767 = vmatprep.subr.mxu0 0.0
  %1768 = vmatpush1.msra.mxu0 0.0
  %1769 = vmatprep.subr.mxu0 0.0
  %1770 = vmatpush1.msra.mxu0 0.0
  %1771 = vmatprep.subr.mxu0 0.0
  %1772 = vmatpush1.msra.mxu0 0.0
  %1773 = vmatprep.subr.mxu0 0.0
  %1774 = vmatpush1.msra.mxu0 0.0
  %1775 = vmatprep.subr.mxu0 0.0
  %1776 = vmatpush1.msra.mxu0 0.0
  %1777 = vmatprep.subr.mxu0 0.0
  %1778 = vmatpush1.msra.mxu0 0.0
  %1779 = vmatprep.subr.mxu0 0.0
  %1780 = vmatpush1.msra.mxu0 %v1750
  %1781 = vmatprep.subr.mxu0 0.0
  %1782 = vmatpush1.msra.mxu0 %v1749
  %1783 = vmatprep.subr.mxu0 0.0
  %1784 = vmatpush1.msra.mxu0 %v1748
  %1785 = vmatprep.subr.mxu0 0.0
  %1786 = vmatpush1.msra.mxu0 %v1747
  %1787 = vmatprep.subr.mxu0 0.0
  %1788 = vmatpush2.msra.mxu0 0.0
  %1789 = vmatprep.subr.mxu0 0.0
  %1790 = vmatpush2.msra.mxu0 0.0
  %1791 = vmatprep.subr.mxu0 0.0
  %1792 = vmatpush2.msra.mxu0 0.0
  %1793 = vmatprep.subr.mxu0 0.0
  %1794 = vmatpush2.msra.mxu0 0.0
  %1795 = vmatprep.subr.mxu0 0.0
  %1796 = vmatpush2.msra.mxu0 0.0
  %1797 = vmatprep.subr.mxu0 0.0
  %1798 = vmatpush2.msra.mxu0 0.0
  %1799 = vmatprep.subr.mxu0 0.0
  %1800 = vmatpush2.msra.mxu0 0.0
  %1801 = vmatprep.subr.mxu0 0.0
  %1802 = vmatpush2.msra.mxu0 0.0
  %1803 = vmatprep.subr.mxu0 0.0
  %1804 = vmatpush2.msra.mxu0 0.0
  %1805 = vmatprep.subr.mxu0 0.0
  %1806 = vmatpush2.msra.mxu0 0.0
  %1807 = vmatprep.subr.mxu0 0.0
  %1808 = vmatpush2.msra.mxu0 0.0
  %1809 = vmatprep.subr.mxu0 0.0
  %1810 = vmatpush2.msra.mxu0 0.0
  %1811 = vmatprep.subr.mxu0 0.0
  %1812 = vmatpush2.msra.mxu0 0.0
  %1813 = vmatprep.subr.mxu0 0.0
  %1814 = vmatpush2.msra.mxu0 0.0
  %1815 = vmatprep.subr.mxu0 0.0
  %1816 = vmatpush2.msra.mxu0 0.0
  %1817 = vmatprep.subr.mxu0 0.0
  %1818 = vmatpush2.msra.mxu0 0.0
  %1819 = vmatprep.mubr.f32.mxu0 0.0
  %1820 = vmatmul.mubr.f32.gmra.mxu0 %v1753
  %v1821 = vpop.f32.mrf.mxu0
  %v1822 = vadd.f32 0.0, %v1821
  %v1823 = vpop.f32.mrf.mxu0
  %1824 = vdwg.mxu0
  %v1825 = vsel %vm823, %v1822, 0.0
  %1826 = vadd.xlane.f32.xlu0 %v1825
  %v1827 = vpop.xlane.xlu0 %1826
  %v1829 = vrot.slane %v1827, 4
  %v1831 = vadd.f32 %v1827, %v1829
  %v1832 = vmul.f32 %v1831, 0.0078125
  %v1834 = vrot.slane %v1832, 4
  %v1836 = vsel %vm835, %v1832, %v1834
  %1838 = vset.pattern.permute.xlu0 0
  %1839 = vperm.xlu0 %1838, %v1836
  %v1840 = vpop.permute.xlu0 %1839
  %v1842 = vsub.f32 %v1822, %v1840
  %v1843 = vmul.f32 %v1842, %v1842
  %v1844 = vsel %vm823, %v1843, 0.0
  %1845 = vadd.xlane.f32.xlu0 %v1844
  %v1846 = vpop.xlane.xlu0 %1845
  %v1848 = vrot.slane %v1846, 4
  %v1850 = vadd.f32 %v1846, %v1848
  %v1851 = vmul.f32 %v1850, 0.0078125
  %v1852 = vadd.f32 %v1851, 1e-05
  %v1853 = vrsqrt.pop %v1852
  %v1855 = vrot.slane %v1853, 4
  %v1857 = vsel %vm835, %v1853, %v1855
  %1859 = vset.pattern.permute.xlu0 0
  %1860 = vperm.xlu0 %1859, %v1857
  %v1861 = vpop.permute.xlu0 %1860
  %v1863 = vmul.f32 %v1842, %v1861
  %v1864 = vld [vmem:[%s8] sm:$0x3f]
  %v1866 = vsel %vm51, %v1864, 0
  %1868 = vmatprep.subr.mxu0 0.0
  %1869 = vmatpush1.msra.mxu0 0.0
  %1870 = vmatprep.subr.mxu0 0.0
  %1871 = vmatpush1.msra.mxu0 0.0
  %1872 = vmatprep.subr.mxu0 0.0
  %1873 = vmatpush1.msra.mxu0 0.0
  %1874 = vmatprep.subr.mxu0 0.0
  %1875 = vmatpush1.msra.mxu0 0.0
  %1876 = vmatprep.subr.mxu0 0.0
  %1877 = vmatpush1.msra.mxu0 0.0
  %1878 = vmatprep.subr.mxu0 0.0
  %1879 = vmatpush1.msra.mxu0 0.0
  %1880 = vmatprep.subr.mxu0 0.0
  %1881 = vmatpush1.msra.mxu0 0.0
  %1882 = vmatprep.subr.mxu0 0.0
  %1883 = vmatpush1.msra.mxu0 0.0
  %1884 = vmatprep.subr.mxu0 0.0
  %1885 = vmatpush1.msra.mxu0 0.0
  %1886 = vmatprep.subr.mxu0 0.0
  %1887 = vmatpush1.msra.mxu0 0.0
  %1888 = vmatprep.subr.mxu0 0.0
  %1889 = vmatpush1.msra.mxu0 0.0
  %1890 = vmatprep.subr.mxu0 0.0
  %1891 = vmatpush1.msra.mxu0 0.0
  %1892 = vmatprep.subr.mxu0 0.0
  %1893 = vmatpush1.msra.mxu0 0.0
  %1894 = vmatprep.subr.mxu0 0.0
  %1895 = vmatpush1.msra.mxu0 0.0
  %1896 = vmatprep.subr.mxu0 0.0
  %1897 = vmatpush1.msra.mxu0 0.0
  %1898 = vmatprep.subr.mxu0 0.0
  %1899 = vmatpush1.msra.mxu0 %v57
  %1900 = vmatprep.subr.mxu0 0.0
  %1901 = vmatpush2.msra.mxu0 0.0
  %1902 = vmatprep.subr.mxu0 0.0
  %1903 = vmatpush2.msra.mxu0 0.0
  %1904 = vmatprep.subr.mxu0 0.0
  %1905 = vmatpush2.msra.mxu0 0.0
  %1906 = vmatprep.subr.mxu0 0.0
  %1907 = vmatpush2.msra.mxu0 0.0
  %1908 = vmatprep.subr.mxu0 0.0
  %1909 = vmatpush2.msra.mxu0 0.0
  %1910 = vmatprep.subr.mxu0 0.0
  %1911 = vmatpush2.msra.mxu0 0.0
  %1912 = vmatprep.subr.mxu0 0.0
  %1913 = vmatpush2.msra.mxu0 0.0
  %1914 = vmatprep.subr.mxu0 0.0
  %1915 = vmatpush2.msra.mxu0 0.0
  %1916 = vmatprep.subr.mxu0 0.0
  %1917 = vmatpush2.msra.mxu0 0.0
  %1918 = vmatprep.subr.mxu0 0.0
  %1919 = vmatpush2.msra.mxu0 0.0
  %1920 = vmatprep.subr.mxu0 0.0
  %1921 = vmatpush2.msra.mxu0 0.0
  %1922 = vmatprep.subr.mxu0 0.0
  %1923 = vmatpush2.msra.mxu0 0.0
  %1924 = vmatprep.subr.mxu0 0.0
  %1925 = vmatpush2.msra.mxu0 0.0
  %1926 = vmatprep.subr.mxu0 0.0
  %1927 = vmatpush2.msra.mxu0 0.0
  %1928 = vmatprep.subr.mxu0 0.0
  %1929 = vmatpush2.msra.mxu0 0.0
  %1930 = vmatprep.subr.mxu0 0.0
  %1931 = vmatpush2.msra.mxu0 0.0
  %1932 = vmatprep.mubr.f32.mxu0 0.0
  %1933 = vmatmul.mubr.f32.gmra.mxu0 %v1866
  %v1934 = vpop.f32.mrf.mxu0
  %v1935 = vadd.f32 0.0, %v1934
  %v1936 = vpop.f32.mrf.mxu0
  %1937 = vdwg.mxu0
  %v1938 = vld [vmem:[%s9] sm:$0xff]
  %v1939 = vld [vmem:[%s9 + $0x8] sm:$0xff]
  %v1940 = vld [vmem:[%s9 + $0x10] sm:$0xff]
  %v1941 = vld [vmem:[%s9 + $0x18] sm:$0xff]
  %v1942 = vld [vmem:[%s9 + $0x20] sm:$0xff]
  %v1943 = vld [vmem:[%s9 + $0x28] sm:$0xff]
  %v1944 = vld [vmem:[%s9 + $0x30] sm:$0xff]
  %v1945 = vld [vmem:[%s9 + $0x38] sm:$0xff]
  %s1946 = scalar_lea.vmem %s9, 64
  %v1947 = vld [vmem:[%s1946] sm:$0xff]
  %v1948 = vld [vmem:[%s1946 + $0x8] sm:$0xff]
  %v1949 = vld [vmem:[%s1946 + $0x10] sm:$0xff]
  %v1950 = vld [vmem:[%s1946 + $0x18] sm:$0xff]
  %v1951 = vld [vmem:[%s1946 + $0x20] sm:$0xff]
  %v1952 = vld [vmem:[%s1946 + $0x28] sm:$0xff]
  %v1953 = vld [vmem:[%s1946 + $0x30] sm:$0xff]
  %v1954 = vld [vmem:[%s1946 + $0x38] sm:$0xff]
  %v1955 = vsel %vm823, %v41, 0
  %1957 = vmatprep.subr.mxu0 0.0
  %1958 = vmatpush1.msra.mxu0 0.0
  %1959 = vmatprep.subr.mxu0 0.0
  %1960 = vmatpush1.msra.mxu0 0.0
  %1961 = vmatprep.subr.mxu0 0.0
  %1962 = vmatpush1.msra.mxu0 0.0
  %1963 = vmatprep.subr.mxu0 0.0
  %1964 = vmatpush1.msra.mxu0 0.0
  %1965 = vmatprep.subr.mxu0 0.0
  %1966 = vmatpush1.msra.mxu0 0.0
  %1967 = vmatprep.subr.mxu0 0.0
  %1968 = vmatpush1.msra.mxu0 0.0
  %1969 = vmatprep.subr.mxu0 0.0
  %1970 = vmatpush1.msra.mxu0 0.0
  %1971 = vmatprep.subr.mxu0 0.0
  %1972 = vmatpush1.msra.mxu0 0.0
  %1973 = vmatprep.subr.mxu0 0.0
  %1974 = vmatpush1.msra.mxu0 %v1954
  %1975 = vmatprep.subr.mxu0 0.0
  %1976 = vmatpush1.msra.mxu0 %v1953
  %1977 = vmatprep.subr.mxu0 0.0
  %1978 = vmatpush1.msra.mxu0 %v1952
  %1979 = vmatprep.subr.mxu0 0.0
  %1980 = vmatpush1.msra.mxu0 %v1951
  %1981 = vmatprep.subr.mxu0 0.0
  %1982 = vmatpush1.msra.mxu0 %v1950
  %1983 = vmatprep.subr.mxu0 0.0
  %1984 = vmatpush1.msra.mxu0 %v1949
  %1985 = vmatprep.subr.mxu0 0.0
  %1986 = vmatpush1.msra.mxu0 %v1948
  %1987 = vmatprep.subr.mxu0 0.0
  %1988 = vmatpush1.msra.mxu0 %v1947
  %1989 = vmatprep.subr.mxu0 0.0
  %1990 = vmatpush2.msra.mxu0 0.0
  %1991 = vmatprep.subr.mxu0 0.0
  %1992 = vmatpush2.msra.mxu0 0.0
  %1993 = vmatprep.subr.mxu0 0.0
  %1994 = vmatpush2.msra.mxu0 0.0
  %1995 = vmatprep.subr.mxu0 0.0
  %1996 = vmatpush2.msra.mxu0 0.0
  %1997 = vmatprep.subr.mxu0 0.0
  %1998 = vmatpush2.msra.mxu0 0.0
  %1999 = vmatprep.subr.mxu0 0.0
  %2000 = vmatpush2.msra.mxu0 0.0
  %2001 = vmatprep.subr.mxu0 0.0
  %2002 = vmatpush2.msra.mxu0 0.0
  %2003 = vmatprep.subr.mxu0 0.0
  %2004 = vmatpush2.msra.mxu0 0.0
  %2005 = vmatprep.subr.mxu0 0.0
  %2006 = vmatpush2.msra.mxu0 0.0
  %2007 = vmatprep.subr.mxu0 0.0
  %2008 = vmatpush2.msra.mxu0 0.0
  %2009 = vmatprep.subr.mxu0 0.0
  %2010 = vmatpush2.msra.mxu0 0.0
  %2011 = vmatprep.subr.mxu0 0.0
  %2012 = vmatpush2.msra.mxu0 0.0
  %2013 = vmatprep.subr.mxu0 0.0
  %2014 = vmatpush2.msra.mxu0 0.0
  %2015 = vmatprep.subr.mxu0 0.0
  %2016 = vmatpush2.msra.mxu0 0.0
  %2017 = vmatprep.subr.mxu0 0.0
  %2018 = vmatpush2.msra.mxu0 0.0
  %2019 = vmatprep.subr.mxu0 0.0
  %2020 = vmatpush2.msra.mxu0 0.0
  %2021 = vmatprep.mubr.f32.mxu0 0.0
  %2022 = vmatmul.mubr.f32.gmra.mxu0 %v1955
  %v2023 = vpop.f32.mrf.mxu0
  %v2024 = vadd.f32 0.0, %v2023
  %v2025 = vpop.f32.mrf.mxu0
  %2026 = vdwg.mxu0
  %v2028 = vsel %vm823, %v1935, 0
  %2030 = vmatprep.subr.mxu0 0.0
  %2031 = vmatpush1.msra.mxu0 0.0
  %2032 = vmatprep.subr.mxu0 0.0
  %2033 = vmatpush1.msra.mxu0 0.0
  %2034 = vmatprep.subr.mxu0 0.0
  %2035 = vmatpush1.msra.mxu0 0.0
  %2036 = vmatprep.subr.mxu0 0.0
  %2037 = vmatpush1.msra.mxu0 0.0
  %2038 = vmatprep.subr.mxu0 0.0
  %2039 = vmatpush1.msra.mxu0 0.0
  %2040 = vmatprep.subr.mxu0 0.0
  %2041 = vmatpush1.msra.mxu0 0.0
  %2042 = vmatprep.subr.mxu0 0.0
  %2043 = vmatpush1.msra.mxu0 0.0
  %2044 = vmatprep.subr.mxu0 0.0
  %2045 = vmatpush1.msra.mxu0 0.0
  %2046 = vmatprep.subr.mxu0 0.0
  %2047 = vmatpush1.msra.mxu0 %v1945
  %2048 = vmatprep.subr.mxu0 0.0
  %2049 = vmatpush1.msra.mxu0 %v1944
  %2050 = vmatprep.subr.mxu0 0.0
  %2051 = vmatpush1.msra.mxu0 %v1943
  %2052 = vmatprep.subr.mxu0 0.0
  %2053 = vmatpush1.msra.mxu0 %v1942
  %2054 = vmatprep.subr.mxu0 0.0
  %2055 = vmatpush1.msra.mxu0 %v1941
  %2056 = vmatprep.subr.mxu0 0.0
  %2057 = vmatpush1.msra.mxu0 %v1940
  %2058 = vmatprep.subr.mxu0 0.0
  %2059 = vmatpush1.msra.mxu0 %v1939
  %2060 = vmatprep.subr.mxu0 0.0
  %2061 = vmatpush1.msra.mxu0 %v1938
  %2062 = vmatprep.subr.mxu0 0.0
  %2063 = vmatpush2.msra.mxu0 0.0
  %2064 = vmatprep.subr.mxu0 0.0
  %2065 = vmatpush2.msra.mxu0 0.0
  %2066 = vmatprep.subr.mxu0 0.0
  %2067 = vmatpush2.msra.mxu0 0.0
  %2068 = vmatprep.subr.mxu0 0.0
  %2069 = vmatpush2.msra.mxu0 0.0
  %2070 = vmatprep.subr.mxu0 0.0
  %2071 = vmatpush2.msra.mxu0 0.0
  %2072 = vmatprep.subr.mxu0 0.0
  %2073 = vmatpush2.msra.mxu0 0.0
  %2074 = vmatprep.subr.mxu0 0.0
  %2075 = vmatpush2.msra.mxu0 0.0
  %2076 = vmatprep.subr.mxu0 0.0
  %2077 = vmatpush2.msra.mxu0 0.0
  %2078 = vmatprep.subr.mxu0 0.0
  %2079 = vmatpush2.msra.mxu0 0.0
  %2080 = vmatprep.subr.mxu0 0.0
  %2081 = vmatpush2.msra.mxu0 0.0
  %2082 = vmatprep.subr.mxu0 0.0
  %2083 = vmatpush2.msra.mxu0 0.0
  %2084 = vmatprep.subr.mxu0 0.0
  %2085 = vmatpush2.msra.mxu0 0.0
  %2086 = vmatprep.subr.mxu0 0.0
  %2087 = vmatpush2.msra.mxu0 0.0
  %2088 = vmatprep.subr.mxu0 0.0
  %2089 = vmatpush2.msra.mxu0 0.0
  %2090 = vmatprep.subr.mxu0 0.0
  %2091 = vmatpush2.msra.mxu0 0.0
  %2092 = vmatprep.subr.mxu0 0.0
  %2093 = vmatpush2.msra.mxu0 0.0
  %2094 = vmatprep.mubr.f32.mxu0 0.0
  %2095 = vmatmul.mubr.f32.gmra.mxu0 %v2028
  %v2096 = vpop.f32.mrf.mxu0
  %v2097 = vadd.f32 %v2024, %v2096
  %v2098 = vpop.f32.mrf.mxu0
  %2099 = vdwg.mxu0
  %s2100 = scalar_lea.vmem %s8, 16
  %v2101 = vld [vmem:[%s2100] sm:$0x3f]
  %v2103 = vsel %vm51, %v2101, 0
  %2105 = vmatprep.subr.mxu0 0.0
  %2106 = vmatpush1.msra.mxu0 0.0
  %2107 = vmatprep.subr.mxu0 0.0
  %2108 = vmatpush1.msra.mxu0 0.0
  %2109 = vmatprep.subr.mxu0 0.0
  %2110 = vmatpush1.msra.mxu0 0.0
  %2111 = vmatprep.subr.mxu0 0.0
  %2112 = vmatpush1.msra.mxu0 0.0
  %2113 = vmatprep.subr.mxu0 0.0
  %2114 = vmatpush1.msra.mxu0 0.0
  %2115 = vmatprep.subr.mxu0 0.0
  %2116 = vmatpush1.msra.mxu0 0.0
  %2117 = vmatprep.subr.mxu0 0.0
  %2118 = vmatpush1.msra.mxu0 0.0
  %2119 = vmatprep.subr.mxu0 0.0
  %2120 = vmatpush1.msra.mxu0 0.0
  %2121 = vmatprep.subr.mxu0 0.0
  %2122 = vmatpush1.msra.mxu0 0.0
  %2123 = vmatprep.subr.mxu0 0.0
  %2124 = vmatpush1.msra.mxu0 0.0
  %2125 = vmatprep.subr.mxu0 0.0
  %2126 = vmatpush1.msra.mxu0 0.0
  %2127 = vmatprep.subr.mxu0 0.0
  %2128 = vmatpush1.msra.mxu0 0.0
  %2129 = vmatprep.subr.mxu0 0.0
  %2130 = vmatpush1.msra.mxu0 0.0
  %2131 = vmatprep.subr.mxu0 0.0
  %2132 = vmatpush1.msra.mxu0 0.0
  %2133 = vmatprep.subr.mxu0 0.0
  %2134 = vmatpush1.msra.mxu0 0.0
  %2135 = vmatprep.subr.mxu0 0.0
  %2136 = vmatpush1.msra.mxu0 %v57
  %2137 = vmatprep.subr.mxu0 0.0
  %2138 = vmatpush2.msra.mxu0 0.0
  %2139 = vmatprep.subr.mxu0 0.0
  %2140 = vmatpush2.msra.mxu0 0.0
  %2141 = vmatprep.subr.mxu0 0.0
  %2142 = vmatpush2.msra.mxu0 0.0
  %2143 = vmatprep.subr.mxu0 0.0
  %2144 = vmatpush2.msra.mxu0 0.0
  %2145 = vmatprep.subr.mxu0 0.0
  %2146 = vmatpush2.msra.mxu0 0.0
  %2147 = vmatprep.subr.mxu0 0.0
  %2148 = vmatpush2.msra.mxu0 0.0
  %2149 = vmatprep.subr.mxu0 0.0
  %2150 = vmatpush2.msra.mxu0 0.0
  %2151 = vmatprep.subr.mxu0 0.0
  %2152 = vmatpush2.msra.mxu0 0.0
  %2153 = vmatprep.subr.mxu0 0.0
  %2154 = vmatpush2.msra.mxu0 0.0
  %2155 = vmatprep.subr.mxu0 0.0
  %2156 = vmatpush2.msra.mxu0 0.0
  %2157 = vmatprep.subr.mxu0 0.0
  %2158 = vmatpush2.msra.mxu0 0.0
  %2159 = vmatprep.subr.mxu0 0.0
  %2160 = vmatpush2.msra.mxu0 0.0
  %2161 = vmatprep.subr.mxu0 0.0
  %2162 = vmatpush2.msra.mxu0 0.0
  %2163 = vmatprep.subr.mxu0 0.0
  %2164 = vmatpush2.msra.mxu0 0.0
  %2165 = vmatprep.subr.mxu0 0.0
  %2166 = vmatpush2.msra.mxu0 0.0
  %2167 = vmatprep.subr.mxu0 0.0
  %2168 = vmatpush2.msra.mxu0 0.0
  %2169 = vmatprep.mubr.f32.mxu0 0.0
  %2170 = vmatmul.mubr.f32.gmra.mxu0 %v2103
  %v2171 = vpop.f32.mrf.mxu0
  %v2172 = vadd.f32 0.0, %v2171
  %v2173 = vpop.f32.mrf.mxu0
  %2174 = vdwg.mxu0
  %s2175 = scalar_lea.vmem %s9, 128
  %v2176 = vld [vmem:[%s2175] sm:$0xff]
  %v2177 = vld [vmem:[%s2175 + $0x8] sm:$0xff]
  %v2178 = vld [vmem:[%s2175 + $0x10] sm:$0xff]
  %v2179 = vld [vmem:[%s2175 + $0x18] sm:$0xff]
  %v2180 = vld [vmem:[%s2175 + $0x20] sm:$0xff]
  %v2181 = vld [vmem:[%s2175 + $0x28] sm:$0xff]
  %v2182 = vld [vmem:[%s2175 + $0x30] sm:$0xff]
  %v2183 = vld [vmem:[%s2175 + $0x38] sm:$0xff]
  %v2185 = vsel %vm823, %v2172, 0
  %2187 = vmatprep.subr.mxu0 0.0
  %2188 = vmatpush1.msra.mxu0 0.0
  %2189 = vmatprep.subr.mxu0 0.0
  %2190 = vmatpush1.msra.mxu0 0.0
  %2191 = vmatprep.subr.mxu0 0.0
  %2192 = vmatpush1.msra.mxu0 0.0
  %2193 = vmatprep.subr.mxu0 0.0
  %2194 = vmatpush1.msra.mxu0 0.0
  %2195 = vmatprep.subr.mxu0 0.0
  %2196 = vmatpush1.msra.mxu0 0.0
  %2197 = vmatprep.subr.mxu0 0.0
  %2198 = vmatpush1.msra.mxu0 0.0
  %2199 = vmatprep.subr.mxu0 0.0
  %2200 = vmatpush1.msra.mxu0 0.0
  %2201 = vmatprep.subr.mxu0 0.0
  %2202 = vmatpush1.msra.mxu0 0.0
  %2203 = vmatprep.subr.mxu0 0.0
  %2204 = vmatpush1.msra.mxu0 %v2183
  %2205 = vmatprep.subr.mxu0 0.0
  %2206 = vmatpush1.msra.mxu0 %v2182
  %2207 = vmatprep.subr.mxu0 0.0
  %2208 = vmatpush1.msra.mxu0 %v2181
  %2209 = vmatprep.subr.mxu0 0.0
  %2210 = vmatpush1.msra.mxu0 %v2180
  %2211 = vmatprep.subr.mxu0 0.0
  %2212 = vmatpush1.msra.mxu0 %v2179
  %2213 = vmatprep.subr.mxu0 0.0
  %2214 = vmatpush1.msra.mxu0 %v2178
  %2215 = vmatprep.subr.mxu0 0.0
  %2216 = vmatpush1.msra.mxu0 %v2177
  %2217 = vmatprep.subr.mxu0 0.0
  %2218 = vmatpush1.msra.mxu0 %v2176
  %2219 = vmatprep.subr.mxu0 0.0
  %2220 = vmatpush2.msra.mxu0 0.0
  %2221 = vmatprep.subr.mxu0 0.0
  %2222 = vmatpush2.msra.mxu0 0.0
  %2223 = vmatprep.subr.mxu0 0.0
  %2224 = vmatpush2.msra.mxu0 0.0
  %2225 = vmatprep.subr.mxu0 0.0
  %2226 = vmatpush2.msra.mxu0 0.0
  %2227 = vmatprep.subr.mxu0 0.0
  %2228 = vmatpush2.msra.mxu0 0.0
  %2229 = vmatprep.subr.mxu0 0.0
  %2230 = vmatpush2.msra.mxu0 0.0
  %2231 = vmatprep.subr.mxu0 0.0
  %2232 = vmatpush2.msra.mxu0 0.0
  %2233 = vmatprep.subr.mxu0 0.0
  %2234 = vmatpush2.msra.mxu0 0.0
  %2235 = vmatprep.subr.mxu0 0.0
  %2236 = vmatpush2.msra.mxu0 0.0
  %2237 = vmatprep.subr.mxu0 0.0
  %2238 = vmatpush2.msra.mxu0 0.0
  %2239 = vmatprep.subr.mxu0 0.0
  %2240 = vmatpush2.msra.mxu0 0.0
  %2241 = vmatprep.subr.mxu0 0.0
  %2242 = vmatpush2.msra.mxu0 0.0
  %2243 = vmatprep.subr.mxu0 0.0
  %2244 = vmatpush2.msra.mxu0 0.0
  %2245 = vmatprep.subr.mxu0 0.0
  %2246 = vmatpush2.msra.mxu0 0.0
  %2247 = vmatprep.subr.mxu0 0.0
  %2248 = vmatpush2.msra.mxu0 0.0
  %2249 = vmatprep.subr.mxu0 0.0
  %2250 = vmatpush2.msra.mxu0 0.0
  %2251 = vmatprep.mubr.f32.mxu0 0.0
  %2252 = vmatmul.mubr.f32.gmra.mxu0 %v2185
  %v2253 = vpop.f32.mrf.mxu0
  %v2254 = vadd.f32 0.0, %v2253
  %v2255 = vpop.f32.mrf.mxu0
  %2256 = vdwg.mxu0
  %v2257 = vadd.f32 %v2097, %v2254
  %v2259 = vsel %vm823, %v2257, 0
  %2261 = vmatprep.subr.mxu0 0.0
  %2262 = vmatpush1.msra.mxu0 0.0
  %2263 = vmatprep.subr.mxu0 0.0
  %2264 = vmatpush1.msra.mxu0 0.0
  %2265 = vmatprep.subr.mxu0 0.0
  %2266 = vmatpush1.msra.mxu0 0.0
  %2267 = vmatprep.subr.mxu0 0.0
  %2268 = vmatpush1.msra.mxu0 0.0
  %2269 = vmatprep.subr.mxu0 0.0
  %2270 = vmatpush1.msra.mxu0 0.0
  %2271 = vmatprep.subr.mxu0 0.0
  %2272 = vmatpush1.msra.mxu0 0.0
  %2273 = vmatprep.subr.mxu0 0.0
  %2274 = vmatpush1.msra.mxu0 0.0
  %2275 = vmatprep.subr.mxu0 0.0
  %2276 = vmatpush1.msra.mxu0 0.0
  %2277 = vmatprep.subr.mxu0 0.0
  %2278 = vmatpush1.msra.mxu0 %v49
  %2279 = vmatprep.subr.mxu0 0.0
  %2280 = vmatpush1.msra.mxu0 %v48
  %2281 = vmatprep.subr.mxu0 0.0
  %2282 = vmatpush1.msra.mxu0 %v47
  %2283 = vmatprep.subr.mxu0 0.0
  %2284 = vmatpush1.msra.mxu0 %v46
  %2285 = vmatprep.subr.mxu0 0.0
  %2286 = vmatpush1.msra.mxu0 %v45
  %2287 = vmatprep.subr.mxu0 0.0
  %2288 = vmatpush1.msra.mxu0 %v44
  %2289 = vmatprep.subr.mxu0 0.0
  %2290 = vmatpush1.msra.mxu0 %v43
  %2291 = vmatprep.subr.mxu0 0.0
  %2292 = vmatpush1.msra.mxu0 %v42
  %2293 = vmatprep.subr.mxu0 0.0
  %2294 = vmatpush2.msra.mxu0 0.0
  %2295 = vmatprep.subr.mxu0 0.0
  %2296 = vmatpush2.msra.mxu0 0.0
  %2297 = vmatprep.subr.mxu0 0.0
  %2298 = vmatpush2.msra.mxu0 0.0
  %2299 = vmatprep.subr.mxu0 0.0
  %2300 = vmatpush2.msra.mxu0 0.0
  %2301 = vmatprep.subr.mxu0 0.0
  %2302 = vmatpush2.msra.mxu0 0.0
  %2303 = vmatprep.subr.mxu0 0.0
  %2304 = vmatpush2.msra.mxu0 0.0
  %2305 = vmatprep.subr.mxu0 0.0
  %2306 = vmatpush2.msra.mxu0 0.0
  %2307 = vmatprep.subr.mxu0 0.0
  %2308 = vmatpush2.msra.mxu0 0.0
  %2309 = vmatprep.subr.mxu0 0.0
  %2310 = vmatpush2.msra.mxu0 0.0
  %2311 = vmatprep.subr.mxu0 0.0
  %2312 = vmatpush2.msra.mxu0 0.0
  %2313 = vmatprep.subr.mxu0 0.0
  %2314 = vmatpush2.msra.mxu0 0.0
  %2315 = vmatprep.subr.mxu0 0.0
  %2316 = vmatpush2.msra.mxu0 0.0
  %2317 = vmatprep.subr.mxu0 0.0
  %2318 = vmatpush2.msra.mxu0 0.0
  %2319 = vmatprep.subr.mxu0 0.0
  %2320 = vmatpush2.msra.mxu0 0.0
  %2321 = vmatprep.subr.mxu0 0.0
  %2322 = vmatpush2.msra.mxu0 0.0
  %2323 = vmatprep.subr.mxu0 0.0
  %2324 = vmatpush2.msra.mxu0 0.0
  %2325 = vmatprep.mubr.f32.mxu0 0.0
  %2326 = vmatmul.mubr.f32.gmra.mxu0 %v2259
  %v2327 = vpop.f32.mrf.mxu0
  %v2328 = vadd.f32 0.0, %v2327
  %v2329 = vpop.f32.mrf.mxu0
  %2330 = vdwg.mxu0
  %vm2331 = vcmask 521216
  %v2332 = vsel %vm2331, %v2328, 0.0
  %v2333 = vrot.slane %v2332, 4
  %v2334 = vadd.f32 %v2332, %v2333
  %v2335 = vrot.slane %v2334, 2
  %v2336 = vadd.f32 %v2334, %v2335
  %v2337 = vrot.slane %v2336, 1
  %v2338 = vadd.f32 %v2336, %v2337
  %v2339 = vmul.f32 %v2338, 0.010416667
  %v2340 = vsub.f32 %v2257, %v2339
  %v2341 = vmul.f32 %v2340, %v2340
  %v2343 = vsel %vm823, %v2341, 0
  %2345 = vmatprep.subr.mxu0 0.0
  %2346 = vmatpush1.msra.mxu0 0.0
  %2347 = vmatprep.subr.mxu0 0.0
  %2348 = vmatpush1.msra.mxu0 0.0
  %2349 = vmatprep.subr.mxu0 0.0
  %2350 = vmatpush1.msra.mxu0 0.0
  %2351 = vmatprep.subr.mxu0 0.0
  %2352 = vmatpush1.msra.mxu0 0.0
  %2353 = vmatprep.subr.mxu0 0.0
  %2354 = vmatpush1.msra.mxu0 0.0
  %2355 = vmatprep.subr.mxu0 0.0
  %2356 = vmatpush1.msra.mxu0 0.0
  %2357 = vmatprep.subr.mxu0 0.0
  %2358 = vmatpush1.msra.mxu0 0.0
  %2359 = vmatprep.subr.mxu0 0.0
  %2360 = vmatpush1.msra.mxu0 0.0
  %2361 = vmatprep.subr.mxu0 0.0
  %2362 = vmatpush1.msra.mxu0 %v49
  %2363 = vmatprep.subr.mxu0 0.0
  %2364 = vmatpush1.msra.mxu0 %v48
  %2365 = vmatprep.subr.mxu0 0.0
  %2366 = vmatpush1.msra.mxu0 %v47
  %2367 = vmatprep.subr.mxu0 0.0
  %2368 = vmatpush1.msra.mxu0 %v46
  %2369 = vmatprep.subr.mxu0 0.0
  %2370 = vmatpush1.msra.mxu0 %v45
  %2371 = vmatprep.subr.mxu0 0.0
  %2372 = vmatpush1.msra.mxu0 %v44
  %2373 = vmatprep.subr.mxu0 0.0
  %2374 = vmatpush1.msra.mxu0 %v43
  %2375 = vmatprep.subr.mxu0 0.0
  %2376 = vmatpush1.msra.mxu0 %v42
  %2377 = vmatprep.subr.mxu0 0.0
  %2378 = vmatpush2.msra.mxu0 0.0
  %2379 = vmatprep.subr.mxu0 0.0
  %2380 = vmatpush2.msra.mxu0 0.0
  %2381 = vmatprep.subr.mxu0 0.0
  %2382 = vmatpush2.msra.mxu0 0.0
  %2383 = vmatprep.subr.mxu0 0.0
  %2384 = vmatpush2.msra.mxu0 0.0
  %2385 = vmatprep.subr.mxu0 0.0
  %2386 = vmatpush2.msra.mxu0 0.0
  %2387 = vmatprep.subr.mxu0 0.0
  %2388 = vmatpush2.msra.mxu0 0.0
  %2389 = vmatprep.subr.mxu0 0.0
  %2390 = vmatpush2.msra.mxu0 0.0
  %2391 = vmatprep.subr.mxu0 0.0
  %2392 = vmatpush2.msra.mxu0 0.0
  %2393 = vmatprep.subr.mxu0 0.0
  %2394 = vmatpush2.msra.mxu0 0.0
  %2395 = vmatprep.subr.mxu0 0.0
  %2396 = vmatpush2.msra.mxu0 0.0
  %2397 = vmatprep.subr.mxu0 0.0
  %2398 = vmatpush2.msra.mxu0 0.0
  %2399 = vmatprep.subr.mxu0 0.0
  %2400 = vmatpush2.msra.mxu0 0.0
  %2401 = vmatprep.subr.mxu0 0.0
  %2402 = vmatpush2.msra.mxu0 0.0
  %2403 = vmatprep.subr.mxu0 0.0
  %2404 = vmatpush2.msra.mxu0 0.0
  %2405 = vmatprep.subr.mxu0 0.0
  %2406 = vmatpush2.msra.mxu0 0.0
  %2407 = vmatprep.subr.mxu0 0.0
  %2408 = vmatpush2.msra.mxu0 0.0
  %2409 = vmatprep.mubr.f32.mxu0 0.0
  %2410 = vmatmul.mubr.f32.gmra.mxu0 %v2343
  %v2411 = vpop.f32.mrf.mxu0
  %v2412 = vadd.f32 0.0, %v2411
  %v2413 = vpop.f32.mrf.mxu0
  %2414 = vdwg.mxu0
  %v2415 = vsel %vm2331, %v2412, 0.0
  %v2416 = vrot.slane %v2415, 4
  %v2417 = vadd.f32 %v2415, %v2416
  %v2418 = vrot.slane %v2417, 2
  %v2419 = vadd.f32 %v2417, %v2418
  %v2420 = vrot.slane %v2419, 1
  %v2421 = vadd.f32 %v2419, %v2420
  %v2422 = vmul.f32 %v2421, 0.010416667
  %v2423 = vadd.f32 %v2422, 1e-05
  %v2424 = vrsqrt.pop %v2423
  %v2425 = vmul.f32 %v2340, %v2424
  %v2426 = vld [vmem:[%s11] sm:$0xff]
  %v2428 = vsel %vm51, %v2426, 0
  %v2431 = vsel %vm55, %v2425, 0
  %2433 = vmatprep.subr.mxu0 0.0
  %2434 = vmatpush1.msra.mxu0 0.0
  %2435 = vmatprep.subr.mxu0 0.0
  %2436 = vmatpush1.msra.mxu0 0.0
  %2437 = vmatprep.subr.mxu0 0.0
  %2438 = vmatpush1.msra.mxu0 0.0
  %2439 = vmatprep.subr.mxu0 0.0
  %2440 = vmatpush1.msra.mxu0 0.0
  %2441 = vmatprep.subr.mxu0 0.0
  %2442 = vmatpush1.msra.mxu0 0.0
  %2443 = vmatprep.subr.mxu0 0.0
  %2444 = vmatpush1.msra.mxu0 0.0
  %2445 = vmatprep.subr.mxu0 0.0
  %2446 = vmatpush1.msra.mxu0 0.0
  %2447 = vmatprep.subr.mxu0 0.0
  %2448 = vmatpush1.msra.mxu0 0.0
  %2449 = vmatprep.subr.mxu0 0.0
  %2450 = vmatpush1.msra.mxu0 0.0
  %2451 = vmatprep.subr.mxu0 0.0
  %2452 = vmatpush1.msra.mxu0 0.0
  %2453 = vmatprep.subr.mxu0 0.0
  %2454 = vmatpush1.msra.mxu0 0.0
  %2455 = vmatprep.subr.mxu0 0.0
  %2456 = vmatpush1.msra.mxu0 0.0
  %2457 = vmatprep.subr.mxu0 0.0
  %2458 = vmatpush1.msra.mxu0 0.0
  %2459 = vmatprep.subr.mxu0 0.0
  %2460 = vmatpush1.msra.mxu0 0.0
  %2461 = vmatprep.subr.mxu0 0.0
  %2462 = vmatpush1.msra.mxu0 0.0
  %2463 = vmatprep.subr.mxu0 0.0
  %2464 = vmatpush1.msra.mxu0 %v2431
  %2465 = vmatprep.subr.mxu0 0.0
  %2466 = vmatpush2.msra.mxu0 0.0
  %2467 = vmatprep.subr.mxu0 0.0
  %2468 = vmatpush2.msra.mxu0 0.0
  %2469 = vmatprep.subr.mxu0 0.0
  %2470 = vmatpush2.msra.mxu0 0.0
  %2471 = vmatprep.subr.mxu0 0.0
  %2472 = vmatpush2.msra.mxu0 0.0
  %2473 = vmatprep.subr.mxu0 0.0
  %2474 = vmatpush2.msra.mxu0 0.0
  %2475 = vmatprep.subr.mxu0 0.0
  %2476 = vmatpush2.msra.mxu0 0.0
  %2477 = vmatprep.subr.mxu0 0.0
  %2478 = vmatpush2.msra.mxu0 0.0
  %2479 = vmatprep.subr.mxu0 0.0
  %2480 = vmatpush2.msra.mxu0 0.0
  %2481 = vmatprep.subr.mxu0 0.0
  %2482 = vmatpush2.msra.mxu0 0.0
  %2483 = vmatprep.subr.mxu0 0.0
  %2484 = vmatpush2.msra.mxu0 0.0
  %2485 = vmatprep.subr.mxu0 0.0
  %2486 = vmatpush2.msra.mxu0 0.0
  %2487 = vmatprep.subr.mxu0 0.0
  %2488 = vmatpush2.msra.mxu0 0.0
  %2489 = vmatprep.subr.mxu0 0.0
  %2490 = vmatpush2.msra.mxu0 0.0
  %2491 = vmatprep.subr.mxu0 0.0
  %2492 = vmatpush2.msra.mxu0 0.0
  %2493 = vmatprep.subr.mxu0 0.0
  %2494 = vmatpush2.msra.mxu0 0.0
  %2495 = vmatprep.subr.mxu0 0.0
  %2496 = vmatpush2.msra.mxu0 0.0
  %2497 = vmatprep.mubr.f32.mxu0 0.0
  %2498 = vmatmul.mubr.f32.gmra.mxu0 %v2428
  %v2499 = vpop.f32.mrf.mxu0
  %v2500 = vadd.f32 0.0, %v2499
  %v2501 = vpop.f32.mrf.mxu0
  %2502 = vdwg.mxu0
  %v2503 = vadd.f32 %v1863, %v2500
  %2505 = vrot.lane.b32.xlu0 %v395, 64
  %v2506 = vpop.permute.xlu0 %2505
  %v2508 = vsel %vm823, %v2503, %v2506
  %vm2509 = vcmask 654336
  %v2510 = vsel %vm2509, %v2508, 0.0
  %2511 = vst [vmem:[%s12] sm:$0xff] %v2510
  // Predicated region
  $region50: #{block_forward.1} parent=0 // pred_check
    _
  $region51: #{block_forward.1} parent=0 // pred_check_branch
    %2513 = sbr.rel (0) target = $region53
  $region52: #{block_forward.1} parent=0 // pred_region
    _
  $region53: #{block_forward.1} parent=0 // pred_fallthru
    _
  // Predicated region
  $region54: #{block_forward.1} parent=0 // pred_check
    _
  $region55: #{block_forward.1} parent=0 // pred_check_branch
    %2515 = sbr.rel (0) target = $region57
  $region56: #{block_forward.1} parent=0 // pred_region
    _
  $region57: #{block_forward.1} parent=0 // pred_fallthru
    _

</llo_original>
